<compile_context>
chip_gen: v7x
topology: tpu7x:2x2x1
jax: 0.10.0
libtpu: 0.0.40
codegen_flags: <defaults>
</compile_context>

<pallas_src>
import math
import functools

import numpy as np
import jax
import jax.numpy as jnp
from jax.experimental import pallas as pl
from jax.experimental.pallas import tpu as pltpu


# ----------------------------- helpers -----------------------------

def _gelu_tanh(x):
    # tanh-approx GELU; |err| vs exact erf-GELU < ~1e-3. tanh runs on the EUP
    # slot (otherwise idle) instead of ~10 VALU ops for a rational erf.
    c = math.sqrt(2.0 / math.pi)
    return 0.5 * x * (1.0 + jnp.tanh(c * (x + 0.044715 * x * x * x)))


def get_sinusoid_encoding(n_position, d_hid):
    def angle_vec(pos):
        return [pos / np.power(10000, 2 * (j // 2) / d_hid) for j in range(d_hid)]
    table = np.array([angle_vec(p) for p in range(n_position)], dtype=np.float64)
    table[:, 0::2] = np.sin(table[:, 0::2])
    table[:, 1::2] = np.cos(table[:, 1::2])
    return jnp.asarray(table, dtype=jnp.float32)          # (n_position, d_hid)


# ----------------------------- Pallas kernel -----------------------------

def swt_kernel(t_ref, gln_ref, pe_ref,
               wkq_ref, bkq_ref, wv_ref, bv_ref,
               wprm2_ref, wpa_ref, bpa_ref,
               wfc1_ref, bfc1_ref, wfc2_ref, bfc2_ref,
               out_ref, *, Bb, T, emb, m):
    f32, bf16 = jnp.float32, jnp.bfloat16
    M = Bb * T

    # ---- SWT LayerNorm(emb) (beta folded into PE) + positional encoding ----
    t = t_ref[...].reshape(M, emb)                       # leading-dim collapse: free
    mu = jnp.mean(t, axis=-1, keepdims=True)
    var = jnp.mean(jnp.square(t - mu), axis=-1, keepdims=True)
    t = (t - mu) * jax.lax.rsqrt(var + 1e-5) * gln_ref[0]
    t = (t.reshape(Bb, T, emb) + pe_ref[...][None]).reshape(M, emb)

    # ---- Token_performer.norm1 (gamma/beta folded into wkq/wv and their biases) ----
    mu1 = jnp.mean(t, axis=-1, keepdims=True)
    var1 = jnp.mean(jnp.square(t - mu1), axis=-1, keepdims=True)
    xh = ((t - mu1) * jax.lax.rsqrt(var1 + 1e-5)).astype(bf16)

    # ---- k|q from ONE lane-dense N=128 dot; v from a second N=64 dot ----
    kq = jnp.dot(xh, wkq_ref[...], preferred_element_type=f32) + bkq_ref[0]   # (M, 2*emb)
    v = jnp.dot(xh, wv_ref[...], preferred_element_type=f32) + bv_ref[0]      # (M, emb)

    # ---- positive random features for BOTH k and q from ONE dot (block-diag wprm2) ----
    # prm_exp(z) = exp(w z - |z|^2/2)/sqrt(m); kept max-free to match the reference
    # (fine at this activation scale; clamp/max-subtract if reused at larger scale).
    inv_sqrt_m = 1.0 / math.sqrt(m)
    sq = kq * kq                                                          # f32 VPU
    zd_k = 0.5 * jnp.sum(sq[:, :emb], axis=-1, keepdims=True)             # lower lanes: free view
    zd_q = 0.5 * jnp.sum(sq, axis=-1, keepdims=True) - zd_k               # avoids upper-lane shift
    wtz = jnp.dot(kq.astype(bf16), wprm2_ref[...], preferred_element_type=f32)   # (M, 2m)
    kp = jnp.exp(wtz[:, :m] - zd_k) * inv_sqrt_m                          # (M, m)
    qp = jnp.exp(wtz[:, m:] - zd_q) * inv_sqrt_m                          # (M, m), one small lane roll

    # ---- linear attention: batched 3-D einsums (no Bb-unrolled loop / concat) ----
    kp3 = kp.reshape(Bb, T, m)                                            # leading-dim reshapes: free
    qp3 = qp.reshape(Bb, T, m)
    v3 = v.reshape(Bb, T, emb)
    kp_sum = jnp.sum(kp3, axis=1, keepdims=True)                          # (Bb, 1, m)
    D = jnp.sum(qp3 * kp_sum, axis=-1, keepdims=True)                     # (Bb, T, 1)
    # 'btm,bte->bme': only kp needs a (small) transpose; the following einsum is
    # then MXU-natural (lhs contracts on lanes, rhs on sublanes) — no transposes.
    kptv = jnp.einsum('btm,bte->bme', kp3.astype(bf16), v3.astype(bf16),
                      preferred_element_type=f32)                         # (Bb, m, emb)
    y3 = jnp.einsum('btm,bme->bte', qp3.astype(bf16), kptv.astype(bf16),
                    preferred_element_type=f32)                           # (Bb, T, emb)
    y = (y3 * pl.reciprocal(D + 1e-8, approx=True)).reshape(M, emb)

    # ---- proj + residual (v is the skip connection; dropout = identity) ----
    y = v + (jnp.dot(y.astype(bf16), wpa_ref[...], preferred_element_type=f32)
             + bpa_ref[0])

    # ---- norm2 (affine folded into fc1) + MLP(GELU) + residual ----
    mu2 = jnp.mean(y, axis=-1, keepdims=True)
    var2 = jnp.mean(jnp.square(y - mu2), axis=-1, keepdims=True)
    yh = ((y - mu2) * jax.lax.rsqrt(var2 + 1e-5)).astype(bf16)
    h = jnp.dot(yh, wfc1_ref[...], preferred_element_type=f32) + bfc1_ref[0]
    h = _gelu_tanh(h)
    h = jnp.dot(h.astype(bf16), wfc2_ref[...], preferred_element_type=f32) + bfc2_ref[0]

    out_ref[...] = (y + h).reshape(Bb, T, emb).astype(out_ref.dtype)


# ----------------------------- glue (plain JAX) -----------------------------

def unfold_nchw(x, k, s, p):
    """torch.nn.Unfold(kernel_size=k, stride=s, padding=p) for NCHW input."""
    B, C, H, W = x.shape
    xp = jnp.pad(x, ((0, 0), (0, 0), (p, p), (p, p)))
    Hp, Wp = H + 2 * p, W + 2 * p
    Ho = (Hp - k) // s + 1
    Wo = (Wp - k) // s + 1
    cols = []
    for i in range(k):
        for j in range(k):
            cols.append(xp[:, :, i:i + s * Ho:s, j:j + s * Wo:s])   # (B, C, Ho, Wo)
    col = jnp.stack(cols, axis=2)                                    # (B, C, k*k, Ho, Wo)
    return col.reshape(B, C * k * k, Ho * Wo)


def make_params(key, in_channel=1, out_channel=64, patch=4, n_position=64):
    d_in = in_channel * patch * patch
    emb = out_channel
    m = int(emb * 0.5)
    ks = jax.random.split(key, 16)

    def lin_w(kk, fan_in, shape):
        bound = 1.0 / math.sqrt(fan_in)
        return jax.random.uniform(kk, shape, jnp.float32, -bound, bound)

    def ln_affine(kg, kb, n):
        # randomized (not fresh-init ones/zeros) so the gamma/beta folding into
        # the following Linear is actually exercised by the correctness check.
        g = 1.0 + 0.1 * jax.random.normal(kg, (n,), jnp.float32)
        b = 0.1 * jax.random.normal(kb, (n,), jnp.float32)
        return g, b

    g_ln, b_ln = ln_affine(ks[0], ks[1], emb)
    g1, b1 = ln_affine(ks[2], ks[3], emb)
    g2, b2 = ln_affine(ks[4], ks[5], emb)

    params = dict(
        wproj_sw=lin_w(ks[6], d_in, (d_in, emb)),     # pre-transposed (in, out)
        bproj_sw=lin_w(ks[7], d_in, (emb,)),
        g_ln=g_ln, b_ln=b_ln,
        pe=get_sinusoid_encoding(n_position, emb),    # (T, emb)
        g1=g1, b1=b1,
        wkqv=lin_w(ks[8], emb, (emb, 3 * emb)),
        bkqv=lin_w(ks[9], emb, (3 * emb,)),
        wproj_tp=lin_w(ks[10], emb, (emb, emb)),
        bproj_tp=lin_w(ks[11], emb, (emb,)),
        g2=g2, b2=b2,
        wfc1=lin_w(ks[12], emb, (emb, emb)),
        bfc1=lin_w(ks[13], emb, (emb,)),
        wfc2=lin_w(ks[14], emb, (emb, emb)),
        bfc2=lin_w(ks[15], emb, (emb,)),
    )
    # performer random-feature matrix: orthonormal columns of (emb, m) * sqrt(m),
    # stored so the kernel computes z @ wprm directly.
    a = jax.random.normal(jax.random.fold_in(key, 99), (emb, m), jnp.float32)
    qmat, _ = jnp.linalg.qr(a)
    params['wprm'] = qmat * math.sqrt(m)
    return params, d_in, emb, m


def _device_kind():
    try:
        return jax.devices()[0].device_kind.lower()
    except Exception:
        return ""


def _choose_bb(B, T, emb, m):
    """Rows per grid step: keep M = Bb*T around 512-2048, bounded by a
    per-generation VMEM budget (v7x has half the physical VMEM of v5e/v6e and a
    32 MiB scoped default; v5e's scoped default is only 16 MiB). Returns
    (Bb, vmem_estimate_bytes)."""
    kind = _device_kind()
    if "v7" in kind:
        row_cap, vmem_budget = 1024, 20 << 20
    elif "v5 lite" in kind or "v5e" in kind:
        row_cap, vmem_budget = 2048, 12 << 20
    else:                                   # v6e and everything else
        row_cap, vmem_budget = 2048, 24 << 20

    def vmem_est(bb):
        rows = bb * T
        blocks = 2 * (rows * emb * 4) * 2               # double-buffered in/out blocks
        inter = 14 * rows * emb * 4                     # live (rows, emb)-ish f32 temps
        weights = (6 * emb * emb + 2 * emb * 2 * m + T * emb + 8 * emb) * 4
        return blocks + inter + weights

    bb = max(1, min(B, max(1, row_cap // T)))
    while bb > 1 and vmem_est(bb) > vmem_budget:
        bb -= 1
    # prefer a divisor of B (avoid burning MXU/EUP work on zero-padded rows),
    # but only if it does not cost more than 2x in per-step M.
    for d in range(bb, 0, -1):
        if B % d == 0:
            if 2 * d >= bb:
                bb = d
            break
    return bb, vmem_est(bb)


def swt_forward(x, params, *, patch, stride, padding, emb, m):
    bf16, f32 = jnp.bfloat16, jnp.float32
    tokens = unfold_nchw(x, patch, stride, padding)                 # (B, d_in, L)
    tokens = jnp.transpose(tokens, (0, 2, 1)).astype(f32)           # (B, T, d_in)
    B, T, d_in = tokens.shape

    # ---- SWT proj hoisted to the wrapper: the kernel gets a lane-dense
    # (B, T, emb) block instead of a (B, T, 16) block that pads 8x in VMEM and
    # DMAs 64-byte runs; also removes the K=16 MXU dot (7/8 of the array idle).
    t0 = tokens @ params['wproj_sw'] + params['bproj_sw']            # (B, T, emb)

    # ---- wrapper-side algebra: fold LN affines into the following Linears ----
    pe_eff = params['pe'] + params['b_ln'][None, :]                  # SWT-LN beta -> PE
    g1, b1 = params['g1'], params['b1']
    wkq = g1[:, None] * params['wkqv'][:, :2 * emb]                  # (emb, 2*emb): k|q fused
    wv = g1[:, None] * params['wkqv'][:, 2 * emb:]
    bkq = b1 @ params['wkqv'][:, :2 * emb] + params['bkqv'][:2 * emb]
    bv = b1 @ params['wkqv'][:, 2 * emb:] + params['bkqv'][2 * emb:]
    g2, b2 = params['g2'], params['b2']
    wfc1 = g2[:, None] * params['wfc1']
    bfc1 = b2 @ params['wfc1'] + params['bfc1']
    # block-diagonal performer feature matrix so kp|qp come out of ONE dot
    wprm2 = jnp.zeros((2 * emb, 2 * m), f32)
    wprm2 = wprm2.at[:emb, :m].set(params['wprm']).at[emb:, m:].set(params['wprm'])

    # ---- grid: per-step M cap (not a per-device-kind split heuristic) ----
    Bb, est = _choose_bb(B, T, emb, m)
    G = (B + Bb - 1) // Bb
    Bpad = G * Bb
    if Bpad != B:
        t0 = jnp.concatenate(
            [t0, jnp.zeros((Bpad - B, T, emb), t0.dtype)], axis=0)

    kind = _device_kind()
    cp_kwargs = dict(dimension_semantics=("parallel",))
    scoped_default = (16 << 20) if ("v5 lite" in kind or "v5e" in kind) else (32 << 20)
    if est > (3 * scoped_default) // 4:
        cap = (48 << 20) if "v7" in kind else (100 << 20)
        cp_kwargs["vmem_limit_bytes"] = int(min(2 * est, cap))
    compiler_params = pltpu.CompilerParams(**cp_kwargs)

    def row(vec):
        return jnp.asarray(vec, f32).reshape(1, -1)

    def full(shape):
        n = len(shape)
        return pl.BlockSpec(shape, lambda g, _n=n: (0,) * _n)

    in_specs = [
        pl.BlockSpec((Bb, T, emb), lambda g: (g, 0, 0)),   # projected tokens (lane-dense)
        full((1, emb)),                                    # SWT LN gamma
        full((T, emb)),                                    # PE (+ folded LN beta)
        full((emb, 2 * emb)), full((1, 2 * emb)),          # k|q fused (lane-dense N=128)
        full((emb, emb)), full((1, emb)),                  # v
        full((2 * emb, 2 * m)),                            # block-diag performer features
        full((emb, emb)), full((1, emb)),                  # attn proj
        full((emb, emb)), full((1, emb)),                  # fc1 (norm2 folded)
        full((emb, emb)), full((1, emb)),                  # fc2
    ]

    kernel = functools.partial(swt_kernel, Bb=Bb, T=T, emb=emb, m=m)
    out = pl.pallas_call(
        kernel,
        out_shape=jax.ShapeDtypeStruct((Bpad, T, emb), jnp.float32),
        grid=(G,),
        in_specs=in_specs,
        out_specs=pl.BlockSpec((Bb, T, emb), lambda g: (g, 0, 0)),
        compiler_params=compiler_params,
    )(t0,
      row(params['g_ln']), pe_eff,
      wkq.astype(bf16), row(bkq), wv.astype(bf16), row(bv),
      wprm2.astype(bf16),
      params['wproj_tp'].astype(bf16), row(params['bproj_tp']),
      wfc1.astype(bf16), row(bfc1),
      params['wfc2'].astype(bf16), row(params['bfc2']))
    return out[:B]


# ----------------------------- pure-JAX reference (exact f32 semantics) -----------------------------

def swt_reference(x, params, *, patch, stride, padding, emb, m):
    tok = jnp.transpose(unfold_nchw(x, patch, stride, padding), (0, 2, 1))

    def ln(z, g, b, eps=1e-5):
        mu = jnp.mean(z, axis=-1, keepdims=True)
        var = jnp.mean(jnp.square(z - mu), axis=-1, keepdims=True)
        return (z - mu) / jnp.sqrt(var + eps) * g + b

    t = tok @ params['wproj_sw'] + params['bproj_sw']
    t = ln(t, params['g_ln'], params['b_ln']) + params['pe'][None]
    xn = ln(t, params['g1'], params['b1'])
    kqv = xn @ params['wkqv'] + params['bkqv']
    k, q, v = kqv[..., :emb], kqv[..., emb:2 * emb], kqv[..., 2 * emb:]

    def prm(z):
        zd = 0.5 * jnp.sum(z * z, axis=-1, keepdims=True)
        return jnp.exp(z @ params['wprm'] - zd) / math.sqrt(m)

    kp, qp = prm(k), prm(q)
    D = jnp.einsum('btm,bm->bt', qp, kp.sum(axis=1))[..., None]
    kptv = jnp.einsum('bte,btm->bem', v, kp)
    y = jnp.einsum('btm,bem->bte', qp, kptv) / (D + 1e-8)
    y = v + (y @ params['wproj_tp'] + params['bproj_tp'])
    h = jax.nn.gelu(ln(y, params['g2'], params['b2']) @ params['wfc1'] + params['bfc1'],
                    approximate=False)
    h = h @ params['wfc2'] + params['bfc2']
    return y + h


# ----------------------------- main -----------------------------

if __name__ == "__main__":
    key = jax.random.PRNGKey(0)
    kx, kparam = jax.random.split(key)

    in_channel, out_channel, patch, stride, padding = 1, 64, 4, 2, 1
    B, img_size = 2, 16
    T = (img_size // stride) * (img_size // stride)

    x = jax.random.normal(kx, (B, in_channel, img_size, img_size), jnp.float32)
    params, d_in, emb, m = make_params(kparam, in_channel, out_channel, patch, T)

    y = swt_forward(x, params, patch=patch, stride=stride, padding=padding,
                    emb=emb, m=m)
    y = jax.block_until_ready(y)
    assert y.shape == (B, T, out_channel), y.shape

    y_ref = swt_reference(x, params, patch=patch, stride=stride, padding=padding,
                          emb=emb, m=m)
    max_err = float(jnp.max(jnp.abs(y - y_ref)))
    # kernel uses bf16 MXU inputs + tanh-GELU + approx reciprocal; reference is
    # exact f32 / erf-GELU, so allow a few-percent tolerance.
    assert jnp.allclose(y, y_ref, rtol=5e-2, atol=5e-2), max_err

    print("KERNEL_OK")
</pallas_src>

<mosaic_0001>
module attributes {stable_mosaic.version = 11 : i64} {
  func.func @swt_kernel(%arg0: i32, %arg1: memref<2x64x64xf32, #tpu.memory_space<vmem>>, %arg2: memref<1x64xf32, #tpu.memory_space<vmem>>, %arg3: memref<64x64xf32, #tpu.memory_space<vmem>>, %arg4: memref<64x128xbf16, #tpu.memory_space<vmem>>, %arg5: memref<1x128xf32, #tpu.memory_space<vmem>>, %arg6: memref<64x64xbf16, #tpu.memory_space<vmem>>, %arg7: memref<1x64xf32, #tpu.memory_space<vmem>>, %arg8: memref<128x64xbf16, #tpu.memory_space<vmem>>, %arg9: memref<64x64xbf16, #tpu.memory_space<vmem>>, %arg10: memref<1x64xf32, #tpu.memory_space<vmem>>, %arg11: memref<64x64xbf16, #tpu.memory_space<vmem>>, %arg12: memref<1x64xf32, #tpu.memory_space<vmem>>, %arg13: memref<64x64xbf16, #tpu.memory_space<vmem>>, %arg14: memref<1x64xf32, #tpu.memory_space<vmem>>, %arg15: memref<2x64x64xf32, #tpu.memory_space<vmem>>) attributes {dimension_semantics = [#tpu.dimension_semantics<parallel>], iteration_bounds = array<i64: 1>, scalar_prefetch = 0 : i64, scratch_operands = 0 : i64, tpu.core_type = #tpu.core_type<tc>, window_params = [{transform_indices = @transform_0, window_bounds = array<i64: 2, 64, 64>}, {pipeline_mode = #tpu.pipeline_mode<synchronous>, transform_indices = @transform_1, window_bounds = array<i64: 1, 64>}, {pipeline_mode = #tpu.pipeline_mode<synchronous>, transform_indices = @transform_2, window_bounds = array<i64: 64, 64>}, {pipeline_mode = #tpu.pipeline_mode<synchronous>, transform_indices = @transform_3, window_bounds = array<i64: 64, 128>}, {pipeline_mode = #tpu.pipeline_mode<synchronous>, transform_indices = @transform_4, window_bounds = array<i64: 1, 128>}, {pipeline_mode = #tpu.pipeline_mode<synchronous>, transform_indices = @transform_5, window_bounds = array<i64: 64, 64>}, {pipeline_mode = #tpu.pipeline_mode<synchronous>, transform_indices = @transform_6, window_bounds = array<i64: 1, 64>}, {pipeline_mode = #tpu.pipeline_mode<synchronous>, transform_indices = @transform_7, window_bounds = array<i64: 128, 64>}, {pipeline_mode = #tpu.pipeline_mode<synchronous>, transform_indices = @transform_8, window_bounds = array<i64: 64, 64>}, {pipeline_mode = #tpu.pipeline_mode<synchronous>, transform_indices = @transform_9, window_bounds = array<i64: 1, 64>}, {pipeline_mode = #tpu.pipeline_mode<synchronous>, transform_indices = @transform_10, window_bounds = array<i64: 64, 64>}, {pipeline_mode = #tpu.pipeline_mode<synchronous>, transform_indices = @transform_11, window_bounds = array<i64: 1, 64>}, {pipeline_mode = #tpu.pipeline_mode<synchronous>, transform_indices = @transform_12, window_bounds = array<i64: 64, 64>}, {pipeline_mode = #tpu.pipeline_mode<synchronous>, transform_indices = @transform_13, window_bounds = array<i64: 1, 64>}, {transform_indices = @transform_14, window_bounds = array<i64: 2, 64, 64>}]} {
    %c0 = arith.constant 0 : index
    %c0_0 = arith.constant 0 : index
    %c0_1 = arith.constant 0 : index
    %0 = vector.load %arg1[%c0, %c0_0, %c0_1] : memref<2x64x64xf32, #tpu.memory_space<vmem>>, vector<2x64x64xf32>
    %1 = vector.shape_cast %0 : vector<2x64x64xf32> to vector<128x64xf32>
    %cst = arith.constant dense<0.000000e+00> : vector<128xf32>
    %2 = vector.multi_reduction <add>, %1, %cst [1] : vector<128x64xf32> to vector<128xf32>
    %3 = vector.shape_cast %2 : vector<128xf32> to vector<128x1xf32>
    %cst_2 = arith.constant 6.400000e+01 : f32
    %4 = vector.broadcast %cst_2 : f32 to vector<128x1xf32>
    %5 = arith.divf %3, %4 : vector<128x1xf32>
    %6 = vector.broadcast %5 : vector<128x1xf32> to vector<128x64xf32>
    %7 = arith.subf %1, %6 : vector<128x64xf32>
    %8 = arith.mulf %7, %7 : vector<128x64xf32>
    %cst_3 = arith.constant dense<0.000000e+00> : vector<128xf32>
    %9 = vector.multi_reduction <add>, %8, %cst_3 [1] : vector<128x64xf32> to vector<128xf32>
    %10 = vector.shape_cast %9 : vector<128xf32> to vector<128x1xf32>
    %cst_4 = arith.constant 6.400000e+01 : f32
    %11 = vector.broadcast %cst_4 : f32 to vector<128x1xf32>
    %12 = arith.divf %10, %11 : vector<128x1xf32>
    %13 = vector.broadcast %5 : vector<128x1xf32> to vector<128x64xf32>
    %14 = arith.subf %1, %13 : vector<128x64xf32>
    %cst_5 = arith.constant 9.99999974E-6 : f32
    %15 = vector.broadcast %cst_5 : f32 to vector<128x1xf32>
    %16 = arith.addf %12, %15 : vector<128x1xf32>
    %17 = math.rsqrt %16 : vector<128x1xf32>
    %18 = vector.broadcast %17 : vector<128x1xf32> to vector<128x64xf32>
    %19 = arith.mulf %14, %18 : vector<128x64xf32>
    %c0_6 = arith.constant 0 : index
    %c0_7 = arith.constant 0 : index
    %20 = vector.load %arg2[%c0_6, %c0_7] : memref<1x64xf32, #tpu.memory_space<vmem>>, vector<1x64xf32>
    %21 = vector.shape_cast %20 : vector<1x64xf32> to vector<64xf32>
    %22 = vector.shape_cast %21 : vector<64xf32> to vector<1x64xf32>
    %23 = vector.broadcast %22 : vector<1x64xf32> to vector<128x64xf32>
    %24 = arith.mulf %19, %23 : vector<128x64xf32>
    %25 = vector.shape_cast %24 : vector<128x64xf32> to vector<2x64x64xf32>
    %c0_8 = arith.constant 0 : index
    %c0_9 = arith.constant 0 : index
    %26 = vector.load %arg3[%c0_8, %c0_9] : memref<64x64xf32, #tpu.memory_space<vmem>>, vector<64x64xf32>
    %27 = vector.shape_cast %26 : vector<64x64xf32> to vector<1x64x64xf32>
    %28 = vector.broadcast %27 : vector<1x64x64xf32> to vector<2x64x64xf32>
    %29 = arith.addf %25, %28 : vector<2x64x64xf32>
    %30 = vector.shape_cast %29 : vector<2x64x64xf32> to vector<128x64xf32>
    %cst_10 = arith.constant dense<0.000000e+00> : vector<128xf32>
    %31 = vector.multi_reduction <add>, %30, %cst_10 [1] : vector<128x64xf32> to vector<128xf32>
    %32 = vector.shape_cast %31 : vector<128xf32> to vector<128x1xf32>
    %cst_11 = arith.constant 6.400000e+01 : f32
    %33 = vector.broadcast %cst_11 : f32 to vector<128x1xf32>
    %34 = arith.divf %32, %33 : vector<128x1xf32>
    %35 = vector.broadcast %34 : vector<128x1xf32> to vector<128x64xf32>
    %36 = arith.subf %30, %35 : vector<128x64xf32>
    %37 = arith.mulf %36, %36 : vector<128x64xf32>
    %cst_12 = arith.constant dense<0.000000e+00> : vector<128xf32>
    %38 = vector.multi_reduction <add>, %37, %cst_12 [1] : vector<128x64xf32> to vector<128xf32>
    %39 = vector.shape_cast %38 : vector<128xf32> to vector<128x1xf32>
    %cst_13 = arith.constant 6.400000e+01 : f32
    %40 = vector.broadcast %cst_13 : f32 to vector<128x1xf32>
    %41 = arith.divf %39, %40 : vector<128x1xf32>
    %42 = vector.broadcast %34 : vector<128x1xf32> to vector<128x64xf32>
    %43 = arith.subf %30, %42 : vector<128x64xf32>
    %cst_14 = arith.constant 9.99999974E-6 : f32
    %44 = vector.broadcast %cst_14 : f32 to vector<128x1xf32>
    %45 = arith.addf %41, %44 : vector<128x1xf32>
    %46 = math.rsqrt %45 : vector<128x1xf32>
    %47 = vector.broadcast %46 : vector<128x1xf32> to vector<128x64xf32>
    %48 = arith.mulf %43, %47 : vector<128x64xf32>
    %49 = arith.truncf %48 : vector<128x64xf32> to vector<128x64xbf16>
    %c0_15 = arith.constant 0 : index
    %c0_16 = arith.constant 0 : index
    %50 = vector.load %arg4[%c0_15, %c0_16] : memref<64x128xbf16, #tpu.memory_space<vmem>>, vector<64x128xbf16>
    %cst_17 = arith.constant dense<0.000000e+00> : vector<128x128xf32>
    %51 = tpu.matmul %49, %50, %cst_17 {dimension_numbers = #tpu.dot_dimension_numbers<[1], [0], [0], [1], [0, 0, 1, 1], [], []>} : vector<128x64xbf16>, vector<64x128xbf16>, vector<128x128xf32> -> vector<128x128xf32>
    %c0_18 = arith.constant 0 : index
    %c0_19 = arith.constant 0 : index
    %52 = vector.load %arg5[%c0_18, %c0_19] : memref<1x128xf32, #tpu.memory_space<vmem>>, vector<1x128xf32>
    %53 = vector.shape_cast %52 : vector<1x128xf32> to vector<128xf32>
    %54 = vector.shape_cast %53 : vector<128xf32> to vector<1x128xf32>
    %55 = vector.broadcast %54 : vector<1x128xf32> to vector<128x128xf32>
    %56 = arith.addf %51, %55 : vector<128x128xf32>
    %c0_20 = arith.constant 0 : index
    %c0_21 = arith.constant 0 : index
    %57 = vector.load %arg6[%c0_20, %c0_21] : memref<64x64xbf16, #tpu.memory_space<vmem>>, vector<64x64xbf16>
    %cst_22 = arith.constant dense<0.000000e+00> : vector<128x64xf32>
    %58 = tpu.matmul %49, %57, %cst_22 {dimension_numbers = #tpu.dot_dimension_numbers<[1], [0], [0], [1], [0, 0, 1, 1], [], []>} : vector<128x64xbf16>, vector<64x64xbf16>, vector<128x64xf32> -> vector<128x64xf32>
    %c0_23 = arith.constant 0 : index
    %c0_24 = arith.constant 0 : index
    %59 = vector.load %arg7[%c0_23, %c0_24] : memref<1x64xf32, #tpu.memory_space<vmem>>, vector<1x64xf32>
    %60 = vector.shape_cast %59 : vector<1x64xf32> to vector<64xf32>
    %61 = vector.shape_cast %60 : vector<64xf32> to vector<1x64xf32>
    %62 = vector.broadcast %61 : vector<1x64xf32> to vector<128x64xf32>
    %63 = arith.addf %58, %62 : vector<128x64xf32>
    %64 = arith.mulf %56, %56 : vector<128x128xf32>
    %65 = vector.extract_strided_slice %64 {offsets = [0, 0], sizes = [128, 64], strides = [1, 1]} : vector<128x128xf32> to vector<128x64xf32>
    %cst_25 = arith.constant dense<0.000000e+00> : vector<128xf32>
    %66 = vector.multi_reduction <add>, %65, %cst_25 [1] : vector<128x64xf32> to vector<128xf32>
    %67 = vector.shape_cast %66 : vector<128xf32> to vector<128x1xf32>
    %cst_26 = arith.constant 5.000000e-01 : f32
    %68 = vector.broadcast %cst_26 : f32 to vector<128x1xf32>
    %69 = arith.mulf %68, %67 : vector<128x1xf32>
    %cst_27 = arith.constant dense<0.000000e+00> : vector<128xf32>
    %70 = vector.multi_reduction <add>, %64, %cst_27 [1] : vector<128x128xf32> to vector<128xf32>
    %71 = vector.shape_cast %70 : vector<128xf32> to vector<128x1xf32>
    %cst_28 = arith.constant 5.000000e-01 : f32
    %72 = vector.broadcast %cst_28 : f32 to vector<128x1xf32>
    %73 = arith.mulf %72, %71 : vector<128x1xf32>
    %74 = arith.subf %73, %69 : vector<128x1xf32>
    %75 = arith.truncf %56 : vector<128x128xf32> to vector<128x128xbf16>
    %c0_29 = arith.constant 0 : index
    %c0_30 = arith.constant 0 : index
    %76 = vector.load %arg8[%c0_29, %c0_30] : memref<128x64xbf16, #tpu.memory_space<vmem>>, vector<128x64xbf16>
    %cst_31 = arith.constant dense<0.000000e+00> : vector<128x64xf32>
    %77 = tpu.matmul %75, %76, %cst_31 {dimension_numbers = #tpu.dot_dimension_numbers<[1], [0], [0], [1], [0, 0, 1, 1], [], []>} : vector<128x128xbf16>, vector<128x64xbf16>, vector<128x64xf32> -> vector<128x64xf32>
    %78 = vector.extract_strided_slice %77 {offsets = [0, 0], sizes = [128, 32], strides = [1, 1]} : vector<128x64xf32> to vector<128x32xf32>
    %79 = vector.broadcast %69 : vector<128x1xf32> to vector<128x32xf32>
    %80 = arith.subf %78, %79 : vector<128x32xf32>
    %81 = math.exp %80 : vector<128x32xf32>
    %cst_32 = arith.constant 0.176776692 : f32
    %82 = vector.broadcast %cst_32 : f32 to vector<128x32xf32>
    %83 = arith.mulf %81, %82 : vector<128x32xf32>
    %84 = vector.extract_strided_slice %77 {offsets = [0, 32], sizes = [128, 32], strides = [1, 1]} : vector<128x64xf32> to vector<128x32xf32>
    %85 = vector.broadcast %74 : vector<128x1xf32> to vector<128x32xf32>
    %86 = arith.subf %84, %85 : vector<128x32xf32>
    %87 = math.exp %86 : vector<128x32xf32>
    %cst_33 = arith.constant 0.176776692 : f32
    %88 = vector.broadcast %cst_33 : f32 to vector<128x32xf32>
    %89 = arith.mulf %87, %88 : vector<128x32xf32>
    %90 = vector.shape_cast %83 : vector<128x32xf32> to vector<2x64x32xf32>
    %91 = vector.shape_cast %89 : vector<128x32xf32> to vector<2x64x32xf32>
    %92 = vector.shape_cast %63 : vector<128x64xf32> to vector<2x64x64xf32>
    %cst_34 = arith.constant dense<0.000000e+00> : vector<2x32xf32>
    %93 = vector.multi_reduction <add>, %90, %cst_34 [1] : vector<2x64x32xf32> to vector<2x32xf32>
    %94 = vector.shape_cast %93 : vector<2x32xf32> to vector<2x1x32xf32>
    %95 = vector.broadcast %94 : vector<2x1x32xf32> to vector<2x64x32xf32>
    %96 = arith.mulf %91, %95 : vector<2x64x32xf32>
    %cst_35 = arith.constant dense<0.000000e+00> : vector<2x64xf32>
    %97 = vector.multi_reduction <add>, %96, %cst_35 [2] : vector<2x64x32xf32> to vector<2x64xf32>
    %98 = vector.shape_cast %97 : vector<2x64xf32> to vector<2x64x1xf32>
    %99 = arith.truncf %90 : vector<2x64x32xf32> to vector<2x64x32xbf16>
    %100 = arith.truncf %92 : vector<2x64x64xf32> to vector<2x64x64xbf16>
    "tpu.trace_start"() <{level = 10 : i32, message = "btm,bte->bme"}> : () -> ()
    %cst_36 = arith.constant dense<0.000000e+00> : vector<2x32x64xf32>
    %101 = tpu.matmul %99, %100, %cst_36 {dimension_numbers = #tpu.dot_dimension_numbers<[1], [1], [2], [2], [0, 0, 0, 2, 1, 2], [0], [0]>} : vector<2x64x32xbf16>, vector<2x64x64xbf16>, vector<2x32x64xf32> -> vector<2x32x64xf32>
    "tpu.trace_stop"() : () -> ()
    %102 = arith.truncf %91 : vector<2x64x32xf32> to vector<2x64x32xbf16>
    %103 = arith.truncf %101 : vector<2x32x64xf32> to vector<2x32x64xbf16>
    "tpu.trace_start"() <{level = 10 : i32, message = "btm,bme->bte"}> : () -> ()
    %cst_37 = arith.constant dense<0.000000e+00> : vector<2x64x64xf32>
    %104 = tpu.matmul %102, %103, %cst_37 {dimension_numbers = #tpu.dot_dimension_numbers<[2], [1], [1], [2], [0, 0, 0, 1, 1, 2], [0], [0]>} : vector<2x64x32xbf16>, vector<2x32x64xbf16>, vector<2x64x64xf32> -> vector<2x64x64xf32>
    "tpu.trace_stop"() : () -> ()
    %cst_38 = arith.constant 9.99999993E-9 : f32
    %105 = vector.broadcast %cst_38 : f32 to vector<2x64x1xf32>
    %106 = arith.addf %98, %105 : vector<2x64x1xf32>
    %107 = tpu.reciprocal %106 {approx = true} : vector<2x64x1xf32> -> vector<2x64x1xf32>
    %108 = vector.broadcast %107 : vector<2x64x1xf32> to vector<2x64x64xf32>
    %109 = arith.mulf %104, %108 : vector<2x64x64xf32>
    %110 = vector.shape_cast %109 : vector<2x64x64xf32> to vector<128x64xf32>
    %111 = arith.truncf %110 : vector<128x64xf32> to vector<128x64xbf16>
    %c0_39 = arith.constant 0 : index
    %c0_40 = arith.constant 0 : index
    %112 = vector.load %arg9[%c0_39, %c0_40] : memref<64x64xbf16, #tpu.memory_space<vmem>>, vector<64x64xbf16>
    %cst_41 = arith.constant dense<0.000000e+00> : vector<128x64xf32>
    %113 = tpu.matmul %111, %112, %cst_41 {dimension_numbers = #tpu.dot_dimension_numbers<[1], [0], [0], [1], [0, 0, 1, 1], [], []>} : vector<128x64xbf16>, vector<64x64xbf16>, vector<128x64xf32> -> vector<128x64xf32>
    %c0_42 = arith.constant 0 : index
    %c0_43 = arith.constant 0 : index
    %114 = vector.load %arg10[%c0_42, %c0_43] : memref<1x64xf32, #tpu.memory_space<vmem>>, vector<1x64xf32>
    %115 = vector.shape_cast %114 : vector<1x64xf32> to vector<64xf32>
    %116 = vector.shape_cast %115 : vector<64xf32> to vector<1x64xf32>
    %117 = vector.broadcast %116 : vector<1x64xf32> to vector<128x64xf32>
    %118 = arith.addf %113, %117 : vector<128x64xf32>
    %119 = arith.addf %63, %118 : vector<128x64xf32>
    %cst_44 = arith.constant dense<0.000000e+00> : vector<128xf32>
    %120 = vector.multi_reduction <add>, %119, %cst_44 [1] : vector<128x64xf32> to vector<128xf32>
    %121 = vector.shape_cast %120 : vector<128xf32> to vector<128x1xf32>
    %cst_45 = arith.constant 6.400000e+01 : f32
    %122 = vector.broadcast %cst_45 : f32 to vector<128x1xf32>
    %123 = arith.divf %121, %122 : vector<128x1xf32>
    %124 = vector.broadcast %123 : vector<128x1xf32> to vector<128x64xf32>
    %125 = arith.subf %119, %124 : vector<128x64xf32>
    %126 = arith.mulf %125, %125 : vector<128x64xf32>
    %cst_46 = arith.constant dense<0.000000e+00> : vector<128xf32>
    %127 = vector.multi_reduction <add>, %126, %cst_46 [1] : vector<128x64xf32> to vector<128xf32>
    %128 = vector.shape_cast %127 : vector<128xf32> to vector<128x1xf32>
    %cst_47 = arith.constant 6.400000e+01 : f32
    %129 = vector.broadcast %cst_47 : f32 to vector<128x1xf32>
    %130 = arith.divf %128, %129 : vector<128x1xf32>
    %131 = vector.broadcast %123 : vector<128x1xf32> to vector<128x64xf32>
    %132 = arith.subf %119, %131 : vector<128x64xf32>
    %cst_48 = arith.constant 9.99999974E-6 : f32
    %133 = vector.broadcast %cst_48 : f32 to vector<128x1xf32>
    %134 = arith.addf %130, %133 : vector<128x1xf32>
    %135 = math.rsqrt %134 : vector<128x1xf32>
    %136 = vector.broadcast %135 : vector<128x1xf32> to vector<128x64xf32>
    %137 = arith.mulf %132, %136 : vector<128x64xf32>
    %138 = arith.truncf %137 : vector<128x64xf32> to vector<128x64xbf16>
    %c0_49 = arith.constant 0 : index
    %c0_50 = arith.constant 0 : index
    %139 = vector.load %arg11[%c0_49, %c0_50] : memref<64x64xbf16, #tpu.memory_space<vmem>>, vector<64x64xbf16>
    %cst_51 = arith.constant dense<0.000000e+00> : vector<128x64xf32>
    %140 = tpu.matmul %138, %139, %cst_51 {dimension_numbers = #tpu.dot_dimension_numbers<[1], [0], [0], [1], [0, 0, 1, 1], [], []>} : vector<128x64xbf16>, vector<64x64xbf16>, vector<128x64xf32> -> vector<128x64xf32>
    %c0_52 = arith.constant 0 : index
    %c0_53 = arith.constant 0 : index
    %141 = vector.load %arg12[%c0_52, %c0_53] : memref<1x64xf32, #tpu.memory_space<vmem>>, vector<1x64xf32>
    %142 = vector.shape_cast %141 : vector<1x64xf32> to vector<64xf32>
    %143 = vector.shape_cast %142 : vector<64xf32> to vector<1x64xf32>
    %144 = vector.broadcast %143 : vector<1x64xf32> to vector<128x64xf32>
    %145 = arith.addf %140, %144 : vector<128x64xf32>
    %cst_54 = arith.constant 5.000000e-01 : f32
    %146 = vector.broadcast %cst_54 : f32 to vector<128x64xf32>
    %147 = arith.mulf %146, %145 : vector<128x64xf32>
    %cst_55 = arith.constant 4.471500e-02 : f32
    %148 = vector.broadcast %cst_55 : f32 to vector<128x64xf32>
    %149 = arith.mulf %148, %145 : vector<128x64xf32>
    %150 = arith.mulf %149, %145 : vector<128x64xf32>
    %151 = arith.mulf %150, %145 : vector<128x64xf32>
    %152 = arith.addf %145, %151 : vector<128x64xf32>
    %cst_56 = arith.constant 0.797884583 : f32
    %153 = vector.broadcast %cst_56 : f32 to vector<128x64xf32>
    %154 = arith.mulf %153, %152 : vector<128x64xf32>
    %155 = math.tanh %154 : vector<128x64xf32>
    %cst_57 = arith.constant 1.000000e+00 : f32
    %156 = vector.broadcast %cst_57 : f32 to vector<128x64xf32>
    %157 = arith.addf %156, %155 : vector<128x64xf32>
    %158 = arith.mulf %147, %157 : vector<128x64xf32>
    %159 = arith.truncf %158 : vector<128x64xf32> to vector<128x64xbf16>
    %c0_58 = arith.constant 0 : index
    %c0_59 = arith.constant 0 : index
    %160 = vector.load %arg13[%c0_58, %c0_59] : memref<64x64xbf16, #tpu.memory_space<vmem>>, vector<64x64xbf16>
    %cst_60 = arith.constant dense<0.000000e+00> : vector<128x64xf32>
    %161 = tpu.matmul %159, %160, %cst_60 {dimension_numbers = #tpu.dot_dimension_numbers<[1], [0], [0], [1], [0, 0, 1, 1], [], []>} : vector<128x64xbf16>, vector<64x64xbf16>, vector<128x64xf32> -> vector<128x64xf32>
    %c0_61 = arith.constant 0 : index
    %c0_62 = arith.constant 0 : index
    %162 = vector.load %arg14[%c0_61, %c0_62] : memref<1x64xf32, #tpu.memory_space<vmem>>, vector<1x64xf32>
    %163 = vector.shape_cast %162 : vector<1x64xf32> to vector<64xf32>
    %164 = vector.shape_cast %163 : vector<64xf32> to vector<1x64xf32>
    %165 = vector.broadcast %164 : vector<1x64xf32> to vector<128x64xf32>
    %166 = arith.addf %161, %165 : vector<128x64xf32>
    %167 = arith.addf %119, %166 : vector<128x64xf32>
    %168 = vector.shape_cast %167 : vector<128x64xf32> to vector<2x64x64xf32>
    %c0_63 = arith.constant 0 : index
    %c0_64 = arith.constant 0 : index
    %c0_65 = arith.constant 0 : index
    %169 = vector.load %arg15[%c0_63, %c0_64, %c0_65] : memref<2x64x64xf32, #tpu.memory_space<vmem>>, vector<2x64x64xf32>
    tpu.vector_store %arg15[%c0_63, %c0_64, %c0_65], %168 {strides = array<i32>} : memref<2x64x64xf32, #tpu.memory_space<vmem>>, vector<2x64x64xf32>,
    return
  }
  func.func @transform_0(%arg0: i32) -> (i32, i32, i32) {
    %c0_i32 = arith.constant 0 : i32
    %c0_i32_0 = arith.constant 0 : i32
    %c0_i32_1 = arith.constant 0 : i32
    return %arg0, %c0_i32, %c0_i32_0 : i32, i32, i32
  }
  func.func @transform_1(%arg0: i32) -> (i32, i32) {
    %c0_i32 = arith.constant 0 : i32
    %c0_i32_0 = arith.constant 0 : i32
    %c0_i32_1 = arith.constant 0 : i32
    return %c0_i32, %c0_i32_0 : i32, i32
  }
  func.func @transform_2(%arg0: i32) -> (i32, i32) {
    %c0_i32 = arith.constant 0 : i32
    %c0_i32_0 = arith.constant 0 : i32
    %c0_i32_1 = arith.constant 0 : i32
    return %c0_i32, %c0_i32_0 : i32, i32
  }
  func.func @transform_3(%arg0: i32) -> (i32, i32) {
    %c0_i32 = arith.constant 0 : i32
    %c0_i32_0 = arith.constant 0 : i32
    %c0_i32_1 = arith.constant 0 : i32
    return %c0_i32, %c0_i32_0 : i32, i32
  }
  func.func @transform_4(%arg0: i32) -> (i32, i32) {
    %c0_i32 = arith.constant 0 : i32
    %c0_i32_0 = arith.constant 0 : i32
    %c0_i32_1 = arith.constant 0 : i32
    return %c0_i32, %c0_i32_0 : i32, i32
  }
  func.func @transform_5(%arg0: i32) -> (i32, i32) {
    %c0_i32 = arith.constant 0 : i32
    %c0_i32_0 = arith.constant 0 : i32
    %c0_i32_1 = arith.constant 0 : i32
    return %c0_i32, %c0_i32_0 : i32, i32
  }
  func.func @transform_6(%arg0: i32) -> (i32, i32) {
    %c0_i32 = arith.constant 0 : i32
    %c0_i32_0 = arith.constant 0 : i32
    %c0_i32_1 = arith.constant 0 : i32
    return %c0_i32, %c0_i32_0 : i32, i32
  }
  func.func @transform_7(%arg0: i32) -> (i32, i32) {
    %c0_i32 = arith.constant 0 : i32
    %c0_i32_0 = arith.constant 0 : i32
    %c0_i32_1 = arith.constant 0 : i32
    return %c0_i32, %c0_i32_0 : i32, i32
  }
  func.func @transform_8(%arg0: i32) -> (i32, i32) {
    %c0_i32 = arith.constant 0 : i32
    %c0_i32_0 = arith.constant 0 : i32
    %c0_i32_1 = arith.constant 0 : i32
    return %c0_i32, %c0_i32_0 : i32, i32
  }
  func.func @transform_9(%arg0: i32) -> (i32, i32) {
    %c0_i32 = arith.constant 0 : i32
    %c0_i32_0 = arith.constant 0 : i32
    %c0_i32_1 = arith.constant 0 : i32
    return %c0_i32, %c0_i32_0 : i32, i32
  }
  func.func @transform_10(%arg0: i32) -> (i32, i32) {
    %c0_i32 = arith.constant 0 : i32
    %c0_i32_0 = arith.constant 0 : i32
    %c0_i32_1 = arith.constant 0 : i32
    return %c0_i32, %c0_i32_0 : i32, i32
  }
  func.func @transform_11(%arg0: i32) -> (i32, i32) {
    %c0_i32 = arith.constant 0 : i32
    %c0_i32_0 = arith.constant 0 : i32
    %c0_i32_1 = arith.constant 0 : i32
    return %c0_i32, %c0_i32_0 : i32, i32
  }
  func.func @transform_12(%arg0: i32) -> (i32, i32) {
    %c0_i32 = arith.constant 0 : i32
    %c0_i32_0 = arith.constant 0 : i32
    %c0_i32_1 = arith.constant 0 : i32
    return %c0_i32, %c0_i32_0 : i32, i32
  }
  func.func @transform_13(%arg0: i32) -> (i32, i32) {
    %c0_i32 = arith.constant 0 : i32
    %c0_i32_0 = arith.constant 0 : i32
    %c0_i32_1 = arith.constant 0 : i32
    return %c0_i32, %c0_i32_0 : i32, i32
  }
  func.func @transform_14(%arg0: i32) -> (i32, i32, i32) {
    %c0_i32 = arith.constant 0 : i32
    %c0_i32_0 = arith.constant 0 : i32
    %c0_i32_1 = arith.constant 0 : i32
    return %arg0, %c0_i32, %c0_i32_0 : i32, i32, i32
  }
}

</mosaic_0001>

<llo_original>
// kernel: tpu_custom_call.1
$region0: #{tpu_custom_call.1}
  #allocation0 [shape = 'u32[]', space=smem, size = 0x4, offset = 0x4, fixed_abs, tag = 'smem constant byte address 0x4 - core index']
  #allocation1 [shape = 'u32[144,128]{1,0:T(1,128)}', space=vmem, size = 0x12000, scoped, tag = 'internal scratch']
  %s0 = inlined_call_operand.hbm [shape: f32[2,64,64], index: 0, kind: input, shape index: {}]
  %s1 = inlined_call_operand.vmem [shape: f32[1,64], index: 1, kind: input, shape index: {}]
  %s2 = inlined_call_operand.vmem [shape: f32[64,64], index: 2, kind: input, shape index: {}]
  %s3 = inlined_call_operand.vmem [shape: bf16[64,128], index: 3, kind: input, shape index: {}]
  %s4 = inlined_call_operand.vmem [shape: f32[1,128], index: 4, kind: input, shape index: {}]
  %s5 = inlined_call_operand.hbm [shape: bf16[64,64], index: 5, kind: input, shape index: {}]
  %s6 = inlined_call_operand.hbm [shape: f32[1,64], index: 6, kind: input, shape index: {}]
  %s7 = inlined_call_operand.vmem [shape: bf16[128,64], index: 7, kind: input, shape index: {}]
  %s8 = inlined_call_operand.hbm [shape: bf16[64,64], index: 8, kind: input, shape index: {}]
  %s9 = inlined_call_operand.hbm [shape: f32[1,64], index: 9, kind: input, shape index: {}]
  %s10 = inlined_call_operand.vmem [shape: bf16[64,64], index: 10, kind: input, shape index: {}]
  %s11 = inlined_call_operand.vmem [shape: f32[1,64], index: 11, kind: input, shape index: {}]
  %s12 = inlined_call_operand.hbm [shape: bf16[64,64], index: 12, kind: input, shape index: {}]
  %s13 = inlined_call_operand.vmem [shape: f32[1,64], index: 13, kind: input, shape index: {}]
  %s14 = inlined_call_operand.hbm [shape: f32[2,64,64], index: 14, kind: output, shape index: {}]
  %s15 = sld [smem:[#allocation0]]
  $region90: #{tpu_custom_call.1} parent=0
    _
  %s17 = ssub.s32 1, %s15
  %s18 = scalar_select 0, %s17, %s15
  $region1: #{tpu_custom_call.1} parent=0
    #allocation2 [shape = 'u8[65536]{0}', space=vmem, size = 0x10000, scoped, tag = 'input window, operand 0, single buffered']
    #allocation3 [shape = 's32[1]{0}', space=sflag, size = 0x4, scoped, tag = 'scoped memory for tpu_custom_call.1']
    #allocation4 [shape = 's32[1]{0}', space=sflag, size = 0x4, scoped, tag = 'scoped memory for tpu_custom_call.1']
    #allocation5 [shape = 'u8[16384]{0}', space=vmem, size = 0x4000, scoped, tag = 'input window, operand 5, single buffered']
    #allocation6 [shape = 's32[1]{0}', space=sflag, size = 0x4, scoped, tag = 'scoped memory for tpu_custom_call.1']
    #allocation7 [shape = 'u8[512]{0}', space=vmem, size = 0x400, scoped, tag = 'input window, operand 6, single buffered']
    #allocation8 [shape = 'u8[16384]{0}', space=vmem, size = 0x4000, scoped, tag = 'input window, operand 8, single buffered']
    #allocation9 [shape = 's32[1]{0}', space=sflag, size = 0x4, scoped, tag = 'scoped memory for tpu_custom_call.1']
    #allocation10 [shape = 'u8[512]{0}', space=vmem, size = 0x400, scoped, tag = 'input window, operand 9, single buffered']
    #allocation11 [shape = 'u8[16384]{0}', space=vmem, size = 0x4000, scoped, tag = 'input window, operand 12, single buffered']
    #allocation12 [shape = 's32[1]{0}', space=sflag, size = 0x4, scoped, tag = 'scoped memory for tpu_custom_call.1']
    #allocation13 [shape = 'u8[65536]{0}', space=vmem, size = 0x10000, scoped, tag = 'output window, operand 0, single buffered']
    %19 = vsyncpa [#allocation3], 0
    %20 = vsyncpa [#allocation6], 0
    %21 = vsyncpa [#allocation9], 0
    %22 = vsyncpa [#allocation12], 0
    %23 = vsyncpa [#allocation4], 0
    // Predicated region
    $region2: #{tpu_custom_call.1} parent=1 // pred_check
      _
    $region3: #{tpu_custom_call.1} parent=1 // pred_check_branch
      %25 = sbr.rel (0) target = $region5
    $region4: #{tpu_custom_call.1} parent=1 // pred_region
      %s27 = ssub.s32 2048, 2048
      %28 = vsyncadd [#allocation3], %s27
      %s29 = sshll.u32 [#allocation2], 4
      %s30 = int_to_ptr.vmem [resolvable:$true] %s29
      %35 = dma.hbm_to_vmem [thread:$0]  %s0, 2048, %s30, [#allocation3], 128, 128, 8
    $region5: #{tpu_custom_call.1} parent=1 // pred_fallthru
      _
    // Predicated region
    $region6: #{tpu_custom_call.1} parent=1 // pred_check
      _
    $region7: #{tpu_custom_call.1} parent=1 // pred_check_branch
      %37 = sbr.rel (0) target = $region9
    $region8: #{tpu_custom_call.1} parent=1 // pred_region
      _
    $region9: #{tpu_custom_call.1} parent=1 // pred_fallthru
      _
    // Predicated region
    $region10: #{tpu_custom_call.1} parent=1 // pred_check
      _
    $region11: #{tpu_custom_call.1} parent=1 // pred_check_branch
      %39 = sbr.rel (0) target = $region13
    $region12: #{tpu_custom_call.1} parent=1 // pred_region
      _
    $region13: #{tpu_custom_call.1} parent=1 // pred_fallthru
      _
    // Predicated region
    $region14: #{tpu_custom_call.1} parent=1 // pred_check
      _
    $region15: #{tpu_custom_call.1} parent=1 // pred_check_branch
      %41 = sbr.rel (0) target = $region17
    $region16: #{tpu_custom_call.1} parent=1 // pred_region
      _
    $region17: #{tpu_custom_call.1} parent=1 // pred_fallthru
      _
    // Predicated region
    $region18: #{tpu_custom_call.1} parent=1 // pred_check
      _
    $region19: #{tpu_custom_call.1} parent=1 // pred_check_branch
      %43 = sbr.rel (0) target = $region21
    $region20: #{tpu_custom_call.1} parent=1 // pred_region
      _
    $region21: #{tpu_custom_call.1} parent=1 // pred_fallthru
      _
    // Predicated region
    $region22: #{tpu_custom_call.1} parent=1 // pred_check
      _
    $region23: #{tpu_custom_call.1} parent=1 // pred_check_branch
      %45 = sbr.rel (0) target = $region25
    $region24: #{tpu_custom_call.1} parent=1 // pred_region
      %s47 = ssub.s32 512, 512
      %48 = vsyncadd [#allocation6], %s47
      %s49 = sshll.u32 [#allocation5], 4
      %s50 = int_to_ptr.vmem [resolvable:$true] %s49
      %55 = dma.hbm_to_vmem [thread:$0]  %s5, 512, %s50, [#allocation6], 64, 64, 4
    $region25: #{tpu_custom_call.1} parent=1 // pred_fallthru
      _
    // Predicated region
    $region26: #{tpu_custom_call.1} parent=1 // pred_check
      _
    $region27: #{tpu_custom_call.1} parent=1 // pred_check_branch
      %57 = sbr.rel (0) target = $region29
    $region28: #{tpu_custom_call.1} parent=1 // pred_region
      %s59 = ssub.s32 16, 16
      %60 = vsyncadd [#allocation6], %s59
      %s62 = sshll.u32 [#allocation7], 4
      %s63 = int_to_ptr.vmem [resolvable:$true] %s62
      %65 = dma.hbm_to_vmem [thread:$0]  %s6, 16, %s63, [#allocation6]
    $region29: #{tpu_custom_call.1} parent=1 // pred_fallthru
      _
    // Predicated region
    $region30: #{tpu_custom_call.1} parent=1 // pred_check
      _
    $region31: #{tpu_custom_call.1} parent=1 // pred_check_branch
      %67 = sbr.rel (0) target = $region33
    $region32: #{tpu_custom_call.1} parent=1 // pred_region
      _
    $region33: #{tpu_custom_call.1} parent=1 // pred_fallthru
      _
    // Predicated region
    $region34: #{tpu_custom_call.1} parent=1 // pred_check
      _
    $region35: #{tpu_custom_call.1} parent=1 // pred_check_branch
      %69 = sbr.rel (0) target = $region37
    $region36: #{tpu_custom_call.1} parent=1 // pred_region
      %s71 = ssub.s32 512, 512
      %72 = vsyncadd [#allocation9], %s71
      %s73 = sshll.u32 [#allocation8], 4
      %s74 = int_to_ptr.vmem [resolvable:$true] %s73
      %79 = dma.hbm_to_vmem [thread:$0]  %s8, 512, %s74, [#allocation9], 64, 64, 4
    $region37: #{tpu_custom_call.1} parent=1 // pred_fallthru
      _
    // Predicated region
    $region38: #{tpu_custom_call.1} parent=1 // pred_check
      _
    $region39: #{tpu_custom_call.1} parent=1 // pred_check_branch
      %81 = sbr.rel (0) target = $region41
    $region40: #{tpu_custom_call.1} parent=1 // pred_region
      %s83 = ssub.s32 16, 16
      %84 = vsyncadd [#allocation9], %s83
      %s86 = sshll.u32 [#allocation10], 4
      %s87 = int_to_ptr.vmem [resolvable:$true] %s86
      %89 = dma.hbm_to_vmem [thread:$0]  %s9, 16, %s87, [#allocation9]
    $region41: #{tpu_custom_call.1} parent=1 // pred_fallthru
      _
    // Predicated region
    $region42: #{tpu_custom_call.1} parent=1 // pred_check
      _
    $region43: #{tpu_custom_call.1} parent=1 // pred_check_branch
      %91 = sbr.rel (0) target = $region45
    $region44: #{tpu_custom_call.1} parent=1 // pred_region
      _
    $region45: #{tpu_custom_call.1} parent=1 // pred_fallthru
      _
    // Predicated region
    $region46: #{tpu_custom_call.1} parent=1 // pred_check
      _
    $region47: #{tpu_custom_call.1} parent=1 // pred_check_branch
      %93 = sbr.rel (0) target = $region49
    $region48: #{tpu_custom_call.1} parent=1 // pred_region
      _
    $region49: #{tpu_custom_call.1} parent=1 // pred_fallthru
      _
    // Predicated region
    $region50: #{tpu_custom_call.1} parent=1 // pred_check
      _
    $region51: #{tpu_custom_call.1} parent=1 // pred_check_branch
      %95 = sbr.rel (0) target = $region53
    $region52: #{tpu_custom_call.1} parent=1 // pred_region
      %s97 = ssub.s32 512, 512
      %98 = vsyncadd [#allocation12], %s97
      %s99 = sshll.u32 [#allocation11], 4
      %s100 = int_to_ptr.vmem [resolvable:$true] %s99
      %105 = dma.hbm_to_vmem [thread:$0]  %s12, 512, %s100, [#allocation12], 64, 64, 4
    $region53: #{tpu_custom_call.1} parent=1 // pred_fallthru
      _
    // Predicated region
    $region54: #{tpu_custom_call.1} parent=1 // pred_check
      _
    $region55: #{tpu_custom_call.1} parent=1 // pred_check_branch
      %107 = sbr.rel (0) target = $region57
    $region56: #{tpu_custom_call.1} parent=1 // pred_region
      _
    $region57: #{tpu_custom_call.1} parent=1 // pred_fallthru
      _
    // Predicated region
    $region58: #{tpu_custom_call.1} parent=1 // pred_check
      _
    $region59: #{tpu_custom_call.1} parent=1 // pred_check_branch
      %109 = sbr.rel (0) target = $region61
    $region60: #{tpu_custom_call.1} parent=1 // pred_region
      %110 = dma.done [#allocation3], 2048
    $region61: #{tpu_custom_call.1} parent=1 // pred_fallthru
      _
    // Predicated region
    $region62: #{tpu_custom_call.1} parent=1 // pred_check
      _
    $region63: #{tpu_custom_call.1} parent=1 // pred_check_branch
      %112 = sbr.rel (0) target = $region65
    $region64: #{tpu_custom_call.1} parent=1 // pred_region
      %113 = dma.done [#allocation6], 512
    $region65: #{tpu_custom_call.1} parent=1 // pred_fallthru
      _
    // Predicated region
    $region66: #{tpu_custom_call.1} parent=1 // pred_check
      _
    $region67: #{tpu_custom_call.1} parent=1 // pred_check_branch
      %115 = sbr.rel (0) target = $region69
    $region68: #{tpu_custom_call.1} parent=1 // pred_region
      %116 = dma.done [#allocation6], 16
    $region69: #{tpu_custom_call.1} parent=1 // pred_fallthru
      _
    // Predicated region
    $region70: #{tpu_custom_call.1} parent=1 // pred_check
      _
    $region71: #{tpu_custom_call.1} parent=1 // pred_check_branch
      %118 = sbr.rel (0) target = $region73
    $region72: #{tpu_custom_call.1} parent=1 // pred_region
      %119 = dma.done [#allocation9], 512
    $region73: #{tpu_custom_call.1} parent=1 // pred_fallthru
      _
    // Predicated region
    $region74: #{tpu_custom_call.1} parent=1 // pred_check
      _
    $region75: #{tpu_custom_call.1} parent=1 // pred_check_branch
      %121 = sbr.rel (0) target = $region77
    $region76: #{tpu_custom_call.1} parent=1 // pred_region
      %122 = dma.done [#allocation9], 16
    $region77: #{tpu_custom_call.1} parent=1 // pred_fallthru
      _
    // Predicated region
    $region78: #{tpu_custom_call.1} parent=1 // pred_check
      _
    $region79: #{tpu_custom_call.1} parent=1 // pred_check_branch
      %124 = sbr.rel (0) target = $region81
    $region80: #{tpu_custom_call.1} parent=1 // pred_region
      %125 = dma.done [#allocation12], 512
    $region81: #{tpu_custom_call.1} parent=1 // pred_fallthru
      _
    %v127 = vld [vmem:[#allocation2] sm:$0xff]
    %v128 = vld [vmem:[#allocation2 + $0x8] sm:$0xff]
    %v129 = vld [vmem:[#allocation2 + $0x10] sm:$0xff]
    %v130 = vld [vmem:[#allocation2 + $0x18] sm:$0xff]
    %v131 = vld [vmem:[#allocation2 + $0x20] sm:$0xff]
    %v132 = vld [vmem:[#allocation2 + $0x28] sm:$0xff]
    %v133 = vld [vmem:[#allocation2 + $0x30] sm:$0xff]
    %v134 = vld [vmem:[#allocation2 + $0x38] sm:$0xff]
    %v135 = vld [vmem:[#allocation2 + $0x40] sm:$0xff]
    %v136 = vld [vmem:[#allocation2 + $0x48] sm:$0xff]
    %v137 = vld [vmem:[#allocation2 + $0x50] sm:$0xff]
    %v138 = vld [vmem:[#allocation2 + $0x58] sm:$0xff]
    %v139 = vld [vmem:[#allocation2 + $0x60] sm:$0xff]
    %v140 = vld [vmem:[#allocation2 + $0x68] sm:$0xff]
    %v141 = vld [vmem:[#allocation2 + $0x70] sm:$0xff]
    %v142 = vld [vmem:[#allocation2 + $0x78] sm:$0xff]
    %vm143 = vcmask 523264
    %v144 = vsel %vm143, %v127, 0.0
    %145 = vadd.xlane.f32.xlu0 %v144
    %v146 = vpop.xlane.xlu0 %145
    %v147 = vsel %vm143, %v128, 0.0
    %148 = vadd.xlane.f32.xlu0 %v147
    %v149 = vpop.xlane.xlu0 %148
    %v150 = vsel %vm143, %v129, 0.0
    %151 = vadd.xlane.f32.xlu0 %v150
    %v152 = vpop.xlane.xlu0 %151
    %v153 = vsel %vm143, %v130, 0.0
    %154 = vadd.xlane.f32.xlu0 %v153
    %v155 = vpop.xlane.xlu0 %154
    %v156 = vsel %vm143, %v131, 0.0
    %157 = vadd.xlane.f32.xlu0 %v156
    %v158 = vpop.xlane.xlu0 %157
    %v159 = vsel %vm143, %v132, 0.0
    %160 = vadd.xlane.f32.xlu0 %v159
    %v161 = vpop.xlane.xlu0 %160
    %v162 = vsel %vm143, %v133, 0.0
    %163 = vadd.xlane.f32.xlu0 %v162
    %v164 = vpop.xlane.xlu0 %163
    %v165 = vsel %vm143, %v134, 0.0
    %166 = vadd.xlane.f32.xlu0 %v165
    %v167 = vpop.xlane.xlu0 %166
    %v168 = vsel %vm143, %v135, 0.0
    %169 = vadd.xlane.f32.xlu0 %v168
    %v170 = vpop.xlane.xlu0 %169
    %v171 = vsel %vm143, %v136, 0.0
    %172 = vadd.xlane.f32.xlu0 %v171
    %v173 = vpop.xlane.xlu0 %172
    %v174 = vsel %vm143, %v137, 0.0
    %175 = vadd.xlane.f32.xlu0 %v174
    %v176 = vpop.xlane.xlu0 %175
    %v177 = vsel %vm143, %v138, 0.0
    %178 = vadd.xlane.f32.xlu0 %v177
    %v179 = vpop.xlane.xlu0 %178
    %v180 = vsel %vm143, %v139, 0.0
    %181 = vadd.xlane.f32.xlu0 %v180
    %v182 = vpop.xlane.xlu0 %181
    %v183 = vsel %vm143, %v140, 0.0
    %184 = vadd.xlane.f32.xlu0 %v183
    %v185 = vpop.xlane.xlu0 %184
    %v186 = vsel %vm143, %v141, 0.0
    %187 = vadd.xlane.f32.xlu0 %v186
    %v188 = vpop.xlane.xlu0 %187
    %v189 = vsel %vm143, %v142, 0.0
    %190 = vadd.xlane.f32.xlu0 %v189
    %v191 = vpop.xlane.xlu0 %190
    %v192 = vrcp.pop 64.0
    %v193 = vmul.f32 %v146, %v192
    %v194 = vmul.f32 %v149, %v192
    %v195 = vmul.f32 %v152, %v192
    %v196 = vmul.f32 %v155, %v192
    %v197 = vmul.f32 %v158, %v192
    %v198 = vmul.f32 %v161, %v192
    %v199 = vmul.f32 %v164, %v192
    %v200 = vmul.f32 %v167, %v192
    %v201 = vmul.f32 %v170, %v192
    %v202 = vmul.f32 %v173, %v192
    %v203 = vmul.f32 %v176, %v192
    %v204 = vmul.f32 %v179, %v192
    %v205 = vmul.f32 %v182, %v192
    %v206 = vmul.f32 %v185, %v192
    %v207 = vmul.f32 %v188, %v192
    %v208 = vmul.f32 %v191, %v192
    %v209 = vsub.f32 %v127, %v193
    %v210 = vsub.f32 %v128, %v194
    %v211 = vsub.f32 %v129, %v195
    %v212 = vsub.f32 %v130, %v196
    %v213 = vsub.f32 %v131, %v197
    %v214 = vsub.f32 %v132, %v198
    %v215 = vsub.f32 %v133, %v199
    %v216 = vsub.f32 %v134, %v200
    %v217 = vsub.f32 %v135, %v201
    %v218 = vsub.f32 %v136, %v202
    %v219 = vsub.f32 %v137, %v203
    %v220 = vsub.f32 %v138, %v204
    %v221 = vsub.f32 %v139, %v205
    %v222 = vsub.f32 %v140, %v206
    %v223 = vsub.f32 %v141, %v207
    %v224 = vsub.f32 %v142, %v208
    %v225 = vmul.f32 %v209, %v209
    %v226 = vmul.f32 %v210, %v210
    %v227 = vmul.f32 %v211, %v211
    %v228 = vmul.f32 %v212, %v212
    %v229 = vmul.f32 %v213, %v213
    %v230 = vmul.f32 %v214, %v214
    %v231 = vmul.f32 %v215, %v215
    %v232 = vmul.f32 %v216, %v216
    %v233 = vmul.f32 %v217, %v217
    %v234 = vmul.f32 %v218, %v218
    %v235 = vmul.f32 %v219, %v219
    %v236 = vmul.f32 %v220, %v220
    %v237 = vmul.f32 %v221, %v221
    %v238 = vmul.f32 %v222, %v222
    %v239 = vmul.f32 %v223, %v223
    %v240 = vmul.f32 %v224, %v224
    %v241 = vsel %vm143, %v225, 0.0
    %242 = vadd.xlane.f32.xlu0 %v241
    %v243 = vpop.xlane.xlu0 %242
    %v244 = vsel %vm143, %v226, 0.0
    %245 = vadd.xlane.f32.xlu0 %v244
    %v246 = vpop.xlane.xlu0 %245
    %v247 = vsel %vm143, %v227, 0.0
    %248 = vadd.xlane.f32.xlu0 %v247
    %v249 = vpop.xlane.xlu0 %248
    %v250 = vsel %vm143, %v228, 0.0
    %251 = vadd.xlane.f32.xlu0 %v250
    %v252 = vpop.xlane.xlu0 %251
    %v253 = vsel %vm143, %v229, 0.0
    %254 = vadd.xlane.f32.xlu0 %v253
    %v255 = vpop.xlane.xlu0 %254
    %v256 = vsel %vm143, %v230, 0.0
    %257 = vadd.xlane.f32.xlu0 %v256
    %v258 = vpop.xlane.xlu0 %257
    %v259 = vsel %vm143, %v231, 0.0
    %260 = vadd.xlane.f32.xlu0 %v259
    %v261 = vpop.xlane.xlu0 %260
    %v262 = vsel %vm143, %v232, 0.0
    %263 = vadd.xlane.f32.xlu0 %v262
    %v264 = vpop.xlane.xlu0 %263
    %v265 = vsel %vm143, %v233, 0.0
    %266 = vadd.xlane.f32.xlu0 %v265
    %v267 = vpop.xlane.xlu0 %266
    %v268 = vsel %vm143, %v234, 0.0
    %269 = vadd.xlane.f32.xlu0 %v268
    %v270 = vpop.xlane.xlu0 %269
    %v271 = vsel %vm143, %v235, 0.0
    %272 = vadd.xlane.f32.xlu0 %v271
    %v273 = vpop.xlane.xlu0 %272
    %v274 = vsel %vm143, %v236, 0.0
    %275 = vadd.xlane.f32.xlu0 %v274
    %v276 = vpop.xlane.xlu0 %275
    %v277 = vsel %vm143, %v237, 0.0
    %278 = vadd.xlane.f32.xlu0 %v277
    %v279 = vpop.xlane.xlu0 %278
    %v280 = vsel %vm143, %v238, 0.0
    %281 = vadd.xlane.f32.xlu0 %v280
    %v282 = vpop.xlane.xlu0 %281
    %v283 = vsel %vm143, %v239, 0.0
    %284 = vadd.xlane.f32.xlu0 %v283
    %v285 = vpop.xlane.xlu0 %284
    %v286 = vsel %vm143, %v240, 0.0
    %287 = vadd.xlane.f32.xlu0 %v286
    %v288 = vpop.xlane.xlu0 %287
    %v289 = vmul.f32 %v243, %v192
    %v290 = vmul.f32 %v246, %v192
    %v291 = vmul.f32 %v249, %v192
    %v292 = vmul.f32 %v252, %v192
    %v293 = vmul.f32 %v255, %v192
    %v294 = vmul.f32 %v258, %v192
    %v295 = vmul.f32 %v261, %v192
    %v296 = vmul.f32 %v264, %v192
    %v297 = vmul.f32 %v267, %v192
    %v298 = vmul.f32 %v270, %v192
    %v299 = vmul.f32 %v273, %v192
    %v300 = vmul.f32 %v276, %v192
    %v301 = vmul.f32 %v279, %v192
    %v302 = vmul.f32 %v282, %v192
    %v303 = vmul.f32 %v285, %v192
    %v304 = vmul.f32 %v288, %v192
    %v305 = vadd.f32 %v289, 1e-05
    %v306 = vadd.f32 %v290, 1e-05
    %v307 = vadd.f32 %v291, 1e-05
    %v308 = vadd.f32 %v292, 1e-05
    %v309 = vadd.f32 %v293, 1e-05
    %v310 = vadd.f32 %v294, 1e-05
    %v311 = vadd.f32 %v295, 1e-05
    %v312 = vadd.f32 %v296, 1e-05
    %v313 = vadd.f32 %v297, 1e-05
    %v314 = vadd.f32 %v298, 1e-05
    %v315 = vadd.f32 %v299, 1e-05
    %v316 = vadd.f32 %v300, 1e-05
    %v317 = vadd.f32 %v301, 1e-05
    %v318 = vadd.f32 %v302, 1e-05
    %v319 = vadd.f32 %v303, 1e-05
    %v320 = vadd.f32 %v304, 1e-05
    %v321 = vrsqrt.pop %v305
    %v322 = vrsqrt.pop %v306
    %v323 = vrsqrt.pop %v307
    %v324 = vrsqrt.pop %v308
    %v325 = vrsqrt.pop %v309
    %v326 = vrsqrt.pop %v310
    %v327 = vrsqrt.pop %v311
    %v328 = vrsqrt.pop %v312
    %v329 = vrsqrt.pop %v313
    %v330 = vrsqrt.pop %v314
    %v331 = vrsqrt.pop %v315
    %v332 = vrsqrt.pop %v316
    %v333 = vrsqrt.pop %v317
    %v334 = vrsqrt.pop %v318
    %v335 = vrsqrt.pop %v319
    %v336 = vrsqrt.pop %v320
    %v337 = vmul.f32 %v209, %v321
    %v338 = vmul.f32 %v210, %v322
    %v339 = vmul.f32 %v211, %v323
    %v340 = vmul.f32 %v212, %v324
    %v341 = vmul.f32 %v213, %v325
    %v342 = vmul.f32 %v214, %v326
    %v343 = vmul.f32 %v215, %v327
    %v344 = vmul.f32 %v216, %v328
    %v345 = vmul.f32 %v217, %v329
    %v346 = vmul.f32 %v218, %v330
    %v347 = vmul.f32 %v219, %v331
    %v348 = vmul.f32 %v220, %v332
    %v349 = vmul.f32 %v221, %v333
    %v350 = vmul.f32 %v222, %v334
    %v351 = vmul.f32 %v223, %v335
    %v352 = vmul.f32 %v224, %v336
    %v353 = vld [vmem:[%s1] sm:$0x1]
    %v355 = vlaneseq
    %v356 = vshrl.u32 %v355, 7
    %v357 = vsub.s32 0, %v356
    %v358 = vrot.slane %v353, %v357
    %v360 = vmul.f32 %v337, %v358
    %v361 = vmul.f32 %v338, %v358
    %v362 = vmul.f32 %v339, %v358
    %v363 = vmul.f32 %v340, %v358
    %v364 = vmul.f32 %v341, %v358
    %v365 = vmul.f32 %v342, %v358
    %v366 = vmul.f32 %v343, %v358
    %v367 = vmul.f32 %v344, %v358
    %v368 = vmul.f32 %v345, %v358
    %v369 = vmul.f32 %v346, %v358
    %v370 = vmul.f32 %v347, %v358
    %v371 = vmul.f32 %v348, %v358
    %v372 = vmul.f32 %v349, %v358
    %v373 = vmul.f32 %v350, %v358
    %v374 = vmul.f32 %v351, %v358
    %v375 = vmul.f32 %v352, %v358
    %v376 = vld [vmem:[%s2] sm:$0xff]
    %v377 = vld [vmem:[%s2 + $0x8] sm:$0xff]
    %v378 = vld [vmem:[%s2 + $0x10] sm:$0xff]
    %v379 = vld [vmem:[%s2 + $0x18] sm:$0xff]
    %v380 = vld [vmem:[%s2 + $0x20] sm:$0xff]
    %v381 = vld [vmem:[%s2 + $0x28] sm:$0xff]
    %v382 = vld [vmem:[%s2 + $0x30] sm:$0xff]
    %v383 = vld [vmem:[%s2 + $0x38] sm:$0xff]
    %v384 = vadd.f32 %v360, %v376
    %v385 = vadd.f32 %v361, %v377
    %v386 = vadd.f32 %v362, %v378
    %v387 = vadd.f32 %v363, %v379
    %v388 = vadd.f32 %v364, %v380
    %v389 = vadd.f32 %v365, %v381
    %v390 = vadd.f32 %v366, %v382
    %v391 = vadd.f32 %v367, %v383
    %v392 = vadd.f32 %v368, %v376
    %v393 = vadd.f32 %v369, %v377
    %v394 = vadd.f32 %v370, %v378
    %v395 = vadd.f32 %v371, %v379
    %v396 = vadd.f32 %v372, %v380
    %v397 = vadd.f32 %v373, %v381
    %v398 = vadd.f32 %v374, %v382
    %v399 = vadd.f32 %v375, %v383
    %v400 = vsel %vm143, %v384, 0.0
    %401 = vadd.xlane.f32.xlu0 %v400
    %v402 = vpop.xlane.xlu0 %401
    %v403 = vsel %vm143, %v385, 0.0
    %404 = vadd.xlane.f32.xlu0 %v403
    %v405 = vpop.xlane.xlu0 %404
    %v406 = vsel %vm143, %v386, 0.0
    %407 = vadd.xlane.f32.xlu0 %v406
    %v408 = vpop.xlane.xlu0 %407
    %v409 = vsel %vm143, %v387, 0.0
    %410 = vadd.xlane.f32.xlu0 %v409
    %v411 = vpop.xlane.xlu0 %410
    %v412 = vsel %vm143, %v388, 0.0
    %413 = vadd.xlane.f32.xlu0 %v412
    %v414 = vpop.xlane.xlu0 %413
    %v415 = vsel %vm143, %v389, 0.0
    %416 = vadd.xlane.f32.xlu0 %v415
    %v417 = vpop.xlane.xlu0 %416
    %v418 = vsel %vm143, %v390, 0.0
    %419 = vadd.xlane.f32.xlu0 %v418
    %v420 = vpop.xlane.xlu0 %419
    %v421 = vsel %vm143, %v391, 0.0
    %422 = vadd.xlane.f32.xlu0 %v421
    %v423 = vpop.xlane.xlu0 %422
    %v424 = vsel %vm143, %v392, 0.0
    %425 = vadd.xlane.f32.xlu0 %v424
    %v426 = vpop.xlane.xlu0 %425
    %v427 = vsel %vm143, %v393, 0.0
    %428 = vadd.xlane.f32.xlu0 %v427
    %v429 = vpop.xlane.xlu0 %428
    %v430 = vsel %vm143, %v394, 0.0
    %431 = vadd.xlane.f32.xlu0 %v430
    %v432 = vpop.xlane.xlu0 %431
    %v433 = vsel %vm143, %v395, 0.0
    %434 = vadd.xlane.f32.xlu0 %v433
    %v435 = vpop.xlane.xlu0 %434
    %v436 = vsel %vm143, %v396, 0.0
    %437 = vadd.xlane.f32.xlu0 %v436
    %v438 = vpop.xlane.xlu0 %437
    %v439 = vsel %vm143, %v397, 0.0
    %440 = vadd.xlane.f32.xlu0 %v439
    %v441 = vpop.xlane.xlu0 %440
    %v442 = vsel %vm143, %v398, 0.0
    %443 = vadd.xlane.f32.xlu0 %v442
    %v444 = vpop.xlane.xlu0 %443
    %v445 = vsel %vm143, %v399, 0.0
    %446 = vadd.xlane.f32.xlu0 %v445
    %v447 = vpop.xlane.xlu0 %446
    %v448 = vmul.f32 %v402, %v192
    %v449 = vmul.f32 %v405, %v192
    %v450 = vmul.f32 %v408, %v192
    %v451 = vmul.f32 %v411, %v192
    %v452 = vmul.f32 %v414, %v192
    %v453 = vmul.f32 %v417, %v192
    %v454 = vmul.f32 %v420, %v192
    %v455 = vmul.f32 %v423, %v192
    %v456 = vmul.f32 %v426, %v192
    %v457 = vmul.f32 %v429, %v192
    %v458 = vmul.f32 %v432, %v192
    %v459 = vmul.f32 %v435, %v192
    %v460 = vmul.f32 %v438, %v192
    %v461 = vmul.f32 %v441, %v192
    %v462 = vmul.f32 %v444, %v192
    %v463 = vmul.f32 %v447, %v192
    %v464 = vsub.f32 %v384, %v448
    %v465 = vsub.f32 %v385, %v449
    %v466 = vsub.f32 %v386, %v450
    %v467 = vsub.f32 %v387, %v451
    %v468 = vsub.f32 %v388, %v452
    %v469 = vsub.f32 %v389, %v453
    %v470 = vsub.f32 %v390, %v454
    %v471 = vsub.f32 %v391, %v455
    %v472 = vsub.f32 %v392, %v456
    %v473 = vsub.f32 %v393, %v457
    %v474 = vsub.f32 %v394, %v458
    %v475 = vsub.f32 %v395, %v459
    %v476 = vsub.f32 %v396, %v460
    %v477 = vsub.f32 %v397, %v461
    %v478 = vsub.f32 %v398, %v462
    %v479 = vsub.f32 %v399, %v463
    %v480 = vmul.f32 %v464, %v464
    %v481 = vmul.f32 %v465, %v465
    %v482 = vmul.f32 %v466, %v466
    %v483 = vmul.f32 %v467, %v467
    %v484 = vmul.f32 %v468, %v468
    %v485 = vmul.f32 %v469, %v469
    %v486 = vmul.f32 %v470, %v470
    %v487 = vmul.f32 %v471, %v471
    %v488 = vmul.f32 %v472, %v472
    %v489 = vmul.f32 %v473, %v473
    %v490 = vmul.f32 %v474, %v474
    %v491 = vmul.f32 %v475, %v475
    %v492 = vmul.f32 %v476, %v476
    %v493 = vmul.f32 %v477, %v477
    %v494 = vmul.f32 %v478, %v478
    %v495 = vmul.f32 %v479, %v479
    %v496 = vsel %vm143, %v480, 0.0
    %497 = vadd.xlane.f32.xlu0 %v496
    %v498 = vpop.xlane.xlu0 %497
    %v499 = vsel %vm143, %v481, 0.0
    %500 = vadd.xlane.f32.xlu0 %v499
    %v501 = vpop.xlane.xlu0 %500
    %v502 = vsel %vm143, %v482, 0.0
    %503 = vadd.xlane.f32.xlu0 %v502
    %v504 = vpop.xlane.xlu0 %503
    %v505 = vsel %vm143, %v483, 0.0
    %506 = vadd.xlane.f32.xlu0 %v505
    %v507 = vpop.xlane.xlu0 %506
    %v508 = vsel %vm143, %v484, 0.0
    %509 = vadd.xlane.f32.xlu0 %v508
    %v510 = vpop.xlane.xlu0 %509
    %v511 = vsel %vm143, %v485, 0.0
    %512 = vadd.xlane.f32.xlu0 %v511
    %v513 = vpop.xlane.xlu0 %512
    %v514 = vsel %vm143, %v486, 0.0
    %515 = vadd.xlane.f32.xlu0 %v514
    %v516 = vpop.xlane.xlu0 %515
    %v517 = vsel %vm143, %v487, 0.0
    %518 = vadd.xlane.f32.xlu0 %v517
    %v519 = vpop.xlane.xlu0 %518
    %v520 = vsel %vm143, %v488, 0.0
    %521 = vadd.xlane.f32.xlu0 %v520
    %v522 = vpop.xlane.xlu0 %521
    %v523 = vsel %vm143, %v489, 0.0
    %524 = vadd.xlane.f32.xlu0 %v523
    %v525 = vpop.xlane.xlu0 %524
    %v526 = vsel %vm143, %v490, 0.0
    %527 = vadd.xlane.f32.xlu0 %v526
    %v528 = vpop.xlane.xlu0 %527
    %v529 = vsel %vm143, %v491, 0.0
    %530 = vadd.xlane.f32.xlu0 %v529
    %v531 = vpop.xlane.xlu0 %530
    %v532 = vsel %vm143, %v492, 0.0
    %533 = vadd.xlane.f32.xlu0 %v532
    %v534 = vpop.xlane.xlu0 %533
    %v535 = vsel %vm143, %v493, 0.0
    %536 = vadd.xlane.f32.xlu0 %v535
    %v537 = vpop.xlane.xlu0 %536
    %v538 = vsel %vm143, %v494, 0.0
    %539 = vadd.xlane.f32.xlu0 %v538
    %v540 = vpop.xlane.xlu0 %539
    %v541 = vsel %vm143, %v495, 0.0
    %542 = vadd.xlane.f32.xlu0 %v541
    %v543 = vpop.xlane.xlu0 %542
    %v544 = vmul.f32 %v498, %v192
    %v545 = vmul.f32 %v501, %v192
    %v546 = vmul.f32 %v504, %v192
    %v547 = vmul.f32 %v507, %v192
    %v548 = vmul.f32 %v510, %v192
    %v549 = vmul.f32 %v513, %v192
    %v550 = vmul.f32 %v516, %v192
    %v551 = vmul.f32 %v519, %v192
    %v552 = vmul.f32 %v522, %v192
    %v553 = vmul.f32 %v525, %v192
    %v554 = vmul.f32 %v528, %v192
    %v555 = vmul.f32 %v531, %v192
    %v556 = vmul.f32 %v534, %v192
    %v557 = vmul.f32 %v537, %v192
    %v558 = vmul.f32 %v540, %v192
    %v559 = vmul.f32 %v543, %v192
    %v560 = vadd.f32 %v544, 1e-05
    %v561 = vadd.f32 %v545, 1e-05
    %v562 = vadd.f32 %v546, 1e-05
    %v563 = vadd.f32 %v547, 1e-05
    %v564 = vadd.f32 %v548, 1e-05
    %v565 = vadd.f32 %v549, 1e-05
    %v566 = vadd.f32 %v550, 1e-05
    %v567 = vadd.f32 %v551, 1e-05
    %v568 = vadd.f32 %v552, 1e-05
    %v569 = vadd.f32 %v553, 1e-05
    %v570 = vadd.f32 %v554, 1e-05
    %v571 = vadd.f32 %v555, 1e-05
    %v572 = vadd.f32 %v556, 1e-05
    %v573 = vadd.f32 %v557, 1e-05
    %v574 = vadd.f32 %v558, 1e-05
    %v575 = vadd.f32 %v559, 1e-05
    %v576 = vrsqrt.pop %v560
    %v577 = vrsqrt.pop %v561
    %v578 = vrsqrt.pop %v562
    %v579 = vrsqrt.pop %v563
    %v580 = vrsqrt.pop %v564
    %v581 = vrsqrt.pop %v565
    %v582 = vrsqrt.pop %v566
    %v583 = vrsqrt.pop %v567
    %v584 = vrsqrt.pop %v568
    %v585 = vrsqrt.pop %v569
    %v586 = vrsqrt.pop %v570
    %v587 = vrsqrt.pop %v571
    %v588 = vrsqrt.pop %v572
    %v589 = vrsqrt.pop %v573
    %v590 = vrsqrt.pop %v574
    %v591 = vrsqrt.pop %v575
    %v592 = vmul.f32 %v464, %v576
    %v593 = vmul.f32 %v465, %v577
    %v594 = vmul.f32 %v466, %v578
    %v595 = vmul.f32 %v467, %v579
    %v596 = vmul.f32 %v468, %v580
    %v597 = vmul.f32 %v469, %v581
    %v598 = vmul.f32 %v470, %v582
    %v599 = vmul.f32 %v471, %v583
    %v600 = vmul.f32 %v472, %v584
    %v601 = vmul.f32 %v473, %v585
    %v602 = vmul.f32 %v474, %v586
    %v603 = vmul.f32 %v475, %v587
    %v604 = vmul.f32 %v476, %v588
    %v605 = vmul.f32 %v477, %v589
    %v606 = vmul.f32 %v478, %v590
    %v607 = vmul.f32 %v479, %v591
    %v608 = vpack.c.bf16 %v593, %v592
    %v609 = vpack.c.bf16 %v595, %v594
    %v610 = vpack.c.bf16 %v597, %v596
    %v611 = vpack.c.bf16 %v599, %v598
    %v612 = vpack.c.bf16 %v601, %v600
    %v613 = vpack.c.bf16 %v603, %v602
    %v614 = vpack.c.bf16 %v605, %v604
    %v615 = vpack.c.bf16 %v607, %v606
    %v616 = vld [vmem:[%s3] sm:$0xf]
    %v617 = vld [vmem:[%s3 + $0x4] sm:$0xf]
    %v618 = vld [vmem:[%s3 + $0x8] sm:$0xf]
    %v619 = vld [vmem:[%s3 + $0xc] sm:$0xf]
    %v620 = vld [vmem:[%s3 + $0x10] sm:$0xf]
    %v621 = vld [vmem:[%s3 + $0x14] sm:$0xf]
    %v622 = vld [vmem:[%s3 + $0x18] sm:$0xf]
    %v623 = vld [vmem:[%s3 + $0x1c] sm:$0xf]
    %v624 = vld [vmem:[%s4] sm:$0x1]
    %v626 = vlaneseq
    %v627 = vshrl.u32 %v626, 7
    %v628 = vsub.s32 0, %v627
    %v629 = vrot.slane %v624, %v628
    %v639 = vunpack.c.l.b16 %v616
    %v640 = vunpack.c.l.b16 %v617
    %v641 = vunpack.c.l.b16 %v618
    %v642 = vunpack.c.l.b16 %v619
    %v643 = vunpack.c.l.b16 %v620
    %v644 = vunpack.c.l.b16 %v621
    %v645 = vunpack.c.l.b16 %v622
    %v646 = vunpack.c.l.b16 %v623
    %v647 = vpack.c.b16 %v640, %v639
    %v648 = vpack.c.b16 %v642, %v641
    %v649 = vpack.c.b16 %v644, %v643
    %v650 = vpack.c.b16 %v646, %v645
    %v656 = vsel %vm143, %v608, 0
    %v659 = vsel %vm143, %v609, 0
    %v662 = vsel %vm143, %v610, 0
    %v665 = vsel %vm143, %v611, 0
    %v668 = vsel %vm143, %v612, 0
    %v671 = vsel %vm143, %v613, 0
    %v674 = vsel %vm143, %v614, 0
    %v677 = vsel %vm143, %v615, 0
    %679 = vmatprep.subr.bf16.mxu0 0
    %680 = vmatpush1.bf16.msra.mxu0 %v647
    %681 = vmatprep.subr.bf16.mxu0 0
    %682 = vmatpush1.bf16.msra.mxu0 %v648
    %683 = vmatprep.subr.bf16.mxu0 0
    %684 = vmatpush1.bf16.msra.mxu0 %v649
    %685 = vmatprep.subr.bf16.mxu0 0
    %686 = vmatpush1.bf16.msra.mxu0 %v650
    %687 = vmatprep.subr.bf16.mxu0 0
    %688 = vmatpush1.bf16.msra.mxu0 0
    %689 = vmatprep.subr.bf16.mxu0 0
    %690 = vmatpush1.bf16.msra.mxu0 0
    %691 = vmatprep.subr.bf16.mxu0 0
    %692 = vmatpush1.bf16.msra.mxu0 0
    %693 = vmatprep.subr.bf16.mxu0 0
    %694 = vmatpush1.bf16.msra.mxu0 0
    %695 = vmatprep.subr.bf16.mxu0 0
    %696 = vmatpush1.bf16.msra.mxu0 0
    %697 = vmatprep.subr.bf16.mxu0 0
    %698 = vmatpush1.bf16.msra.mxu0 0
    %699 = vmatprep.subr.bf16.mxu0 0
    %700 = vmatpush1.bf16.msra.mxu0 0
    %701 = vmatprep.subr.bf16.mxu0 0
    %702 = vmatpush1.bf16.msra.mxu0 0
    %703 = vmatprep.subr.bf16.mxu0 0
    %704 = vmatpush1.bf16.msra.mxu0 0
    %705 = vmatprep.subr.bf16.mxu0 0
    %706 = vmatpush1.bf16.msra.mxu0 0
    %707 = vmatprep.subr.bf16.mxu0 0
    %708 = vmatpush1.bf16.msra.mxu0 0
    %709 = vmatprep.subr.bf16.mxu0 0
    %710 = vmatpush1.bf16.msra.mxu0 0
    %711 = vmatprep.mubr.bf16.mxu0 0
    %712 = vmatmul.mubr.bf16.gmra.mrb[0].mxu0 %v656
    %v713 = vpop.f32.mrb[0].mxu0
    %v714 = vadd.f32 %v629, %v713
    %v715 = vpop.f32.mrb[0].mxu0
    %v716 = vpop.f32.mrb[0].mxu0
    %v717 = vadd.f32 %v629, %v716
    %v718 = vpop.f32.mrb[0].mxu0
    %719 = vmatprep.mubr.bf16.mxu0 0
    %720 = vmatmul.mubr.bf16.gmra.mrb[0].mxu0 %v659
    %v721 = vpop.f32.mrb[0].mxu0
    %v722 = vadd.f32 %v629, %v721
    %v723 = vpop.f32.mrb[0].mxu0
    %v724 = vpop.f32.mrb[0].mxu0
    %v725 = vadd.f32 %v629, %v724
    %v726 = vpop.f32.mrb[0].mxu0
    %727 = vmatprep.mubr.bf16.mxu0 0
    %728 = vmatmul.mubr.bf16.gmra.mrb[0].mxu0 %v662
    %v729 = vpop.f32.mrb[0].mxu0
    %v730 = vadd.f32 %v629, %v729
    %v731 = vpop.f32.mrb[0].mxu0
    %v732 = vpop.f32.mrb[0].mxu0
    %v733 = vadd.f32 %v629, %v732
    %v734 = vpop.f32.mrb[0].mxu0
    %735 = vmatprep.mubr.bf16.mxu0 0
    %736 = vmatmul.mubr.bf16.gmra.mrb[0].mxu0 %v665
    %v737 = vpop.f32.mrb[0].mxu0
    %v738 = vadd.f32 %v629, %v737
    %v739 = vpop.f32.mrb[0].mxu0
    %v740 = vpop.f32.mrb[0].mxu0
    %v741 = vadd.f32 %v629, %v740
    %v742 = vpop.f32.mrb[0].mxu0
    %743 = vmatprep.mubr.bf16.mxu0 0
    %744 = vmatmul.mubr.bf16.gmra.mrb[0].mxu0 %v668
    %v745 = vpop.f32.mrb[0].mxu0
    %v746 = vadd.f32 %v629, %v745
    %v747 = vpop.f32.mrb[0].mxu0
    %v748 = vpop.f32.mrb[0].mxu0
    %v749 = vadd.f32 %v629, %v748
    %v750 = vpop.f32.mrb[0].mxu0
    %751 = vmatprep.mubr.bf16.mxu0 0
    %752 = vmatmul.mubr.bf16.gmra.mrb[0].mxu0 %v671
    %v753 = vpop.f32.mrb[0].mxu0
    %v754 = vadd.f32 %v629, %v753
    %v755 = vpop.f32.mrb[0].mxu0
    %v756 = vpop.f32.mrb[0].mxu0
    %v757 = vadd.f32 %v629, %v756
    %v758 = vpop.f32.mrb[0].mxu0
    %759 = vmatprep.mubr.bf16.mxu0 0
    %760 = vmatmul.mubr.bf16.gmra.mrb[0].mxu0 %v674
    %v761 = vpop.f32.mrb[0].mxu0
    %v762 = vadd.f32 %v629, %v761
    %v763 = vpop.f32.mrb[0].mxu0
    %v764 = vpop.f32.mrb[0].mxu0
    %v765 = vadd.f32 %v629, %v764
    %v766 = vpop.f32.mrb[0].mxu0
    %767 = vmatprep.mubr.bf16.mxu0 0
    %768 = vmatmul.mubr.bf16.gmra.mrb[0].mxu0 %v677
    %v769 = vpop.f32.mrb[0].mxu0
    %v770 = vadd.f32 %v629, %v769
    %v771 = vpop.f32.mrb[0].mxu0
    %v772 = vpop.f32.mrb[0].mxu0
    %v773 = vadd.f32 %v629, %v772
    %v774 = vpop.f32.mrb[0].mxu0
    %775 = vdwg.mxu0
    %v776 = vld [vmem:[#allocation5] sm:$0xf]
    %v777 = vld [vmem:[#allocation5 + $0x4] sm:$0xf]
    %v778 = vld [vmem:[#allocation5 + $0x8] sm:$0xf]
    %v779 = vld [vmem:[#allocation5 + $0xc] sm:$0xf]
    %v780 = vld [vmem:[#allocation5 + $0x10] sm:$0xf]
    %v781 = vld [vmem:[#allocation5 + $0x14] sm:$0xf]
    %v782 = vld [vmem:[#allocation5 + $0x18] sm:$0xf]
    %v783 = vld [vmem:[#allocation5 + $0x1c] sm:$0xf]
    %v784 = vld [vmem:[#allocation7] sm:$0x1]
    %v786 = vlaneseq
    %v787 = vshrl.u32 %v786, 7
    %v788 = vsub.s32 0, %v787
    %v789 = vrot.slane %v784, %v788
    %v799 = vunpack.c.l.b16 %v776
    %v800 = vunpack.c.l.b16 %v777
    %v801 = vunpack.c.l.b16 %v778
    %v802 = vunpack.c.l.b16 %v779
    %v803 = vunpack.c.l.b16 %v780
    %v804 = vunpack.c.l.b16 %v781
    %v805 = vunpack.c.l.b16 %v782
    %v806 = vunpack.c.l.b16 %v783
    %v807 = vpack.c.b16 %v800, %v799
    %v808 = vpack.c.b16 %v802, %v801
    %v809 = vpack.c.b16 %v804, %v803
    %v810 = vpack.c.b16 %v806, %v805
    %815 = vmatprep.subr.bf16.mxu0 0
    %816 = vmatpush1.bf16.msra.mxu0 %v807
    %817 = vmatprep.subr.bf16.mxu0 0
    %818 = vmatpush1.bf16.msra.mxu0 %v808
    %819 = vmatprep.subr.bf16.mxu0 0
    %820 = vmatpush1.bf16.msra.mxu0 %v809
    %821 = vmatprep.subr.bf16.mxu0 0
    %822 = vmatpush1.bf16.msra.mxu0 %v810
    %823 = vmatprep.subr.bf16.mxu0 0
    %824 = vmatpush1.bf16.msra.mxu0 0
    %825 = vmatprep.subr.bf16.mxu0 0
    %826 = vmatpush1.bf16.msra.mxu0 0
    %827 = vmatprep.subr.bf16.mxu0 0
    %828 = vmatpush1.bf16.msra.mxu0 0
    %829 = vmatprep.subr.bf16.mxu0 0
    %830 = vmatpush1.bf16.msra.mxu0 0
    %831 = vmatprep.subr.bf16.mxu0 0
    %832 = vmatpush1.bf16.msra.mxu0 0
    %833 = vmatprep.subr.bf16.mxu0 0
    %834 = vmatpush1.bf16.msra.mxu0 0
    %835 = vmatprep.subr.bf16.mxu0 0
    %836 = vmatpush1.bf16.msra.mxu0 0
    %837 = vmatprep.subr.bf16.mxu0 0
    %838 = vmatpush1.bf16.msra.mxu0 0
    %839 = vmatprep.subr.bf16.mxu0 0
    %840 = vmatpush1.bf16.msra.mxu0 0
    %841 = vmatprep.subr.bf16.mxu0 0
    %842 = vmatpush1.bf16.msra.mxu0 0
    %843 = vmatprep.subr.bf16.mxu0 0
    %844 = vmatpush1.bf16.msra.mxu0 0
    %845 = vmatprep.subr.bf16.mxu0 0
    %846 = vmatpush1.bf16.msra.mxu0 0
    %847 = vmatprep.mubr.bf16.mxu0 0
    %848 = vmatmul.mubr.bf16.gmra.mrb[0].mxu0 %v656
    %v849 = vpop.f32.mrb[0].mxu0
    %v850 = vadd.f32 %v789, %v849
    %v851 = vpop.f32.mrb[0].mxu0
    %v852 = vpop.f32.mrb[0].mxu0
    %v853 = vadd.f32 %v789, %v852
    %v854 = vpop.f32.mrb[0].mxu0
    %855 = vmatprep.mubr.bf16.mxu0 0
    %856 = vmatmul.mubr.bf16.gmra.mrb[0].mxu0 %v659
    %v857 = vpop.f32.mrb[0].mxu0
    %v858 = vadd.f32 %v789, %v857
    %v859 = vpop.f32.mrb[0].mxu0
    %v860 = vpop.f32.mrb[0].mxu0
    %v861 = vadd.f32 %v789, %v860
    %v862 = vpop.f32.mrb[0].mxu0
    %863 = vmatprep.mubr.bf16.mxu0 0
    %864 = vmatmul.mubr.bf16.gmra.mrb[0].mxu0 %v662
    %v865 = vpop.f32.mrb[0].mxu0
    %v866 = vadd.f32 %v789, %v865
    %v867 = vpop.f32.mrb[0].mxu0
    %v868 = vpop.f32.mrb[0].mxu0
    %v869 = vadd.f32 %v789, %v868
    %v870 = vpop.f32.mrb[0].mxu0
    %871 = vmatprep.mubr.bf16.mxu0 0
    %872 = vmatmul.mubr.bf16.gmra.mrb[0].mxu0 %v665
    %v873 = vpop.f32.mrb[0].mxu0
    %v874 = vadd.f32 %v789, %v873
    %v875 = vpop.f32.mrb[0].mxu0
    %v876 = vpop.f32.mrb[0].mxu0
    %v877 = vadd.f32 %v789, %v876
    %v878 = vpop.f32.mrb[0].mxu0
    %879 = vmatprep.mubr.bf16.mxu0 0
    %880 = vmatmul.mubr.bf16.gmra.mrb[0].mxu0 %v668
    %v881 = vpop.f32.mrb[0].mxu0
    %v882 = vadd.f32 %v789, %v881
    %v883 = vpop.f32.mrb[0].mxu0
    %v884 = vpop.f32.mrb[0].mxu0
    %v885 = vadd.f32 %v789, %v884
    %v886 = vpop.f32.mrb[0].mxu0
    %887 = vmatprep.mubr.bf16.mxu0 0
    %888 = vmatmul.mubr.bf16.gmra.mrb[0].mxu0 %v671
    %v889 = vpop.f32.mrb[0].mxu0
    %v890 = vadd.f32 %v789, %v889
    %v891 = vpop.f32.mrb[0].mxu0
    %v892 = vpop.f32.mrb[0].mxu0
    %v893 = vadd.f32 %v789, %v892
    %v894 = vpop.f32.mrb[0].mxu0
    %895 = vmatprep.mubr.bf16.mxu0 0
    %896 = vmatmul.mubr.bf16.gmra.mrb[0].mxu0 %v674
    %v897 = vpop.f32.mrb[0].mxu0
    %v898 = vadd.f32 %v789, %v897
    %v899 = vpop.f32.mrb[0].mxu0
    %v900 = vpop.f32.mrb[0].mxu0
    %v901 = vadd.f32 %v789, %v900
    %v902 = vpop.f32.mrb[0].mxu0
    %903 = vmatprep.mubr.bf16.mxu0 0
    %904 = vmatmul.mubr.bf16.gmra.mrb[0].mxu0 %v677
    %v905 = vpop.f32.mrb[0].mxu0
    %v906 = vadd.f32 %v789, %v905
    %v907 = vpop.f32.mrb[0].mxu0
    %v908 = vpop.f32.mrb[0].mxu0
    %v909 = vadd.f32 %v789, %v908
    %v910 = vpop.f32.mrb[0].mxu0
    %911 = vdwg.mxu0
    %v912 = vmul.f32 %v714, %v714
    %v913 = vmul.f32 %v717, %v717
    %v914 = vmul.f32 %v722, %v722
    %v915 = vmul.f32 %v725, %v725
    %v916 = vmul.f32 %v730, %v730
    %v917 = vmul.f32 %v733, %v733
    %v918 = vmul.f32 %v738, %v738
    %v919 = vmul.f32 %v741, %v741
    %v920 = vmul.f32 %v746, %v746
    %v921 = vmul.f32 %v749, %v749
    %v922 = vmul.f32 %v754, %v754
    %v923 = vmul.f32 %v757, %v757
    %v924 = vmul.f32 %v762, %v762
    %v925 = vmul.f32 %v765, %v765
    %v926 = vmul.f32 %v770, %v770
    %v927 = vmul.f32 %v773, %v773
    %v928 = vsel %vm143, %v912, 0.0
    %929 = vadd.xlane.f32.xlu0 %v928
    %v930 = vpop.xlane.xlu0 %929
    %v931 = vsel %vm143, %v913, 0.0
    %932 = vadd.xlane.f32.xlu0 %v931
    %v933 = vpop.xlane.xlu0 %932
    %v934 = vsel %vm143, %v914, 0.0
    %935 = vadd.xlane.f32.xlu0 %v934
    %v936 = vpop.xlane.xlu0 %935
    %v937 = vsel %vm143, %v915, 0.0
    %938 = vadd.xlane.f32.xlu0 %v937
    %v939 = vpop.xlane.xlu0 %938
    %v940 = vsel %vm143, %v916, 0.0
    %941 = vadd.xlane.f32.xlu0 %v940
    %v942 = vpop.xlane.xlu0 %941
    %v943 = vsel %vm143, %v917, 0.0
    %944 = vadd.xlane.f32.xlu0 %v943
    %v945 = vpop.xlane.xlu0 %944
    %v946 = vsel %vm143, %v918, 0.0
    %947 = vadd.xlane.f32.xlu0 %v946
    %v948 = vpop.xlane.xlu0 %947
    %v949 = vsel %vm143, %v919, 0.0
    %950 = vadd.xlane.f32.xlu0 %v949
    %v951 = vpop.xlane.xlu0 %950
    %v952 = vsel %vm143, %v920, 0.0
    %953 = vadd.xlane.f32.xlu0 %v952
    %v954 = vpop.xlane.xlu0 %953
    %v955 = vsel %vm143, %v921, 0.0
    %956 = vadd.xlane.f32.xlu0 %v955
    %v957 = vpop.xlane.xlu0 %956
    %v958 = vsel %vm143, %v922, 0.0
    %959 = vadd.xlane.f32.xlu0 %v958
    %v960 = vpop.xlane.xlu0 %959
    %v961 = vsel %vm143, %v923, 0.0
    %962 = vadd.xlane.f32.xlu0 %v961
    %v963 = vpop.xlane.xlu0 %962
    %v964 = vsel %vm143, %v924, 0.0
    %965 = vadd.xlane.f32.xlu0 %v964
    %v966 = vpop.xlane.xlu0 %965
    %v967 = vsel %vm143, %v925, 0.0
    %968 = vadd.xlane.f32.xlu0 %v967
    %v969 = vpop.xlane.xlu0 %968
    %v970 = vsel %vm143, %v926, 0.0
    %971 = vadd.xlane.f32.xlu0 %v970
    %v972 = vpop.xlane.xlu0 %971
    %v973 = vsel %vm143, %v927, 0.0
    %974 = vadd.xlane.f32.xlu0 %v973
    %v975 = vpop.xlane.xlu0 %974
    %v976 = vmul.f32 %v930, 0.5
    %v977 = vmul.f32 %v933, 0.5
    %v978 = vmul.f32 %v936, 0.5
    %v979 = vmul.f32 %v939, 0.5
    %v980 = vmul.f32 %v942, 0.5
    %v981 = vmul.f32 %v945, 0.5
    %v982 = vmul.f32 %v948, 0.5
    %v983 = vmul.f32 %v951, 0.5
    %v984 = vmul.f32 %v954, 0.5
    %v985 = vmul.f32 %v957, 0.5
    %v986 = vmul.f32 %v960, 0.5
    %v987 = vmul.f32 %v963, 0.5
    %v988 = vmul.f32 %v966, 0.5
    %v989 = vmul.f32 %v969, 0.5
    %v990 = vmul.f32 %v972, 0.5
    %v991 = vmul.f32 %v975, 0.5
    %992 = vadd.xlane.f32.xlu0 %v912
    %v993 = vpop.xlane.xlu0 %992
    %994 = vadd.xlane.f32.xlu0 %v913
    %v995 = vpop.xlane.xlu0 %994
    %996 = vadd.xlane.f32.xlu0 %v914
    %v997 = vpop.xlane.xlu0 %996
    %998 = vadd.xlane.f32.xlu0 %v915
    %v999 = vpop.xlane.xlu0 %998
    %1000 = vadd.xlane.f32.xlu0 %v916
    %v1001 = vpop.xlane.xlu0 %1000
    %1002 = vadd.xlane.f32.xlu0 %v917
    %v1003 = vpop.xlane.xlu0 %1002
    %1004 = vadd.xlane.f32.xlu0 %v918
    %v1005 = vpop.xlane.xlu0 %1004
    %1006 = vadd.xlane.f32.xlu0 %v919
    %v1007 = vpop.xlane.xlu0 %1006
    %1008 = vadd.xlane.f32.xlu0 %v920
    %v1009 = vpop.xlane.xlu0 %1008
    %1010 = vadd.xlane.f32.xlu0 %v921
    %v1011 = vpop.xlane.xlu0 %1010
    %1012 = vadd.xlane.f32.xlu0 %v922
    %v1013 = vpop.xlane.xlu0 %1012
    %1014 = vadd.xlane.f32.xlu0 %v923
    %v1015 = vpop.xlane.xlu0 %1014
    %1016 = vadd.xlane.f32.xlu0 %v924
    %v1017 = vpop.xlane.xlu0 %1016
    %1018 = vadd.xlane.f32.xlu0 %v925
    %v1019 = vpop.xlane.xlu0 %1018
    %1020 = vadd.xlane.f32.xlu0 %v926
    %v1021 = vpop.xlane.xlu0 %1020
    %1022 = vadd.xlane.f32.xlu0 %v927
    %v1023 = vpop.xlane.xlu0 %1022
    %v1024 = vmul.f32 %v993, 0.5
    %v1025 = vmul.f32 %v995, 0.5
    %v1026 = vmul.f32 %v997, 0.5
    %v1027 = vmul.f32 %v999, 0.5
    %v1028 = vmul.f32 %v1001, 0.5
    %v1029 = vmul.f32 %v1003, 0.5
    %v1030 = vmul.f32 %v1005, 0.5
    %v1031 = vmul.f32 %v1007, 0.5
    %v1032 = vmul.f32 %v1009, 0.5
    %v1033 = vmul.f32 %v1011, 0.5
    %v1034 = vmul.f32 %v1013, 0.5
    %v1035 = vmul.f32 %v1015, 0.5
    %v1036 = vmul.f32 %v1017, 0.5
    %v1037 = vmul.f32 %v1019, 0.5
    %v1038 = vmul.f32 %v1021, 0.5
    %v1039 = vmul.f32 %v1023, 0.5
    %v1040 = vsub.f32 %v1024, %v976
    %v1041 = vsub.f32 %v1025, %v977
    %v1042 = vsub.f32 %v1026, %v978
    %v1043 = vsub.f32 %v1027, %v979
    %v1044 = vsub.f32 %v1028, %v980
    %v1045 = vsub.f32 %v1029, %v981
    %v1046 = vsub.f32 %v1030, %v982
    %v1047 = vsub.f32 %v1031, %v983
    %v1048 = vsub.f32 %v1032, %v984
    %v1049 = vsub.f32 %v1033, %v985
    %v1050 = vsub.f32 %v1034, %v986
    %v1051 = vsub.f32 %v1035, %v987
    %v1052 = vsub.f32 %v1036, %v988
    %v1053 = vsub.f32 %v1037, %v989
    %v1054 = vsub.f32 %v1038, %v990
    %v1055 = vsub.f32 %v1039, %v991
    %v1056 = vpack.c.bf16 %v717, %v714
    %v1057 = vpack.c.bf16 %v725, %v722
    %v1058 = vpack.c.bf16 %v733, %v730
    %v1059 = vpack.c.bf16 %v741, %v738
    %v1060 = vpack.c.bf16 %v749, %v746
    %v1061 = vpack.c.bf16 %v757, %v754
    %v1062 = vpack.c.bf16 %v765, %v762
    %v1063 = vpack.c.bf16 %v773, %v770
    %v1064 = vld [vmem:[%s7] sm:$0xf]
    %v1065 = vld [vmem:[%s7 + $0x4] sm:$0xf]
    %v1066 = vld [vmem:[%s7 + $0x8] sm:$0xf]
    %v1067 = vld [vmem:[%s7 + $0xc] sm:$0xf]
    %v1068 = vld [vmem:[%s7 + $0x10] sm:$0xf]
    %v1069 = vld [vmem:[%s7 + $0x14] sm:$0xf]
    %v1070 = vld [vmem:[%s7 + $0x18] sm:$0xf]
    %v1071 = vld [vmem:[%s7 + $0x1c] sm:$0xf]
    %v1072 = vld [vmem:[%s7 + $0x20] sm:$0xf]
    %v1073 = vld [vmem:[%s7 + $0x24] sm:$0xf]
    %v1074 = vld [vmem:[%s7 + $0x28] sm:$0xf]
    %v1075 = vld [vmem:[%s7 + $0x2c] sm:$0xf]
    %v1076 = vld [vmem:[%s7 + $0x30] sm:$0xf]
    %v1077 = vld [vmem:[%s7 + $0x34] sm:$0xf]
    %v1078 = vld [vmem:[%s7 + $0x38] sm:$0xf]
    %v1079 = vld [vmem:[%s7 + $0x3c] sm:$0xf]
    %v1096 = vunpack.c.l.b16 %v1064
    %v1097 = vunpack.c.l.b16 %v1065
    %v1098 = vunpack.c.l.b16 %v1066
    %v1099 = vunpack.c.l.b16 %v1067
    %v1100 = vunpack.c.l.b16 %v1068
    %v1101 = vunpack.c.l.b16 %v1069
    %v1102 = vunpack.c.l.b16 %v1070
    %v1103 = vunpack.c.l.b16 %v1071
    %v1104 = vunpack.c.l.b16 %v1072
    %v1105 = vunpack.c.l.b16 %v1073
    %v1106 = vunpack.c.l.b16 %v1074
    %v1107 = vunpack.c.l.b16 %v1075
    %v1108 = vunpack.c.l.b16 %v1076
    %v1109 = vunpack.c.l.b16 %v1077
    %v1110 = vunpack.c.l.b16 %v1078
    %v1111 = vunpack.c.l.b16 %v1079
    %v1112 = vpack.c.b16 %v1097, %v1096
    %v1113 = vpack.c.b16 %v1099, %v1098
    %v1114 = vpack.c.b16 %v1101, %v1100
    %v1115 = vpack.c.b16 %v1103, %v1102
    %v1116 = vpack.c.b16 %v1105, %v1104
    %v1117 = vpack.c.b16 %v1107, %v1106
    %v1118 = vpack.c.b16 %v1109, %v1108
    %v1119 = vpack.c.b16 %v1111, %v1110
    %1128 = vmatprep.subr.bf16.mxu0 0
    %1129 = vmatpush1.bf16.msra.mxu0 %v1112
    %1130 = vmatprep.subr.bf16.mxu0 0
    %1131 = vmatpush1.bf16.msra.mxu0 %v1113
    %1132 = vmatprep.subr.bf16.mxu0 0
    %1133 = vmatpush1.bf16.msra.mxu0 %v1114
    %1134 = vmatprep.subr.bf16.mxu0 0
    %1135 = vmatpush1.bf16.msra.mxu0 %v1115
    %1136 = vmatprep.subr.bf16.mxu0 0
    %1137 = vmatpush1.bf16.msra.mxu0 %v1116
    %1138 = vmatprep.subr.bf16.mxu0 0
    %1139 = vmatpush1.bf16.msra.mxu0 %v1117
    %1140 = vmatprep.subr.bf16.mxu0 0
    %1141 = vmatpush1.bf16.msra.mxu0 %v1118
    %1142 = vmatprep.subr.bf16.mxu0 0
    %1143 = vmatpush1.bf16.msra.mxu0 %v1119
    %1144 = vmatprep.subr.bf16.mxu0 0
    %1145 = vmatpush1.bf16.msra.mxu0 0
    %1146 = vmatprep.subr.bf16.mxu0 0
    %1147 = vmatpush1.bf16.msra.mxu0 0
    %1148 = vmatprep.subr.bf16.mxu0 0
    %1149 = vmatpush1.bf16.msra.mxu0 0
    %1150 = vmatprep.subr.bf16.mxu0 0
    %1151 = vmatpush1.bf16.msra.mxu0 0
    %1152 = vmatprep.subr.bf16.mxu0 0
    %1153 = vmatpush1.bf16.msra.mxu0 0
    %1154 = vmatprep.subr.bf16.mxu0 0
    %1155 = vmatpush1.bf16.msra.mxu0 0
    %1156 = vmatprep.subr.bf16.mxu0 0
    %1157 = vmatpush1.bf16.msra.mxu0 0
    %1158 = vmatprep.subr.bf16.mxu0 0
    %1159 = vmatpush1.bf16.msra.mxu0 0
    %1160 = vmatprep.mubr.bf16.mxu0 0
    %1161 = vmatmul.mubr.bf16.gmra.mrb[0].mxu0 %v1056
    %v1162 = vpop.f32.mrb[0].mxu0
    %v1163 = vadd.f32 0.0, %v1162
    %v1164 = vpop.f32.mrb[0].mxu0
    %v1165 = vpop.f32.mrb[0].mxu0
    %v1166 = vadd.f32 0.0, %v1165
    %v1167 = vpop.f32.mrb[0].mxu0
    %1168 = vmatprep.mubr.bf16.mxu0 0
    %1169 = vmatmul.mubr.bf16.gmra.mrb[0].mxu0 %v1057
    %v1170 = vpop.f32.mrb[0].mxu0
    %v1171 = vadd.f32 0.0, %v1170
    %v1172 = vpop.f32.mrb[0].mxu0
    %v1173 = vpop.f32.mrb[0].mxu0
    %v1174 = vadd.f32 0.0, %v1173
    %v1175 = vpop.f32.mrb[0].mxu0
    %1176 = vmatprep.mubr.bf16.mxu0 0
    %1177 = vmatmul.mubr.bf16.gmra.mrb[0].mxu0 %v1058
    %v1178 = vpop.f32.mrb[0].mxu0
    %v1179 = vadd.f32 0.0, %v1178
    %v1180 = vpop.f32.mrb[0].mxu0
    %v1181 = vpop.f32.mrb[0].mxu0
    %v1182 = vadd.f32 0.0, %v1181
    %v1183 = vpop.f32.mrb[0].mxu0
    %1184 = vmatprep.mubr.bf16.mxu0 0
    %1185 = vmatmul.mubr.bf16.gmra.mrb[0].mxu0 %v1059
    %v1186 = vpop.f32.mrb[0].mxu0
    %v1187 = vadd.f32 0.0, %v1186
    %v1188 = vpop.f32.mrb[0].mxu0
    %v1189 = vpop.f32.mrb[0].mxu0
    %v1190 = vadd.f32 0.0, %v1189
    %v1191 = vpop.f32.mrb[0].mxu0
    %1192 = vmatprep.mubr.bf16.mxu0 0
    %1193 = vmatmul.mubr.bf16.gmra.mrb[0].mxu0 %v1060
    %v1194 = vpop.f32.mrb[0].mxu0
    %v1195 = vadd.f32 0.0, %v1194
    %v1196 = vpop.f32.mrb[0].mxu0
    %v1197 = vpop.f32.mrb[0].mxu0
    %v1198 = vadd.f32 0.0, %v1197
    %v1199 = vpop.f32.mrb[0].mxu0
    %1200 = vmatprep.mubr.bf16.mxu0 0
    %1201 = vmatmul.mubr.bf16.gmra.mrb[0].mxu0 %v1061
    %v1202 = vpop.f32.mrb[0].mxu0
    %v1203 = vadd.f32 0.0, %v1202
    %v1204 = vpop.f32.mrb[0].mxu0
    %v1205 = vpop.f32.mrb[0].mxu0
    %v1206 = vadd.f32 0.0, %v1205
    %v1207 = vpop.f32.mrb[0].mxu0
    %1208 = vmatprep.mubr.bf16.mxu0 0
    %1209 = vmatmul.mubr.bf16.gmra.mrb[0].mxu0 %v1062
    %v1210 = vpop.f32.mrb[0].mxu0
    %v1211 = vadd.f32 0.0, %v1210
    %v1212 = vpop.f32.mrb[0].mxu0
    %v1213 = vpop.f32.mrb[0].mxu0
    %v1214 = vadd.f32 0.0, %v1213
    %v1215 = vpop.f32.mrb[0].mxu0
    %1216 = vmatprep.mubr.bf16.mxu0 0
    %1217 = vmatmul.mubr.bf16.gmra.mrb[0].mxu0 %v1063
    %v1218 = vpop.f32.mrb[0].mxu0
    %v1219 = vadd.f32 0.0, %v1218
    %v1220 = vpop.f32.mrb[0].mxu0
    %v1221 = vpop.f32.mrb[0].mxu0
    %v1222 = vadd.f32 0.0, %v1221
    %v1223 = vpop.f32.mrb[0].mxu0
    %1224 = vdwg.mxu0
    %v1225 = vsub.f32 %v1163, %v976
    %v1226 = vsub.f32 %v1166, %v977
    %v1227 = vsub.f32 %v1171, %v978
    %v1228 = vsub.f32 %v1174, %v979
    %v1229 = vsub.f32 %v1179, %v980
    %v1230 = vsub.f32 %v1182, %v981
    %v1231 = vsub.f32 %v1187, %v982
    %v1232 = vsub.f32 %v1190, %v983
    %v1233 = vsub.f32 %v1195, %v984
    %v1234 = vsub.f32 %v1198, %v985
    %v1235 = vsub.f32 %v1203, %v986
    %v1236 = vsub.f32 %v1206, %v987
    %v1237 = vsub.f32 %v1211, %v988
    %v1238 = vsub.f32 %v1214, %v989
    %v1239 = vsub.f32 %v1219, %v990
    %v1240 = vsub.f32 %v1222, %v991
    %v1241 = vmul.f32 %v1225, 1.442695
    %v1242 = vpow.pop %v1241
    %v1243 = vmul.f32 %v1226, 1.442695
    %v1244 = vpow.pop %v1243
    %v1245 = vmul.f32 %v1227, 1.442695
    %v1246 = vpow.pop %v1245
    %v1247 = vmul.f32 %v1228, 1.442695
    %v1248 = vpow.pop %v1247
    %v1249 = vmul.f32 %v1229, 1.442695
    %v1250 = vpow.pop %v1249
    %v1251 = vmul.f32 %v1230, 1.442695
    %v1252 = vpow.pop %v1251
    %v1253 = vmul.f32 %v1231, 1.442695
    %v1254 = vpow.pop %v1253
    %v1255 = vmul.f32 %v1232, 1.442695
    %v1256 = vpow.pop %v1255
    %v1257 = vmul.f32 %v1233, 1.442695
    %v1258 = vpow.pop %v1257
    %v1259 = vmul.f32 %v1234, 1.442695
    %v1260 = vpow.pop %v1259
    %v1261 = vmul.f32 %v1235, 1.442695
    %v1262 = vpow.pop %v1261
    %v1263 = vmul.f32 %v1236, 1.442695
    %v1264 = vpow.pop %v1263
    %v1265 = vmul.f32 %v1237, 1.442695
    %v1266 = vpow.pop %v1265
    %v1267 = vmul.f32 %v1238, 1.442695
    %v1268 = vpow.pop %v1267
    %v1269 = vmul.f32 %v1239, 1.442695
    %v1270 = vpow.pop %v1269
    %v1271 = vmul.f32 %v1240, 1.442695
    %v1272 = vpow.pop %v1271
    %v1273 = vmul.f32 %v1242, 0.17677669
    %v1274 = vmul.f32 %v1244, 0.17677669
    %v1275 = vmul.f32 %v1246, 0.17677669
    %v1276 = vmul.f32 %v1248, 0.17677669
    %v1277 = vmul.f32 %v1250, 0.17677669
    %v1278 = vmul.f32 %v1252, 0.17677669
    %v1279 = vmul.f32 %v1254, 0.17677669
    %v1280 = vmul.f32 %v1256, 0.17677669
    %v1281 = vmul.f32 %v1258, 0.17677669
    %v1282 = vmul.f32 %v1260, 0.17677669
    %v1283 = vmul.f32 %v1262, 0.17677669
    %v1284 = vmul.f32 %v1264, 0.17677669
    %v1285 = vmul.f32 %v1266, 0.17677669
    %v1286 = vmul.f32 %v1268, 0.17677669
    %v1287 = vmul.f32 %v1270, 0.17677669
    %v1288 = vmul.f32 %v1272, 0.17677669
    %v1289 = vsub.f32 %v1163, %v1040
    %v1290 = vsub.f32 %v1166, %v1041
    %v1291 = vsub.f32 %v1171, %v1042
    %v1292 = vsub.f32 %v1174, %v1043
    %v1293 = vsub.f32 %v1179, %v1044
    %v1294 = vsub.f32 %v1182, %v1045
    %v1295 = vsub.f32 %v1187, %v1046
    %v1296 = vsub.f32 %v1190, %v1047
    %v1297 = vsub.f32 %v1195, %v1048
    %v1298 = vsub.f32 %v1198, %v1049
    %v1299 = vsub.f32 %v1203, %v1050
    %v1300 = vsub.f32 %v1206, %v1051
    %v1301 = vsub.f32 %v1211, %v1052
    %v1302 = vsub.f32 %v1214, %v1053
    %v1303 = vsub.f32 %v1219, %v1054
    %v1304 = vsub.f32 %v1222, %v1055
    %v1305 = vmul.f32 %v1289, 1.442695
    %v1306 = vpow.pop %v1305
    %v1307 = vmul.f32 %v1290, 1.442695
    %v1308 = vpow.pop %v1307
    %v1309 = vmul.f32 %v1291, 1.442695
    %v1310 = vpow.pop %v1309
    %v1311 = vmul.f32 %v1292, 1.442695
    %v1312 = vpow.pop %v1311
    %v1313 = vmul.f32 %v1293, 1.442695
    %v1314 = vpow.pop %v1313
    %v1315 = vmul.f32 %v1294, 1.442695
    %v1316 = vpow.pop %v1315
    %v1317 = vmul.f32 %v1295, 1.442695
    %v1318 = vpow.pop %v1317
    %v1319 = vmul.f32 %v1296, 1.442695
    %v1320 = vpow.pop %v1319
    %v1321 = vmul.f32 %v1297, 1.442695
    %v1322 = vpow.pop %v1321
    %v1323 = vmul.f32 %v1298, 1.442695
    %v1324 = vpow.pop %v1323
    %v1325 = vmul.f32 %v1299, 1.442695
    %v1326 = vpow.pop %v1325
    %v1327 = vmul.f32 %v1300, 1.442695
    %v1328 = vpow.pop %v1327
    %v1329 = vmul.f32 %v1301, 1.442695
    %v1330 = vpow.pop %v1329
    %v1331 = vmul.f32 %v1302, 1.442695
    %v1332 = vpow.pop %v1331
    %v1333 = vmul.f32 %v1303, 1.442695
    %v1334 = vpow.pop %v1333
    %v1335 = vmul.f32 %v1304, 1.442695
    %v1336 = vpow.pop %v1335
    %v1337 = vmul.f32 %v1306, 0.17677669
    %v1338 = vmul.f32 %v1308, 0.17677669
    %v1339 = vmul.f32 %v1310, 0.17677669
    %v1340 = vmul.f32 %v1312, 0.17677669
    %v1341 = vmul.f32 %v1314, 0.17677669
    %v1342 = vmul.f32 %v1316, 0.17677669
    %v1343 = vmul.f32 %v1318, 0.17677669
    %v1344 = vmul.f32 %v1320, 0.17677669
    %v1345 = vmul.f32 %v1322, 0.17677669
    %v1346 = vmul.f32 %v1324, 0.17677669
    %v1347 = vmul.f32 %v1326, 0.17677669
    %v1348 = vmul.f32 %v1328, 0.17677669
    %v1349 = vmul.f32 %v1330, 0.17677669
    %v1350 = vmul.f32 %v1332, 0.17677669
    %v1351 = vmul.f32 %v1334, 0.17677669
    %v1352 = vmul.f32 %v1336, 0.17677669
    %vm1353 = vcmask 261120
    %v1354 = vsel %vm1353, %v1273, 0.0
    %v1355 = vsel %vm1353, %v1274, 0.0
    %v1356 = vadd.f32 %v1354, %v1355
    %v1357 = vsel %vm1353, %v1275, 0.0
    %v1358 = vadd.f32 %v1356, %v1357
    %v1359 = vsel %vm1353, %v1276, 0.0
    %v1360 = vadd.f32 %v1358, %v1359
    %v1361 = vsel %vm1353, %v1277, 0.0
    %v1362 = vadd.f32 %v1360, %v1361
    %v1363 = vsel %vm1353, %v1278, 0.0
    %v1364 = vadd.f32 %v1362, %v1363
    %v1365 = vsel %vm1353, %v1279, 0.0
    %v1366 = vadd.f32 %v1364, %v1365
    %v1367 = vsel %vm1353, %v1280, 0.0
    %v1368 = vadd.f32 %v1366, %v1367
    %v1369 = vrot.slane %v1368, 4
    %v1370 = vadd.f32 %v1368, %v1369
    %v1371 = vrot.slane %v1370, 2
    %v1372 = vadd.f32 %v1370, %v1371
    %v1373 = vrot.slane %v1372, 1
    %v1374 = vadd.f32 %v1372, %v1373
    %v1375 = vsel %vm1353, %v1281, 0.0
    %v1376 = vsel %vm1353, %v1282, 0.0
    %v1377 = vadd.f32 %v1375, %v1376
    %v1378 = vsel %vm1353, %v1283, 0.0
    %v1379 = vadd.f32 %v1377, %v1378
    %v1380 = vsel %vm1353, %v1284, 0.0
    %v1381 = vadd.f32 %v1379, %v1380
    %v1382 = vsel %vm1353, %v1285, 0.0
    %v1383 = vadd.f32 %v1381, %v1382
    %v1384 = vsel %vm1353, %v1286, 0.0
    %v1385 = vadd.f32 %v1383, %v1384
    %v1386 = vsel %vm1353, %v1287, 0.0
    %v1387 = vadd.f32 %v1385, %v1386
    %v1388 = vsel %vm1353, %v1288, 0.0
    %v1389 = vadd.f32 %v1387, %v1388
    %v1390 = vrot.slane %v1389, 4
    %v1391 = vadd.f32 %v1389, %v1390
    %v1392 = vrot.slane %v1391, 2
    %v1393 = vadd.f32 %v1391, %v1392
    %v1394 = vrot.slane %v1393, 1
    %v1395 = vadd.f32 %v1393, %v1394
    %1398 = vrot.lane.b32.xlu0 %v1374, 32
    %v1399 = vpop.permute.xlu0 %1398
    %1400 = vrot.lane.b32.xlu0 %v1395, 32
    %v1401 = vpop.permute.xlu0 %1400
    %v1404 = vmul.f32 %v1337, %v1399
    %v1405 = vmul.f32 %v1338, %v1399
    %v1406 = vmul.f32 %v1339, %v1399
    %v1407 = vmul.f32 %v1340, %v1399
    %v1408 = vmul.f32 %v1341, %v1399
    %v1409 = vmul.f32 %v1342, %v1399
    %v1410 = vmul.f32 %v1343, %v1399
    %v1411 = vmul.f32 %v1344, %v1399
    %v1412 = vmul.f32 %v1345, %v1401
    %v1413 = vmul.f32 %v1346, %v1401
    %v1414 = vmul.f32 %v1347, %v1401
    %v1415 = vmul.f32 %v1348, %v1401
    %v1416 = vmul.f32 %v1349, %v1401
    %v1417 = vmul.f32 %v1350, %v1401
    %v1418 = vmul.f32 %v1351, %v1401
    %v1419 = vmul.f32 %v1352, %v1401
    %1436 = vrot.lane.b32.xlu0 %v1404, 96
    %v1437 = vpop.permute.xlu0 %1436
    %1438 = vrot.lane.b32.xlu0 %v1405, 96
    %v1439 = vpop.permute.xlu0 %1438
    %1440 = vrot.lane.b32.xlu0 %v1406, 96
    %v1441 = vpop.permute.xlu0 %1440
    %1442 = vrot.lane.b32.xlu0 %v1407, 96
    %v1443 = vpop.permute.xlu0 %1442
    %1444 = vrot.lane.b32.xlu0 %v1408, 96
    %v1445 = vpop.permute.xlu0 %1444
    %1446 = vrot.lane.b32.xlu0 %v1409, 96
    %v1447 = vpop.permute.xlu0 %1446
    %1448 = vrot.lane.b32.xlu0 %v1410, 96
    %v1449 = vpop.permute.xlu0 %1448
    %1450 = vrot.lane.b32.xlu0 %v1411, 96
    %v1451 = vpop.permute.xlu0 %1450
    %1452 = vrot.lane.b32.xlu0 %v1412, 96
    %v1453 = vpop.permute.xlu0 %1452
    %1454 = vrot.lane.b32.xlu0 %v1413, 96
    %v1455 = vpop.permute.xlu0 %1454
    %1456 = vrot.lane.b32.xlu0 %v1414, 96
    %v1457 = vpop.permute.xlu0 %1456
    %1458 = vrot.lane.b32.xlu0 %v1415, 96
    %v1459 = vpop.permute.xlu0 %1458
    %1460 = vrot.lane.b32.xlu0 %v1416, 96
    %v1461 = vpop.permute.xlu0 %1460
    %1462 = vrot.lane.b32.xlu0 %v1417, 96
    %v1463 = vpop.permute.xlu0 %1462
    %1464 = vrot.lane.b32.xlu0 %v1418, 96
    %v1465 = vpop.permute.xlu0 %1464
    %1466 = vrot.lane.b32.xlu0 %v1419, 96
    %v1467 = vpop.permute.xlu0 %1466
    %v1484 = vsel %vm1353, %v1437, 0.0
    %1485 = vadd.xlane.f32.xlu0 %v1484
    %v1486 = vpop.xlane.xlu0 %1485
    %v1487 = vsel %vm1353, %v1439, 0.0
    %1488 = vadd.xlane.f32.xlu0 %v1487
    %v1489 = vpop.xlane.xlu0 %1488
    %v1490 = vsel %vm1353, %v1441, 0.0
    %1491 = vadd.xlane.f32.xlu0 %v1490
    %v1492 = vpop.xlane.xlu0 %1491
    %v1493 = vsel %vm1353, %v1443, 0.0
    %1494 = vadd.xlane.f32.xlu0 %v1493
    %v1495 = vpop.xlane.xlu0 %1494
    %v1496 = vsel %vm1353, %v1445, 0.0
    %1497 = vadd.xlane.f32.xlu0 %v1496
    %v1498 = vpop.xlane.xlu0 %1497
    %v1499 = vsel %vm1353, %v1447, 0.0
    %1500 = vadd.xlane.f32.xlu0 %v1499
    %v1501 = vpop.xlane.xlu0 %1500
    %v1502 = vsel %vm1353, %v1449, 0.0
    %1503 = vadd.xlane.f32.xlu0 %v1502
    %v1504 = vpop.xlane.xlu0 %1503
    %v1505 = vsel %vm1353, %v1451, 0.0
    %1506 = vadd.xlane.f32.xlu0 %v1505
    %v1507 = vpop.xlane.xlu0 %1506
    %v1508 = vsel %vm1353, %v1453, 0.0
    %1509 = vadd.xlane.f32.xlu0 %v1508
    %v1510 = vpop.xlane.xlu0 %1509
    %v1511 = vsel %vm1353, %v1455, 0.0
    %1512 = vadd.xlane.f32.xlu0 %v1511
    %v1513 = vpop.xlane.xlu0 %1512
    %v1514 = vsel %vm1353, %v1457, 0.0
    %1515 = vadd.xlane.f32.xlu0 %v1514
    %v1516 = vpop.xlane.xlu0 %1515
    %v1517 = vsel %vm1353, %v1459, 0.0
    %1518 = vadd.xlane.f32.xlu0 %v1517
    %v1519 = vpop.xlane.xlu0 %1518
    %v1520 = vsel %vm1353, %v1461, 0.0
    %1521 = vadd.xlane.f32.xlu0 %v1520
    %v1522 = vpop.xlane.xlu0 %1521
    %v1523 = vsel %vm1353, %v1463, 0.0
    %1524 = vadd.xlane.f32.xlu0 %v1523
    %v1525 = vpop.xlane.xlu0 %1524
    %v1526 = vsel %vm1353, %v1465, 0.0
    %1527 = vadd.xlane.f32.xlu0 %v1526
    %v1528 = vpop.xlane.xlu0 %1527
    %v1529 = vsel %vm1353, %v1467, 0.0
    %1530 = vadd.xlane.f32.xlu0 %v1529
    %v1531 = vpop.xlane.xlu0 %1530
    %v1532 = vpack.c.bf16 %v1274, %v1273
    %v1533 = vpack.c.bf16 %v1276, %v1275
    %v1534 = vpack.c.bf16 %v1278, %v1277
    %v1535 = vpack.c.bf16 %v1280, %v1279
    %v1536 = vpack.c.bf16 %v1282, %v1281
    %v1537 = vpack.c.bf16 %v1284, %v1283
    %v1538 = vpack.c.bf16 %v1286, %v1285
    %v1539 = vpack.c.bf16 %v1288, %v1287
    %v1540 = vpack.c.bf16 %v853, %v850
    %v1541 = vpack.c.bf16 %v861, %v858
    %v1542 = vpack.c.bf16 %v869, %v866
    %v1543 = vpack.c.bf16 %v877, %v874
    %v1544 = vpack.c.bf16 %v885, %v882
    %v1545 = vpack.c.bf16 %v893, %v890
    %v1546 = vpack.c.bf16 %v901, %v898
    %v1547 = vpack.c.bf16 %v909, %v906
    %1548 = vxpose.xlu0.c.b16.start [1/8] %v1532, 128
    %1549 = vxpose.xlu0.c.b16.cont [2/8] %v1533, 128
    %1550 = vxpose.xlu0.c.b16.cont [3/8] %v1534, 128
    %1551 = vxpose.xlu0.c.b16.cont [4/8] %v1535, 128
    %1552 = vxpose.xlu0.c.b16.cont [5/8] 0, 128
    %1553 = vxpose.xlu0.c.b16.cont [6/8] 0, 128
    %1554 = vxpose.xlu0.c.b16.cont [7/8] 0, 128
    %1555 = vxpose.xlu0.c.b16.end [8/8] 0, 128
    %v1556 = vpop.trf.xlu0
    %v1557 = vpop.trf.xlu0
    %v1558 = vpop.trf.xlu0
    %v1559 = vpop.trf.xlu0
    %v1560 = vpop.trf.xlu0
    %v1561 = vpop.trf.xlu0
    %v1562 = vpop.trf.xlu0
    %v1563 = vpop.trf.xlu0
    %v1565 = vsel %vm143, %v1556, 0
    %v1568 = vsel %vm143, %v1557, 0
    %1570 = vmatprep.subr.bf16.mxu0 0
    %1571 = vmatpush1.bf16.msra.mxu0 %v1540
    %1572 = vmatprep.subr.bf16.mxu0 0
    %1573 = vmatpush1.bf16.msra.mxu0 %v1541
    %1574 = vmatprep.subr.bf16.mxu0 0
    %1575 = vmatpush1.bf16.msra.mxu0 %v1542
    %1576 = vmatprep.subr.bf16.mxu0 0
    %1577 = vmatpush1.bf16.msra.mxu0 %v1543
    %1578 = vmatprep.subr.bf16.mxu0 0
    %1579 = vmatpush1.bf16.msra.mxu0 0
    %1580 = vmatprep.subr.bf16.mxu0 0
    %1581 = vmatpush1.bf16.msra.mxu0 0
    %1582 = vmatprep.subr.bf16.mxu0 0
    %1583 = vmatpush1.bf16.msra.mxu0 0
    %1584 = vmatprep.subr.bf16.mxu0 0
    %1585 = vmatpush1.bf16.msra.mxu0 0
    %1586 = vmatprep.subr.bf16.mxu0 0
    %1587 = vmatpush1.bf16.msra.mxu0 0
    %1588 = vmatprep.subr.bf16.mxu0 0
    %1589 = vmatpush1.bf16.msra.mxu0 0
    %1590 = vmatprep.subr.bf16.mxu0 0
    %1591 = vmatpush1.bf16.msra.mxu0 0
    %1592 = vmatprep.subr.bf16.mxu0 0
    %1593 = vmatpush1.bf16.msra.mxu0 0
    %1594 = vmatprep.subr.bf16.mxu0 0
    %1595 = vmatpush1.bf16.msra.mxu0 0
    %1596 = vmatprep.subr.bf16.mxu0 0
    %1597 = vmatpush1.bf16.msra.mxu0 0
    %1598 = vmatprep.subr.bf16.mxu0 0
    %1599 = vmatpush1.bf16.msra.mxu0 0
    %1600 = vmatprep.subr.bf16.mxu0 0
    %1601 = vmatpush1.bf16.msra.mxu0 0
    %1602 = vmatprep.mubr.bf16.mxu0 0
    %1603 = vmatmul.mubr.bf16.gmra.mrb[0].mxu0 %v1565
    %v1604 = vpop.f32.mrb[0].mxu0
    %v1605 = vadd.f32 0.0, %v1604
    %v1606 = vpop.f32.mrb[0].mxu0
    %v1607 = vpop.f32.mrb[0].mxu0
    %v1608 = vadd.f32 0.0, %v1607
    %v1609 = vpop.f32.mrb[0].mxu0
    %1610 = vmatprep.mubr.bf16.mxu0 0
    %1611 = vmatmul.mubr.bf16.gmra.mrb[0].mxu0 %v1568
    %v1612 = vpop.f32.mrb[0].mxu0
    %v1613 = vadd.f32 0.0, %v1612
    %v1614 = vpop.f32.mrb[0].mxu0
    %v1615 = vpop.f32.mrb[0].mxu0
    %v1616 = vadd.f32 0.0, %v1615
    %v1617 = vpop.f32.mrb[0].mxu0
    %1618 = vdwg.mxu0
    %1619 = vxpose.xlu0.c.b16.start [1/8] %v1536, 128
    %1620 = vxpose.xlu0.c.b16.cont [2/8] %v1537, 128
    %1621 = vxpose.xlu0.c.b16.cont [3/8] %v1538, 128
    %1622 = vxpose.xlu0.c.b16.cont [4/8] %v1539, 128
    %1623 = vxpose.xlu0.c.b16.cont [5/8] 0, 128
    %1624 = vxpose.xlu0.c.b16.cont [6/8] 0, 128
    %1625 = vxpose.xlu0.c.b16.cont [7/8] 0, 128
    %1626 = vxpose.xlu0.c.b16.end [8/8] 0, 128
    %v1627 = vpop.trf.xlu0
    %v1628 = vpop.trf.xlu0
    %v1629 = vpop.trf.xlu0
    %v1630 = vpop.trf.xlu0
    %v1631 = vpop.trf.xlu0
    %v1632 = vpop.trf.xlu0
    %v1633 = vpop.trf.xlu0
    %v1634 = vpop.trf.xlu0
    %v1636 = vsel %vm143, %v1627, 0
    %v1639 = vsel %vm143, %v1628, 0
    %1641 = vmatprep.subr.bf16.mxu0 0
    %1642 = vmatpush1.bf16.msra.mxu0 %v1544
    %1643 = vmatprep.subr.bf16.mxu0 0
    %1644 = vmatpush1.bf16.msra.mxu0 %v1545
    %1645 = vmatprep.subr.bf16.mxu0 0
    %1646 = vmatpush1.bf16.msra.mxu0 %v1546
    %1647 = vmatprep.subr.bf16.mxu0 0
    %1648 = vmatpush1.bf16.msra.mxu0 %v1547
    %1649 = vmatprep.subr.bf16.mxu0 0
    %1650 = vmatpush1.bf16.msra.mxu0 0
    %1651 = vmatprep.subr.bf16.mxu0 0
    %1652 = vmatpush1.bf16.msra.mxu0 0
    %1653 = vmatprep.subr.bf16.mxu0 0
    %1654 = vmatpush1.bf16.msra.mxu0 0
    %1655 = vmatprep.subr.bf16.mxu0 0
    %1656 = vmatpush1.bf16.msra.mxu0 0
    %1657 = vmatprep.subr.bf16.mxu0 0
    %1658 = vmatpush1.bf16.msra.mxu0 0
    %1659 = vmatprep.subr.bf16.mxu0 0
    %1660 = vmatpush1.bf16.msra.mxu0 0
    %1661 = vmatprep.subr.bf16.mxu0 0
    %1662 = vmatpush1.bf16.msra.mxu0 0
    %1663 = vmatprep.subr.bf16.mxu0 0
    %1664 = vmatpush1.bf16.msra.mxu0 0
    %1665 = vmatprep.subr.bf16.mxu0 0
    %1666 = vmatpush1.bf16.msra.mxu0 0
    %1667 = vmatprep.subr.bf16.mxu0 0
    %1668 = vmatpush1.bf16.msra.mxu0 0
    %1669 = vmatprep.subr.bf16.mxu0 0
    %1670 = vmatpush1.bf16.msra.mxu0 0
    %1671 = vmatprep.subr.bf16.mxu0 0
    %1672 = vmatpush1.bf16.msra.mxu0 0
    %1673 = vmatprep.mubr.bf16.mxu0 0
    %1674 = vmatmul.mubr.bf16.gmra.mrb[0].mxu0 %v1636
    %v1675 = vpop.f32.mrb[0].mxu0
    %v1676 = vadd.f32 0.0, %v1675
    %v1677 = vpop.f32.mrb[0].mxu0
    %v1678 = vpop.f32.mrb[0].mxu0
    %v1679 = vadd.f32 0.0, %v1678
    %v1680 = vpop.f32.mrb[0].mxu0
    %1681 = vmatprep.mubr.bf16.mxu0 0
    %1682 = vmatmul.mubr.bf16.gmra.mrb[0].mxu0 %v1639
    %v1683 = vpop.f32.mrb[0].mxu0
    %v1684 = vadd.f32 0.0, %v1683
    %v1685 = vpop.f32.mrb[0].mxu0
    %v1686 = vpop.f32.mrb[0].mxu0
    %v1687 = vadd.f32 0.0, %v1686
    %v1688 = vpop.f32.mrb[0].mxu0
    %1689 = vdwg.mxu0
    %v1690 = vpack.c.bf16 %v1338, %v1337
    %v1691 = vpack.c.bf16 %v1340, %v1339
    %v1692 = vpack.c.bf16 %v1342, %v1341
    %v1693 = vpack.c.bf16 %v1344, %v1343
    %v1694 = vpack.c.bf16 %v1346, %v1345
    %v1695 = vpack.c.bf16 %v1348, %v1347
    %v1696 = vpack.c.bf16 %v1350, %v1349
    %v1697 = vpack.c.bf16 %v1352, %v1351
    %v1698 = vpack.c.bf16 %v1608, %v1605
    %v1699 = vpack.c.bf16 %v1616, %v1613
    %v1700 = vpack.c.bf16 %v1679, %v1676
    %v1701 = vpack.c.bf16 %v1687, %v1684
    %1706 = vrot.lane.b32.xlu0 %v1690, 96
    %v1707 = vpop.permute.xlu0 %1706
    %1708 = vrot.lane.b32.xlu0 %v1691, 96
    %v1709 = vpop.permute.xlu0 %1708
    %1710 = vrot.lane.b32.xlu0 %v1692, 96
    %v1711 = vpop.permute.xlu0 %1710
    %1712 = vrot.lane.b32.xlu0 %v1693, 96
    %v1713 = vpop.permute.xlu0 %1712
    %v1715 = vsel %vm1353, %v1707, 0
    %v1718 = vsel %vm1353, %v1709, 0
    %v1721 = vsel %vm1353, %v1711, 0
    %v1724 = vsel %vm1353, %v1713, 0
    %1726 = vmatprep.subr.bf16.mxu0 0
    %1727 = vmatpush1.bf16.msra.mxu0 %v1698
    %1728 = vmatprep.subr.bf16.mxu0 0
    %1729 = vmatpush1.bf16.msra.mxu0 %v1699
    %1730 = vmatprep.subr.bf16.mxu0 0
    %1731 = vmatpush1.bf16.msra.mxu0 0
    %1732 = vmatprep.subr.bf16.mxu0 0
    %1733 = vmatpush1.bf16.msra.mxu0 0
    %1734 = vmatprep.subr.bf16.mxu0 0
    %1735 = vmatpush1.bf16.msra.mxu0 0
    %1736 = vmatprep.subr.bf16.mxu0 0
    %1737 = vmatpush1.bf16.msra.mxu0 0
    %1738 = vmatprep.subr.bf16.mxu0 0
    %1739 = vmatpush1.bf16.msra.mxu0 0
    %1740 = vmatprep.subr.bf16.mxu0 0
    %1741 = vmatpush1.bf16.msra.mxu0 0
    %1742 = vmatprep.subr.bf16.mxu0 0
    %1743 = vmatpush1.bf16.msra.mxu0 0
    %1744 = vmatprep.subr.bf16.mxu0 0
    %1745 = vmatpush1.bf16.msra.mxu0 0
    %1746 = vmatprep.subr.bf16.mxu0 0
    %1747 = vmatpush1.bf16.msra.mxu0 0
    %1748 = vmatprep.subr.bf16.mxu0 0
    %1749 = vmatpush1.bf16.msra.mxu0 0
    %1750 = vmatprep.subr.bf16.mxu0 0
    %1751 = vmatpush1.bf16.msra.mxu0 0
    %1752 = vmatprep.subr.bf16.mxu0 0
    %1753 = vmatpush1.bf16.msra.mxu0 0
    %1754 = vmatprep.subr.bf16.mxu0 0
    %1755 = vmatpush1.bf16.msra.mxu0 0
    %1756 = vmatprep.subr.bf16.mxu0 0
    %1757 = vmatpush1.bf16.msra.mxu0 0
    %1758 = vmatprep.mubr.bf16.mxu0 0
    %1759 = vmatmul.mubr.bf16.gmra.mrb[0].mxu0 %v1715
    %v1760 = vpop.f32.mrb[0].mxu0
    %v1761 = vadd.f32 0.0, %v1760
    %v1762 = vpop.f32.mrb[0].mxu0
    %v1763 = vpop.f32.mrb[0].mxu0
    %v1764 = vadd.f32 0.0, %v1763
    %v1765 = vpop.f32.mrb[0].mxu0
    %1766 = vmatprep.mubr.bf16.mxu0 0
    %1767 = vmatmul.mubr.bf16.gmra.mrb[0].mxu0 %v1718
    %v1768 = vpop.f32.mrb[0].mxu0
    %v1769 = vadd.f32 0.0, %v1768
    %v1770 = vpop.f32.mrb[0].mxu0
    %v1771 = vpop.f32.mrb[0].mxu0
    %v1772 = vadd.f32 0.0, %v1771
    %v1773 = vpop.f32.mrb[0].mxu0
    %1774 = vmatprep.mubr.bf16.mxu0 0
    %1775 = vmatmul.mubr.bf16.gmra.mrb[0].mxu0 %v1721
    %v1776 = vpop.f32.mrb[0].mxu0
    %v1777 = vadd.f32 0.0, %v1776
    %v1778 = vpop.f32.mrb[0].mxu0
    %v1779 = vpop.f32.mrb[0].mxu0
    %v1780 = vadd.f32 0.0, %v1779
    %v1781 = vpop.f32.mrb[0].mxu0
    %1782 = vmatprep.mubr.bf16.mxu0 0
    %1783 = vmatmul.mubr.bf16.gmra.mrb[0].mxu0 %v1724
    %v1784 = vpop.f32.mrb[0].mxu0
    %v1785 = vadd.f32 0.0, %v1784
    %v1786 = vpop.f32.mrb[0].mxu0
    %v1787 = vpop.f32.mrb[0].mxu0
    %v1788 = vadd.f32 0.0, %v1787
    %v1789 = vpop.f32.mrb[0].mxu0
    %1790 = vdwg.mxu0
    %1795 = vrot.lane.b32.xlu0 %v1694, 96
    %v1796 = vpop.permute.xlu0 %1795
    %1797 = vrot.lane.b32.xlu0 %v1695, 96
    %v1798 = vpop.permute.xlu0 %1797
    %1799 = vrot.lane.b32.xlu0 %v1696, 96
    %v1800 = vpop.permute.xlu0 %1799
    %1801 = vrot.lane.b32.xlu0 %v1697, 96
    %v1802 = vpop.permute.xlu0 %1801
    %v1804 = vsel %vm1353, %v1796, 0
    %v1807 = vsel %vm1353, %v1798, 0
    %v1810 = vsel %vm1353, %v1800, 0
    %v1813 = vsel %vm1353, %v1802, 0
    %1815 = vmatprep.subr.bf16.mxu0 0
    %1816 = vmatpush1.bf16.msra.mxu0 %v1700
    %1817 = vmatprep.subr.bf16.mxu0 0
    %1818 = vmatpush1.bf16.msra.mxu0 %v1701
    %1819 = vmatprep.subr.bf16.mxu0 0
    %1820 = vmatpush1.bf16.msra.mxu0 0
    %1821 = vmatprep.subr.bf16.mxu0 0
    %1822 = vmatpush1.bf16.msra.mxu0 0
    %1823 = vmatprep.subr.bf16.mxu0 0
    %1824 = vmatpush1.bf16.msra.mxu0 0
    %1825 = vmatprep.subr.bf16.mxu0 0
    %1826 = vmatpush1.bf16.msra.mxu0 0
    %1827 = vmatprep.subr.bf16.mxu0 0
    %1828 = vmatpush1.bf16.msra.mxu0 0
    %1829 = vmatprep.subr.bf16.mxu0 0
    %1830 = vmatpush1.bf16.msra.mxu0 0
    %1831 = vmatprep.subr.bf16.mxu0 0
    %1832 = vmatpush1.bf16.msra.mxu0 0
    %1833 = vmatprep.subr.bf16.mxu0 0
    %1834 = vmatpush1.bf16.msra.mxu0 0
    %1835 = vmatprep.subr.bf16.mxu0 0
    %1836 = vmatpush1.bf16.msra.mxu0 0
    %1837 = vmatprep.subr.bf16.mxu0 0
    %1838 = vmatpush1.bf16.msra.mxu0 0
    %1839 = vmatprep.subr.bf16.mxu0 0
    %1840 = vmatpush1.bf16.msra.mxu0 0
    %1841 = vmatprep.subr.bf16.mxu0 0
    %1842 = vmatpush1.bf16.msra.mxu0 0
    %1843 = vmatprep.subr.bf16.mxu0 0
    %1844 = vmatpush1.bf16.msra.mxu0 0
    %1845 = vmatprep.subr.bf16.mxu0 0
    %1846 = vmatpush1.bf16.msra.mxu0 0
    %1847 = vmatprep.mubr.bf16.mxu0 0
    %1848 = vmatmul.mubr.bf16.gmra.mrb[0].mxu0 %v1804
    %v1849 = vpop.f32.mrb[0].mxu0
    %v1850 = vadd.f32 0.0, %v1849
    %v1851 = vpop.f32.mrb[0].mxu0
    %v1852 = vpop.f32.mrb[0].mxu0
    %v1853 = vadd.f32 0.0, %v1852
    %v1854 = vpop.f32.mrb[0].mxu0
    %1855 = vmatprep.mubr.bf16.mxu0 0
    %1856 = vmatmul.mubr.bf16.gmra.mrb[0].mxu0 %v1807
    %v1857 = vpop.f32.mrb[0].mxu0
    %v1858 = vadd.f32 0.0, %v1857
    %v1859 = vpop.f32.mrb[0].mxu0
    %v1860 = vpop.f32.mrb[0].mxu0
    %v1861 = vadd.f32 0.0, %v1860
    %v1862 = vpop.f32.mrb[0].mxu0
    %1863 = vmatprep.mubr.bf16.mxu0 0
    %1864 = vmatmul.mubr.bf16.gmra.mrb[0].mxu0 %v1810
    %v1865 = vpop.f32.mrb[0].mxu0
    %v1866 = vadd.f32 0.0, %v1865
    %v1867 = vpop.f32.mrb[0].mxu0
    %v1868 = vpop.f32.mrb[0].mxu0
    %v1869 = vadd.f32 0.0, %v1868
    %v1870 = vpop.f32.mrb[0].mxu0
    %1871 = vmatprep.mubr.bf16.mxu0 0
    %1872 = vmatmul.mubr.bf16.gmra.mrb[0].mxu0 %v1813
    %v1873 = vpop.f32.mrb[0].mxu0
    %v1874 = vadd.f32 0.0, %v1873
    %v1875 = vpop.f32.mrb[0].mxu0
    %v1876 = vpop.f32.mrb[0].mxu0
    %v1877 = vadd.f32 0.0, %v1876
    %v1878 = vpop.f32.mrb[0].mxu0
    %1879 = vdwg.mxu0
    %v1880 = vadd.f32 %v1486, 1e-08
    %v1881 = vadd.f32 %v1489, 1e-08
    %v1882 = vadd.f32 %v1492, 1e-08
    %v1883 = vadd.f32 %v1495, 1e-08
    %v1884 = vadd.f32 %v1498, 1e-08
    %v1885 = vadd.f32 %v1501, 1e-08
    %v1886 = vadd.f32 %v1504, 1e-08
    %v1887 = vadd.f32 %v1507, 1e-08
    %v1888 = vadd.f32 %v1510, 1e-08
    %v1889 = vadd.f32 %v1513, 1e-08
    %v1890 = vadd.f32 %v1516, 1e-08
    %v1891 = vadd.f32 %v1519, 1e-08
    %v1892 = vadd.f32 %v1522, 1e-08
    %v1893 = vadd.f32 %v1525, 1e-08
    %v1894 = vadd.f32 %v1528, 1e-08
    %v1895 = vadd.f32 %v1531, 1e-08
    %v1896 = vrcp.pop %v1880
    %v1897 = vrcp.pop %v1881
    %v1898 = vrcp.pop %v1882
    %v1899 = vrcp.pop %v1883
    %v1900 = vrcp.pop %v1884
    %v1901 = vrcp.pop %v1885
    %v1902 = vrcp.pop %v1886
    %v1903 = vrcp.pop %v1887
    %v1904 = vrcp.pop %v1888
    %v1905 = vrcp.pop %v1889
    %v1906 = vrcp.pop %v1890
    %v1907 = vrcp.pop %v1891
    %v1908 = vrcp.pop %v1892
    %v1909 = vrcp.pop %v1893
    %v1910 = vrcp.pop %v1894
    %v1911 = vrcp.pop %v1895
    %v1912 = vmul.f32 %v1761, %v1896
    %v1913 = vmul.f32 %v1764, %v1897
    %v1914 = vmul.f32 %v1769, %v1898
    %v1915 = vmul.f32 %v1772, %v1899
    %v1916 = vmul.f32 %v1777, %v1900
    %v1917 = vmul.f32 %v1780, %v1901
    %v1918 = vmul.f32 %v1785, %v1902
    %v1919 = vmul.f32 %v1788, %v1903
    %v1920 = vmul.f32 %v1850, %v1904
    %v1921 = vmul.f32 %v1853, %v1905
    %v1922 = vmul.f32 %v1858, %v1906
    %v1923 = vmul.f32 %v1861, %v1907
    %v1924 = vmul.f32 %v1866, %v1908
    %v1925 = vmul.f32 %v1869, %v1909
    %v1926 = vmul.f32 %v1874, %v1910
    %v1927 = vmul.f32 %v1877, %v1911
    %v1928 = vpack.c.bf16 %v1913, %v1912
    %v1929 = vpack.c.bf16 %v1915, %v1914
    %v1930 = vpack.c.bf16 %v1917, %v1916
    %v1931 = vpack.c.bf16 %v1919, %v1918
    %v1932 = vpack.c.bf16 %v1921, %v1920
    %v1933 = vpack.c.bf16 %v1923, %v1922
    %v1934 = vpack.c.bf16 %v1925, %v1924
    %v1935 = vpack.c.bf16 %v1927, %v1926
    %v1936 = vld [vmem:[#allocation8] sm:$0xf]
    %v1937 = vld [vmem:[#allocation8 + $0x4] sm:$0xf]
    %v1938 = vld [vmem:[#allocation8 + $0x8] sm:$0xf]
    %v1939 = vld [vmem:[#allocation8 + $0xc] sm:$0xf]
    %v1940 = vld [vmem:[#allocation8 + $0x10] sm:$0xf]
    %v1941 = vld [vmem:[#allocation8 + $0x14] sm:$0xf]
    %v1942 = vld [vmem:[#allocation8 + $0x18] sm:$0xf]
    %v1943 = vld [vmem:[#allocation8 + $0x1c] sm:$0xf]
    %v1944 = vld [vmem:[#allocation10] sm:$0x1]
    %v1946 = vlaneseq
    %v1947 = vshrl.u32 %v1946, 7
    %v1948 = vsub.s32 0, %v1947
    %v1949 = vrot.slane %v1944, %v1948
    %v1959 = vunpack.c.l.b16 %v1936
    %v1960 = vunpack.c.l.b16 %v1937
    %v1961 = vunpack.c.l.b16 %v1938
    %v1962 = vunpack.c.l.b16 %v1939
    %v1963 = vunpack.c.l.b16 %v1940
    %v1964 = vunpack.c.l.b16 %v1941
    %v1965 = vunpack.c.l.b16 %v1942
    %v1966 = vunpack.c.l.b16 %v1943
    %v1967 = vpack.c.b16 %v1960, %v1959
    %v1968 = vpack.c.b16 %v1962, %v1961
    %v1969 = vpack.c.b16 %v1964, %v1963
    %v1970 = vpack.c.b16 %v1966, %v1965
    %v1976 = vsel %vm143, %v1928, 0
    %v1979 = vsel %vm143, %v1929, 0
    %v1982 = vsel %vm143, %v1930, 0
    %v1985 = vsel %vm143, %v1931, 0
    %v1988 = vsel %vm143, %v1932, 0
    %v1991 = vsel %vm143, %v1933, 0
    %v1994 = vsel %vm143, %v1934, 0
    %v1997 = vsel %vm143, %v1935, 0
    %1999 = vmatprep.subr.bf16.mxu0 0
    %2000 = vmatpush1.bf16.msra.mxu0 %v1967
    %2001 = vmatprep.subr.bf16.mxu0 0
    %2002 = vmatpush1.bf16.msra.mxu0 %v1968
    %2003 = vmatprep.subr.bf16.mxu0 0
    %2004 = vmatpush1.bf16.msra.mxu0 %v1969
    %2005 = vmatprep.subr.bf16.mxu0 0
    %2006 = vmatpush1.bf16.msra.mxu0 %v1970
    %2007 = vmatprep.subr.bf16.mxu0 0
    %2008 = vmatpush1.bf16.msra.mxu0 0
    %2009 = vmatprep.subr.bf16.mxu0 0
    %2010 = vmatpush1.bf16.msra.mxu0 0
    %2011 = vmatprep.subr.bf16.mxu0 0
    %2012 = vmatpush1.bf16.msra.mxu0 0
    %2013 = vmatprep.subr.bf16.mxu0 0
    %2014 = vmatpush1.bf16.msra.mxu0 0
    %2015 = vmatprep.subr.bf16.mxu0 0
    %2016 = vmatpush1.bf16.msra.mxu0 0
    %2017 = vmatprep.subr.bf16.mxu0 0
    %2018 = vmatpush1.bf16.msra.mxu0 0
    %2019 = vmatprep.subr.bf16.mxu0 0
    %2020 = vmatpush1.bf16.msra.mxu0 0
    %2021 = vmatprep.subr.bf16.mxu0 0
    %2022 = vmatpush1.bf16.msra.mxu0 0
    %2023 = vmatprep.subr.bf16.mxu0 0
    %2024 = vmatpush1.bf16.msra.mxu0 0
    %2025 = vmatprep.subr.bf16.mxu0 0
    %2026 = vmatpush1.bf16.msra.mxu0 0
    %2027 = vmatprep.subr.bf16.mxu0 0
    %2028 = vmatpush1.bf16.msra.mxu0 0
    %2029 = vmatprep.subr.bf16.mxu0 0
    %2030 = vmatpush1.bf16.msra.mxu0 0
    %2031 = vmatprep.mubr.bf16.mxu0 0
    %2032 = vmatmul.mubr.bf16.gmra.mrb[0].mxu0 %v1976
    %v2033 = vpop.f32.mrb[0].mxu0
    %v2034 = vadd.f32 %v1949, %v2033
    %v2035 = vpop.f32.mrb[0].mxu0
    %v2036 = vpop.f32.mrb[0].mxu0
    %v2037 = vadd.f32 %v1949, %v2036
    %v2038 = vpop.f32.mrb[0].mxu0
    %2039 = vmatprep.mubr.bf16.mxu0 0
    %2040 = vmatmul.mubr.bf16.gmra.mrb[0].mxu0 %v1979
    %v2041 = vpop.f32.mrb[0].mxu0
    %v2042 = vadd.f32 %v1949, %v2041
    %v2043 = vpop.f32.mrb[0].mxu0
    %v2044 = vpop.f32.mrb[0].mxu0
    %v2045 = vadd.f32 %v1949, %v2044
    %v2046 = vpop.f32.mrb[0].mxu0
    %2047 = vmatprep.mubr.bf16.mxu0 0
    %2048 = vmatmul.mubr.bf16.gmra.mrb[0].mxu0 %v1982
    %v2049 = vpop.f32.mrb[0].mxu0
    %v2050 = vadd.f32 %v1949, %v2049
    %v2051 = vpop.f32.mrb[0].mxu0
    %v2052 = vpop.f32.mrb[0].mxu0
    %v2053 = vadd.f32 %v1949, %v2052
    %v2054 = vpop.f32.mrb[0].mxu0
    %2055 = vmatprep.mubr.bf16.mxu0 0
    %2056 = vmatmul.mubr.bf16.gmra.mrb[0].mxu0 %v1985
    %v2057 = vpop.f32.mrb[0].mxu0
    %v2058 = vadd.f32 %v1949, %v2057
    %v2059 = vpop.f32.mrb[0].mxu0
    %v2060 = vpop.f32.mrb[0].mxu0
    %v2061 = vadd.f32 %v1949, %v2060
    %v2062 = vpop.f32.mrb[0].mxu0
    %2063 = vmatprep.mubr.bf16.mxu0 0
    %2064 = vmatmul.mubr.bf16.gmra.mrb[0].mxu0 %v1988
    %v2065 = vpop.f32.mrb[0].mxu0
    %v2066 = vadd.f32 %v1949, %v2065
    %v2067 = vpop.f32.mrb[0].mxu0
    %v2068 = vpop.f32.mrb[0].mxu0
    %v2069 = vadd.f32 %v1949, %v2068
    %v2070 = vpop.f32.mrb[0].mxu0
    %2071 = vmatprep.mubr.bf16.mxu0 0
    %2072 = vmatmul.mubr.bf16.gmra.mrb[0].mxu0 %v1991
    %v2073 = vpop.f32.mrb[0].mxu0
    %v2074 = vadd.f32 %v1949, %v2073
    %v2075 = vpop.f32.mrb[0].mxu0
    %v2076 = vpop.f32.mrb[0].mxu0
    %v2077 = vadd.f32 %v1949, %v2076
    %v2078 = vpop.f32.mrb[0].mxu0
    %2079 = vmatprep.mubr.bf16.mxu0 0
    %2080 = vmatmul.mubr.bf16.gmra.mrb[0].mxu0 %v1994
    %v2081 = vpop.f32.mrb[0].mxu0
    %v2082 = vadd.f32 %v1949, %v2081
    %v2083 = vpop.f32.mrb[0].mxu0
    %v2084 = vpop.f32.mrb[0].mxu0
    %v2085 = vadd.f32 %v1949, %v2084
    %v2086 = vpop.f32.mrb[0].mxu0
    %2087 = vmatprep.mubr.bf16.mxu0 0
    %2088 = vmatmul.mubr.bf16.gmra.mrb[0].mxu0 %v1997
    %v2089 = vpop.f32.mrb[0].mxu0
    %v2090 = vadd.f32 %v1949, %v2089
    %v2091 = vpop.f32.mrb[0].mxu0
    %v2092 = vpop.f32.mrb[0].mxu0
    %v2093 = vadd.f32 %v1949, %v2092
    %v2094 = vpop.f32.mrb[0].mxu0
    %2095 = vdwg.mxu0
    %v2096 = vadd.f32 %v850, %v2034
    %v2097 = vadd.f32 %v853, %v2037
    %v2098 = vadd.f32 %v858, %v2042
    %v2099 = vadd.f32 %v861, %v2045
    %v2100 = vadd.f32 %v866, %v2050
    %v2101 = vadd.f32 %v869, %v2053
    %v2102 = vadd.f32 %v874, %v2058
    %v2103 = vadd.f32 %v877, %v2061
    %v2104 = vadd.f32 %v882, %v2066
    %v2105 = vadd.f32 %v885, %v2069
    %v2106 = vadd.f32 %v890, %v2074
    %v2107 = vadd.f32 %v893, %v2077
    %v2108 = vadd.f32 %v898, %v2082
    %v2109 = vadd.f32 %v901, %v2085
    %v2110 = vadd.f32 %v906, %v2090
    %v2111 = vadd.f32 %v909, %v2093
    %v2112 = vsel %vm143, %v2096, 0.0
    %2113 = vadd.xlane.f32.xlu0 %v2112
    %v2114 = vpop.xlane.xlu0 %2113
    %v2115 = vsel %vm143, %v2097, 0.0
    %2116 = vadd.xlane.f32.xlu0 %v2115
    %v2117 = vpop.xlane.xlu0 %2116
    %v2118 = vsel %vm143, %v2098, 0.0
    %2119 = vadd.xlane.f32.xlu0 %v2118
    %v2120 = vpop.xlane.xlu0 %2119
    %v2121 = vsel %vm143, %v2099, 0.0
    %2122 = vadd.xlane.f32.xlu0 %v2121
    %v2123 = vpop.xlane.xlu0 %2122
    %v2124 = vsel %vm143, %v2100, 0.0
    %2125 = vadd.xlane.f32.xlu0 %v2124
    %v2126 = vpop.xlane.xlu0 %2125
    %v2127 = vsel %vm143, %v2101, 0.0
    %2128 = vadd.xlane.f32.xlu0 %v2127
    %v2129 = vpop.xlane.xlu0 %2128
    %v2130 = vsel %vm143, %v2102, 0.0
    %2131 = vadd.xlane.f32.xlu0 %v2130
    %v2132 = vpop.xlane.xlu0 %2131
    %v2133 = vsel %vm143, %v2103, 0.0
    %2134 = vadd.xlane.f32.xlu0 %v2133
    %v2135 = vpop.xlane.xlu0 %2134
    %v2136 = vsel %vm143, %v2104, 0.0
    %2137 = vadd.xlane.f32.xlu0 %v2136
    %v2138 = vpop.xlane.xlu0 %2137
    %v2139 = vsel %vm143, %v2105, 0.0
    %2140 = vadd.xlane.f32.xlu0 %v2139
    %v2141 = vpop.xlane.xlu0 %2140
    %v2142 = vsel %vm143, %v2106, 0.0
    %2143 = vadd.xlane.f32.xlu0 %v2142
    %v2144 = vpop.xlane.xlu0 %2143
    %v2145 = vsel %vm143, %v2107, 0.0
    %2146 = vadd.xlane.f32.xlu0 %v2145
    %v2147 = vpop.xlane.xlu0 %2146
    %v2148 = vsel %vm143, %v2108, 0.0
    %2149 = vadd.xlane.f32.xlu0 %v2148
    %v2150 = vpop.xlane.xlu0 %2149
    %v2151 = vsel %vm143, %v2109, 0.0
    %2152 = vadd.xlane.f32.xlu0 %v2151
    %v2153 = vpop.xlane.xlu0 %2152
    %v2154 = vsel %vm143, %v2110, 0.0
    %2155 = vadd.xlane.f32.xlu0 %v2154
    %v2156 = vpop.xlane.xlu0 %2155
    %v2157 = vsel %vm143, %v2111, 0.0
    %2158 = vadd.xlane.f32.xlu0 %v2157
    %v2159 = vpop.xlane.xlu0 %2158
    %v2160 = vmul.f32 %v2114, %v192
    %v2161 = vmul.f32 %v2117, %v192
    %v2162 = vmul.f32 %v2120, %v192
    %v2163 = vmul.f32 %v2123, %v192
    %v2164 = vmul.f32 %v2126, %v192
    %v2165 = vmul.f32 %v2129, %v192
    %v2166 = vmul.f32 %v2132, %v192
    %v2167 = vmul.f32 %v2135, %v192
    %v2168 = vmul.f32 %v2138, %v192
    %v2169 = vmul.f32 %v2141, %v192
    %v2170 = vmul.f32 %v2144, %v192
    %v2171 = vmul.f32 %v2147, %v192
    %v2172 = vmul.f32 %v2150, %v192
    %v2173 = vmul.f32 %v2153, %v192
    %v2174 = vmul.f32 %v2156, %v192
    %v2175 = vmul.f32 %v2159, %v192
    %v2176 = vsub.f32 %v2096, %v2160
    %v2177 = vsub.f32 %v2097, %v2161
    %v2178 = vsub.f32 %v2098, %v2162
    %v2179 = vsub.f32 %v2099, %v2163
    %v2180 = vsub.f32 %v2100, %v2164
    %v2181 = vsub.f32 %v2101, %v2165
    %v2182 = vsub.f32 %v2102, %v2166
    %v2183 = vsub.f32 %v2103, %v2167
    %v2184 = vsub.f32 %v2104, %v2168
    %v2185 = vsub.f32 %v2105, %v2169
    %v2186 = vsub.f32 %v2106, %v2170
    %v2187 = vsub.f32 %v2107, %v2171
    %v2188 = vsub.f32 %v2108, %v2172
    %v2189 = vsub.f32 %v2109, %v2173
    %v2190 = vsub.f32 %v2110, %v2174
    %v2191 = vsub.f32 %v2111, %v2175
    %v2192 = vmul.f32 %v2176, %v2176
    %v2193 = vmul.f32 %v2177, %v2177
    %v2194 = vmul.f32 %v2178, %v2178
    %v2195 = vmul.f32 %v2179, %v2179
    %v2196 = vmul.f32 %v2180, %v2180
    %v2197 = vmul.f32 %v2181, %v2181
    %v2198 = vmul.f32 %v2182, %v2182
    %v2199 = vmul.f32 %v2183, %v2183
    %v2200 = vmul.f32 %v2184, %v2184
    %v2201 = vmul.f32 %v2185, %v2185
    %v2202 = vmul.f32 %v2186, %v2186
    %v2203 = vmul.f32 %v2187, %v2187
    %v2204 = vmul.f32 %v2188, %v2188
    %v2205 = vmul.f32 %v2189, %v2189
    %v2206 = vmul.f32 %v2190, %v2190
    %v2207 = vmul.f32 %v2191, %v2191
    %v2208 = vsel %vm143, %v2192, 0.0
    %2209 = vadd.xlane.f32.xlu0 %v2208
    %v2210 = vpop.xlane.xlu0 %2209
    %v2211 = vsel %vm143, %v2193, 0.0
    %2212 = vadd.xlane.f32.xlu0 %v2211
    %v2213 = vpop.xlane.xlu0 %2212
    %v2214 = vsel %vm143, %v2194, 0.0
    %2215 = vadd.xlane.f32.xlu0 %v2214
    %v2216 = vpop.xlane.xlu0 %2215
    %v2217 = vsel %vm143, %v2195, 0.0
    %2218 = vadd.xlane.f32.xlu0 %v2217
    %v2219 = vpop.xlane.xlu0 %2218
    %v2220 = vsel %vm143, %v2196, 0.0
    %2221 = vadd.xlane.f32.xlu0 %v2220
    %v2222 = vpop.xlane.xlu0 %2221
    %v2223 = vsel %vm143, %v2197, 0.0
    %2224 = vadd.xlane.f32.xlu0 %v2223
    %v2225 = vpop.xlane.xlu0 %2224
    %v2226 = vsel %vm143, %v2198, 0.0
    %2227 = vadd.xlane.f32.xlu0 %v2226
    %v2228 = vpop.xlane.xlu0 %2227
    %v2229 = vsel %vm143, %v2199, 0.0
    %2230 = vadd.xlane.f32.xlu0 %v2229
    %v2231 = vpop.xlane.xlu0 %2230
    %v2232 = vsel %vm143, %v2200, 0.0
    %2233 = vadd.xlane.f32.xlu0 %v2232
    %v2234 = vpop.xlane.xlu0 %2233
    %v2235 = vsel %vm143, %v2201, 0.0
    %2236 = vadd.xlane.f32.xlu0 %v2235
    %v2237 = vpop.xlane.xlu0 %2236
    %v2238 = vsel %vm143, %v2202, 0.0
    %2239 = vadd.xlane.f32.xlu0 %v2238
    %v2240 = vpop.xlane.xlu0 %2239
    %v2241 = vsel %vm143, %v2203, 0.0
    %2242 = vadd.xlane.f32.xlu0 %v2241
    %v2243 = vpop.xlane.xlu0 %2242
    %v2244 = vsel %vm143, %v2204, 0.0
    %2245 = vadd.xlane.f32.xlu0 %v2244
    %v2246 = vpop.xlane.xlu0 %2245
    %v2247 = vsel %vm143, %v2205, 0.0
    %2248 = vadd.xlane.f32.xlu0 %v2247
    %v2249 = vpop.xlane.xlu0 %2248
    %v2250 = vsel %vm143, %v2206, 0.0
    %2251 = vadd.xlane.f32.xlu0 %v2250
    %v2252 = vpop.xlane.xlu0 %2251
    %v2253 = vsel %vm143, %v2207, 0.0
    %2254 = vadd.xlane.f32.xlu0 %v2253
    %v2255 = vpop.xlane.xlu0 %2254
    %v2256 = vmul.f32 %v2210, %v192
    %v2257 = vmul.f32 %v2213, %v192
    %v2258 = vmul.f32 %v2216, %v192
    %v2259 = vmul.f32 %v2219, %v192
    %v2260 = vmul.f32 %v2222, %v192
    %v2261 = vmul.f32 %v2225, %v192
    %v2262 = vmul.f32 %v2228, %v192
    %v2263 = vmul.f32 %v2231, %v192
    %v2264 = vmul.f32 %v2234, %v192
    %v2265 = vmul.f32 %v2237, %v192
    %v2266 = vmul.f32 %v2240, %v192
    %v2267 = vmul.f32 %v2243, %v192
    %v2268 = vmul.f32 %v2246, %v192
    %v2269 = vmul.f32 %v2249, %v192
    %v2270 = vmul.f32 %v2252, %v192
    %v2271 = vmul.f32 %v2255, %v192
    %v2272 = vadd.f32 %v2256, 1e-05
    %v2273 = vadd.f32 %v2257, 1e-05
    %v2274 = vadd.f32 %v2258, 1e-05
    %v2275 = vadd.f32 %v2259, 1e-05
    %v2276 = vadd.f32 %v2260, 1e-05
    %v2277 = vadd.f32 %v2261, 1e-05
    %v2278 = vadd.f32 %v2262, 1e-05
    %v2279 = vadd.f32 %v2263, 1e-05
    %v2280 = vadd.f32 %v2264, 1e-05
    %v2281 = vadd.f32 %v2265, 1e-05
    %v2282 = vadd.f32 %v2266, 1e-05
    %v2283 = vadd.f32 %v2267, 1e-05
    %v2284 = vadd.f32 %v2268, 1e-05
    %v2285 = vadd.f32 %v2269, 1e-05
    %v2286 = vadd.f32 %v2270, 1e-05
    %v2287 = vadd.f32 %v2271, 1e-05
    %v2288 = vrsqrt.pop %v2272
    %v2289 = vrsqrt.pop %v2273
    %v2290 = vrsqrt.pop %v2274
    %v2291 = vrsqrt.pop %v2275
    %v2292 = vrsqrt.pop %v2276
    %v2293 = vrsqrt.pop %v2277
    %v2294 = vrsqrt.pop %v2278
    %v2295 = vrsqrt.pop %v2279
    %v2296 = vrsqrt.pop %v2280
    %v2297 = vrsqrt.pop %v2281
    %v2298 = vrsqrt.pop %v2282
    %v2299 = vrsqrt.pop %v2283
    %v2300 = vrsqrt.pop %v2284
    %v2301 = vrsqrt.pop %v2285
    %v2302 = vrsqrt.pop %v2286
    %v2303 = vrsqrt.pop %v2287
    %v2304 = vmul.f32 %v2176, %v2288
    %v2305 = vmul.f32 %v2177, %v2289
    %v2306 = vmul.f32 %v2178, %v2290
    %v2307 = vmul.f32 %v2179, %v2291
    %v2308 = vmul.f32 %v2180, %v2292
    %v2309 = vmul.f32 %v2181, %v2293
    %v2310 = vmul.f32 %v2182, %v2294
    %v2311 = vmul.f32 %v2183, %v2295
    %v2312 = vmul.f32 %v2184, %v2296
    %v2313 = vmul.f32 %v2185, %v2297
    %v2314 = vmul.f32 %v2186, %v2298
    %v2315 = vmul.f32 %v2187, %v2299
    %v2316 = vmul.f32 %v2188, %v2300
    %v2317 = vmul.f32 %v2189, %v2301
    %v2318 = vmul.f32 %v2190, %v2302
    %v2319 = vmul.f32 %v2191, %v2303
    %v2320 = vpack.c.bf16 %v2305, %v2304
    %v2321 = vpack.c.bf16 %v2307, %v2306
    %v2322 = vpack.c.bf16 %v2309, %v2308
    %v2323 = vpack.c.bf16 %v2311, %v2310
    %v2324 = vpack.c.bf16 %v2313, %v2312
    %v2325 = vpack.c.bf16 %v2315, %v2314
    %v2326 = vpack.c.bf16 %v2317, %v2316
    %v2327 = vpack.c.bf16 %v2319, %v2318
    %v2328 = vld [vmem:[%s10] sm:$0xf]
    %v2329 = vld [vmem:[%s10 + $0x4] sm:$0xf]
    %v2330 = vld [vmem:[%s10 + $0x8] sm:$0xf]
    %v2331 = vld [vmem:[%s10 + $0xc] sm:$0xf]
    %v2332 = vld [vmem:[%s10 + $0x10] sm:$0xf]
    %v2333 = vld [vmem:[%s10 + $0x14] sm:$0xf]
    %v2334 = vld [vmem:[%s10 + $0x18] sm:$0xf]
    %v2335 = vld [vmem:[%s10 + $0x1c] sm:$0xf]
    %v2336 = vld [vmem:[%s11] sm:$0x1]
    %v2338 = vlaneseq
    %v2339 = vshrl.u32 %v2338, 7
    %v2340 = vsub.s32 0, %v2339
    %v2341 = vrot.slane %v2336, %v2340
    %v2351 = vunpack.c.l.b16 %v2328
    %v2352 = vunpack.c.l.b16 %v2329
    %v2353 = vunpack.c.l.b16 %v2330
    %v2354 = vunpack.c.l.b16 %v2331
    %v2355 = vunpack.c.l.b16 %v2332
    %v2356 = vunpack.c.l.b16 %v2333
    %v2357 = vunpack.c.l.b16 %v2334
    %v2358 = vunpack.c.l.b16 %v2335
    %v2359 = vpack.c.b16 %v2352, %v2351
    %v2360 = vpack.c.b16 %v2354, %v2353
    %v2361 = vpack.c.b16 %v2356, %v2355
    %v2362 = vpack.c.b16 %v2358, %v2357
    %v2368 = vsel %vm143, %v2320, 0
    %v2371 = vsel %vm143, %v2321, 0
    %v2374 = vsel %vm143, %v2322, 0
    %v2377 = vsel %vm143, %v2323, 0
    %v2380 = vsel %vm143, %v2324, 0
    %v2383 = vsel %vm143, %v2325, 0
    %v2386 = vsel %vm143, %v2326, 0
    %v2389 = vsel %vm143, %v2327, 0
    %2391 = vmatprep.subr.bf16.mxu0 0
    %2392 = vmatpush1.bf16.msra.mxu0 %v2359
    %2393 = vmatprep.subr.bf16.mxu0 0
    %2394 = vmatpush1.bf16.msra.mxu0 %v2360
    %2395 = vmatprep.subr.bf16.mxu0 0
    %2396 = vmatpush1.bf16.msra.mxu0 %v2361
    %2397 = vmatprep.subr.bf16.mxu0 0
    %2398 = vmatpush1.bf16.msra.mxu0 %v2362
    %2399 = vmatprep.subr.bf16.mxu0 0
    %2400 = vmatpush1.bf16.msra.mxu0 0
    %2401 = vmatprep.subr.bf16.mxu0 0
    %2402 = vmatpush1.bf16.msra.mxu0 0
    %2403 = vmatprep.subr.bf16.mxu0 0
    %2404 = vmatpush1.bf16.msra.mxu0 0
    %2405 = vmatprep.subr.bf16.mxu0 0
    %2406 = vmatpush1.bf16.msra.mxu0 0
    %2407 = vmatprep.subr.bf16.mxu0 0
    %2408 = vmatpush1.bf16.msra.mxu0 0
    %2409 = vmatprep.subr.bf16.mxu0 0
    %2410 = vmatpush1.bf16.msra.mxu0 0
    %2411 = vmatprep.subr.bf16.mxu0 0
    %2412 = vmatpush1.bf16.msra.mxu0 0
    %2413 = vmatprep.subr.bf16.mxu0 0
    %2414 = vmatpush1.bf16.msra.mxu0 0
    %2415 = vmatprep.subr.bf16.mxu0 0
    %2416 = vmatpush1.bf16.msra.mxu0 0
    %2417 = vmatprep.subr.bf16.mxu0 0
    %2418 = vmatpush1.bf16.msra.mxu0 0
    %2419 = vmatprep.subr.bf16.mxu0 0
    %2420 = vmatpush1.bf16.msra.mxu0 0
    %2421 = vmatprep.subr.bf16.mxu0 0
    %2422 = vmatpush1.bf16.msra.mxu0 0
    %2423 = vmatprep.mubr.bf16.mxu0 0
    %2424 = vmatmul.mubr.bf16.gmra.mrb[0].mxu0 %v2368
    %v2425 = vpop.f32.mrb[0].mxu0
    %v2426 = vadd.f32 %v2341, %v2425
    %v2427 = vpop.f32.mrb[0].mxu0
    %v2428 = vpop.f32.mrb[0].mxu0
    %v2429 = vadd.f32 %v2341, %v2428
    %v2430 = vpop.f32.mrb[0].mxu0
    %2431 = vmatprep.mubr.bf16.mxu0 0
    %2432 = vmatmul.mubr.bf16.gmra.mrb[0].mxu0 %v2371
    %v2433 = vpop.f32.mrb[0].mxu0
    %v2434 = vadd.f32 %v2341, %v2433
    %v2435 = vpop.f32.mrb[0].mxu0
    %v2436 = vpop.f32.mrb[0].mxu0
    %v2437 = vadd.f32 %v2341, %v2436
    %v2438 = vpop.f32.mrb[0].mxu0
    %2439 = vmatprep.mubr.bf16.mxu0 0
    %2440 = vmatmul.mubr.bf16.gmra.mrb[0].mxu0 %v2374
    %v2441 = vpop.f32.mrb[0].mxu0
    %v2442 = vadd.f32 %v2341, %v2441
    %v2443 = vpop.f32.mrb[0].mxu0
    %v2444 = vpop.f32.mrb[0].mxu0
    %v2445 = vadd.f32 %v2341, %v2444
    %v2446 = vpop.f32.mrb[0].mxu0
    %2447 = vmatprep.mubr.bf16.mxu0 0
    %2448 = vmatmul.mubr.bf16.gmra.mrb[0].mxu0 %v2377
    %v2449 = vpop.f32.mrb[0].mxu0
    %v2450 = vadd.f32 %v2341, %v2449
    %v2451 = vpop.f32.mrb[0].mxu0
    %v2452 = vpop.f32.mrb[0].mxu0
    %v2453 = vadd.f32 %v2341, %v2452
    %v2454 = vpop.f32.mrb[0].mxu0
    %2455 = vmatprep.mubr.bf16.mxu0 0
    %2456 = vmatmul.mubr.bf16.gmra.mrb[0].mxu0 %v2380
    %v2457 = vpop.f32.mrb[0].mxu0
    %v2458 = vadd.f32 %v2341, %v2457
    %v2459 = vpop.f32.mrb[0].mxu0
    %v2460 = vpop.f32.mrb[0].mxu0
    %v2461 = vadd.f32 %v2341, %v2460
    %v2462 = vpop.f32.mrb[0].mxu0
    %2463 = vmatprep.mubr.bf16.mxu0 0
    %2464 = vmatmul.mubr.bf16.gmra.mrb[0].mxu0 %v2383
    %v2465 = vpop.f32.mrb[0].mxu0
    %v2466 = vadd.f32 %v2341, %v2465
    %v2467 = vpop.f32.mrb[0].mxu0
    %v2468 = vpop.f32.mrb[0].mxu0
    %v2469 = vadd.f32 %v2341, %v2468
    %v2470 = vpop.f32.mrb[0].mxu0
    %2471 = vmatprep.mubr.bf16.mxu0 0
    %2472 = vmatmul.mubr.bf16.gmra.mrb[0].mxu0 %v2386
    %v2473 = vpop.f32.mrb[0].mxu0
    %v2474 = vadd.f32 %v2341, %v2473
    %v2475 = vpop.f32.mrb[0].mxu0
    %v2476 = vpop.f32.mrb[0].mxu0
    %v2477 = vadd.f32 %v2341, %v2476
    %v2478 = vpop.f32.mrb[0].mxu0
    %2479 = vmatprep.mubr.bf16.mxu0 0
    %2480 = vmatmul.mubr.bf16.gmra.mrb[0].mxu0 %v2389
    %v2481 = vpop.f32.mrb[0].mxu0
    %v2482 = vadd.f32 %v2341, %v2481
    %v2483 = vpop.f32.mrb[0].mxu0
    %v2484 = vpop.f32.mrb[0].mxu0
    %v2485 = vadd.f32 %v2341, %v2484
    %v2486 = vpop.f32.mrb[0].mxu0
    %2487 = vdwg.mxu0
    %v2488 = vmul.f32 %v2426, 0.5
    %v2489 = vmul.f32 %v2429, 0.5
    %v2490 = vmul.f32 %v2434, 0.5
    %v2491 = vmul.f32 %v2437, 0.5
    %v2492 = vmul.f32 %v2442, 0.5
    %v2493 = vmul.f32 %v2445, 0.5
    %v2494 = vmul.f32 %v2450, 0.5
    %v2495 = vmul.f32 %v2453, 0.5
    %v2496 = vmul.f32 %v2458, 0.5
    %v2497 = vmul.f32 %v2461, 0.5
    %v2498 = vmul.f32 %v2466, 0.5
    %v2499 = vmul.f32 %v2469, 0.5
    %v2500 = vmul.f32 %v2474, 0.5
    %v2501 = vmul.f32 %v2477, 0.5
    %v2502 = vmul.f32 %v2482, 0.5
    %v2503 = vmul.f32 %v2485, 0.5
    %v2504 = vmul.f32 %v2426, 0.044715
    %v2505 = vmul.f32 %v2429, 0.044715
    %v2506 = vmul.f32 %v2434, 0.044715
    %v2507 = vmul.f32 %v2437, 0.044715
    %v2508 = vmul.f32 %v2442, 0.044715
    %v2509 = vmul.f32 %v2445, 0.044715
    %v2510 = vmul.f32 %v2450, 0.044715
    %v2511 = vmul.f32 %v2453, 0.044715
    %v2512 = vmul.f32 %v2458, 0.044715
    %v2513 = vmul.f32 %v2461, 0.044715
    %v2514 = vmul.f32 %v2466, 0.044715
    %v2515 = vmul.f32 %v2469, 0.044715
    %v2516 = vmul.f32 %v2474, 0.044715
    %v2517 = vmul.f32 %v2477, 0.044715
    %v2518 = vmul.f32 %v2482, 0.044715
    %v2519 = vmul.f32 %v2485, 0.044715
    %v2520 = vmul.f32 %v2504, %v2426
    %v2521 = vmul.f32 %v2505, %v2429
    %v2522 = vmul.f32 %v2506, %v2434
    %v2523 = vmul.f32 %v2507, %v2437
    %v2524 = vmul.f32 %v2508, %v2442
    %v2525 = vmul.f32 %v2509, %v2445
    %v2526 = vmul.f32 %v2510, %v2450
    %v2527 = vmul.f32 %v2511, %v2453
    %v2528 = vmul.f32 %v2512, %v2458
    %v2529 = vmul.f32 %v2513, %v2461
    %v2530 = vmul.f32 %v2514, %v2466
    %v2531 = vmul.f32 %v2515, %v2469
    %v2532 = vmul.f32 %v2516, %v2474
    %v2533 = vmul.f32 %v2517, %v2477
    %v2534 = vmul.f32 %v2518, %v2482
    %v2535 = vmul.f32 %v2519, %v2485
    %v2536 = vmul.f32 %v2520, %v2426
    %v2537 = vmul.f32 %v2521, %v2429
    %v2538 = vmul.f32 %v2522, %v2434
    %v2539 = vmul.f32 %v2523, %v2437
    %v2540 = vmul.f32 %v2524, %v2442
    %v2541 = vmul.f32 %v2525, %v2445
    %v2542 = vmul.f32 %v2526, %v2450
    %v2543 = vmul.f32 %v2527, %v2453
    %v2544 = vmul.f32 %v2528, %v2458
    %v2545 = vmul.f32 %v2529, %v2461
    %v2546 = vmul.f32 %v2530, %v2466
    %v2547 = vmul.f32 %v2531, %v2469
    %v2548 = vmul.f32 %v2532, %v2474
    %v2549 = vmul.f32 %v2533, %v2477
    %v2550 = vmul.f32 %v2534, %v2482
    %v2551 = vmul.f32 %v2535, %v2485
    %v2552 = vadd.f32 %v2426, %v2536
    %v2553 = vadd.f32 %v2429, %v2537
    %v2554 = vadd.f32 %v2434, %v2538
    %v2555 = vadd.f32 %v2437, %v2539
    %v2556 = vadd.f32 %v2442, %v2540
    %v2557 = vadd.f32 %v2445, %v2541
    %v2558 = vadd.f32 %v2450, %v2542
    %v2559 = vadd.f32 %v2453, %v2543
    %v2560 = vadd.f32 %v2458, %v2544
    %v2561 = vadd.f32 %v2461, %v2545
    %v2562 = vadd.f32 %v2466, %v2546
    %v2563 = vadd.f32 %v2469, %v2547
    %v2564 = vadd.f32 %v2474, %v2548
    %v2565 = vadd.f32 %v2477, %v2549
    %v2566 = vadd.f32 %v2482, %v2550
    %v2567 = vadd.f32 %v2485, %v2551
    %v2568 = vmul.f32 %v2552, 0.7978846
    %v2569 = vmul.f32 %v2553, 0.7978846
    %v2570 = vmul.f32 %v2554, 0.7978846
    %v2571 = vmul.f32 %v2555, 0.7978846
    %v2572 = vmul.f32 %v2556, 0.7978846
    %v2573 = vmul.f32 %v2557, 0.7978846
    %v2574 = vmul.f32 %v2558, 0.7978846
    %v2575 = vmul.f32 %v2559, 0.7978846
    %v2576 = vmul.f32 %v2560, 0.7978846
    %v2577 = vmul.f32 %v2561, 0.7978846
    %v2578 = vmul.f32 %v2562, 0.7978846
    %v2579 = vmul.f32 %v2563, 0.7978846
    %v2580 = vmul.f32 %v2564, 0.7978846
    %v2581 = vmul.f32 %v2565, 0.7978846
    %v2582 = vmul.f32 %v2566, 0.7978846
    %v2583 = vmul.f32 %v2567, 0.7978846
    %v2584 = vtanh.pop %v2568
    %v2585 = vtanh.pop %v2569
    %v2586 = vtanh.pop %v2570
    %v2587 = vtanh.pop %v2571
    %v2588 = vtanh.pop %v2572
    %v2589 = vtanh.pop %v2573
    %v2590 = vtanh.pop %v2574
    %v2591 = vtanh.pop %v2575
    %v2592 = vtanh.pop %v2576
    %v2593 = vtanh.pop %v2577
    %v2594 = vtanh.pop %v2578
    %v2595 = vtanh.pop %v2579
    %v2596 = vtanh.pop %v2580
    %v2597 = vtanh.pop %v2581
    %v2598 = vtanh.pop %v2582
    %v2599 = vtanh.pop %v2583
    %v2600 = vadd.f32 %v2584, 1.0
    %v2601 = vadd.f32 %v2585, 1.0
    %v2602 = vadd.f32 %v2586, 1.0
    %v2603 = vadd.f32 %v2587, 1.0
    %v2604 = vadd.f32 %v2588, 1.0
    %v2605 = vadd.f32 %v2589, 1.0
    %v2606 = vadd.f32 %v2590, 1.0
    %v2607 = vadd.f32 %v2591, 1.0
    %v2608 = vadd.f32 %v2592, 1.0
    %v2609 = vadd.f32 %v2593, 1.0
    %v2610 = vadd.f32 %v2594, 1.0
    %v2611 = vadd.f32 %v2595, 1.0
    %v2612 = vadd.f32 %v2596, 1.0
    %v2613 = vadd.f32 %v2597, 1.0
    %v2614 = vadd.f32 %v2598, 1.0
    %v2615 = vadd.f32 %v2599, 1.0
    %v2616 = vmul.f32 %v2488, %v2600
    %v2617 = vmul.f32 %v2489, %v2601
    %v2618 = vmul.f32 %v2490, %v2602
    %v2619 = vmul.f32 %v2491, %v2603
    %v2620 = vmul.f32 %v2492, %v2604
    %v2621 = vmul.f32 %v2493, %v2605
    %v2622 = vmul.f32 %v2494, %v2606
    %v2623 = vmul.f32 %v2495, %v2607
    %v2624 = vmul.f32 %v2496, %v2608
    %v2625 = vmul.f32 %v2497, %v2609
    %v2626 = vmul.f32 %v2498, %v2610
    %v2627 = vmul.f32 %v2499, %v2611
    %v2628 = vmul.f32 %v2500, %v2612
    %v2629 = vmul.f32 %v2501, %v2613
    %v2630 = vmul.f32 %v2502, %v2614
    %v2631 = vmul.f32 %v2503, %v2615
    %v2632 = vpack.c.bf16 %v2617, %v2616
    %v2633 = vpack.c.bf16 %v2619, %v2618
    %v2634 = vpack.c.bf16 %v2621, %v2620
    %v2635 = vpack.c.bf16 %v2623, %v2622
    %v2636 = vpack.c.bf16 %v2625, %v2624
    %v2637 = vpack.c.bf16 %v2627, %v2626
    %v2638 = vpack.c.bf16 %v2629, %v2628
    %v2639 = vpack.c.bf16 %v2631, %v2630
    %v2640 = vld [vmem:[#allocation11] sm:$0xf]
    %v2641 = vld [vmem:[#allocation11 + $0x4] sm:$0xf]
    %v2642 = vld [vmem:[#allocation11 + $0x8] sm:$0xf]
    %v2643 = vld [vmem:[#allocation11 + $0xc] sm:$0xf]
    %v2644 = vld [vmem:[#allocation11 + $0x10] sm:$0xf]
    %v2645 = vld [vmem:[#allocation11 + $0x14] sm:$0xf]
    %v2646 = vld [vmem:[#allocation11 + $0x18] sm:$0xf]
    %v2647 = vld [vmem:[#allocation11 + $0x1c] sm:$0xf]
    %v2648 = vld [vmem:[%s13] sm:$0x1]
    %v2650 = vlaneseq
    %v2651 = vshrl.u32 %v2650, 7
    %v2652 = vsub.s32 0, %v2651
    %v2653 = vrot.slane %v2648, %v2652
    %v2663 = vunpack.c.l.b16 %v2640
    %v2664 = vunpack.c.l.b16 %v2641
    %v2665 = vunpack.c.l.b16 %v2642
    %v2666 = vunpack.c.l.b16 %v2643
    %v2667 = vunpack.c.l.b16 %v2644
    %v2668 = vunpack.c.l.b16 %v2645
    %v2669 = vunpack.c.l.b16 %v2646
    %v2670 = vunpack.c.l.b16 %v2647
    %v2671 = vpack.c.b16 %v2664, %v2663
    %v2672 = vpack.c.b16 %v2666, %v2665
    %v2673 = vpack.c.b16 %v2668, %v2667
    %v2674 = vpack.c.b16 %v2670, %v2669
    %v2680 = vsel %vm143, %v2632, 0
    %v2683 = vsel %vm143, %v2633, 0
    %v2686 = vsel %vm143, %v2634, 0
    %v2689 = vsel %vm143, %v2635, 0
    %v2692 = vsel %vm143, %v2636, 0
    %v2695 = vsel %vm143, %v2637, 0
    %v2698 = vsel %vm143, %v2638, 0
    %v2701 = vsel %vm143, %v2639, 0
    %2703 = vmatprep.subr.bf16.mxu0 0
    %2704 = vmatpush1.bf16.msra.mxu0 %v2671
    %2705 = vmatprep.subr.bf16.mxu0 0
    %2706 = vmatpush1.bf16.msra.mxu0 %v2672
    %2707 = vmatprep.subr.bf16.mxu0 0
    %2708 = vmatpush1.bf16.msra.mxu0 %v2673
    %2709 = vmatprep.subr.bf16.mxu0 0
    %2710 = vmatpush1.bf16.msra.mxu0 %v2674
    %2711 = vmatprep.subr.bf16.mxu0 0
    %2712 = vmatpush1.bf16.msra.mxu0 0
    %2713 = vmatprep.subr.bf16.mxu0 0
    %2714 = vmatpush1.bf16.msra.mxu0 0
    %2715 = vmatprep.subr.bf16.mxu0 0
    %2716 = vmatpush1.bf16.msra.mxu0 0
    %2717 = vmatprep.subr.bf16.mxu0 0
    %2718 = vmatpush1.bf16.msra.mxu0 0
    %2719 = vmatprep.subr.bf16.mxu0 0
    %2720 = vmatpush1.bf16.msra.mxu0 0
    %2721 = vmatprep.subr.bf16.mxu0 0
    %2722 = vmatpush1.bf16.msra.mxu0 0
    %2723 = vmatprep.subr.bf16.mxu0 0
    %2724 = vmatpush1.bf16.msra.mxu0 0
    %2725 = vmatprep.subr.bf16.mxu0 0
    %2726 = vmatpush1.bf16.msra.mxu0 0
    %2727 = vmatprep.subr.bf16.mxu0 0
    %2728 = vmatpush1.bf16.msra.mxu0 0
    %2729 = vmatprep.subr.bf16.mxu0 0
    %2730 = vmatpush1.bf16.msra.mxu0 0
    %2731 = vmatprep.subr.bf16.mxu0 0
    %2732 = vmatpush1.bf16.msra.mxu0 0
    %2733 = vmatprep.subr.bf16.mxu0 0
    %2734 = vmatpush1.bf16.msra.mxu0 0
    %2735 = vmatprep.mubr.bf16.mxu0 0
    %2736 = vmatmul.mubr.bf16.gmra.mrb[0].mxu0 %v2680
    %v2737 = vpop.f32.mrb[0].mxu0
    %v2738 = vadd.f32 %v2653, %v2737
    %v2739 = vpop.f32.mrb[0].mxu0
    %v2740 = vpop.f32.mrb[0].mxu0
    %v2741 = vadd.f32 %v2653, %v2740
    %v2742 = vpop.f32.mrb[0].mxu0
    %2743 = vmatprep.mubr.bf16.mxu0 0
    %2744 = vmatmul.mubr.bf16.gmra.mrb[0].mxu0 %v2683
    %v2745 = vpop.f32.mrb[0].mxu0
    %v2746 = vadd.f32 %v2653, %v2745
    %v2747 = vpop.f32.mrb[0].mxu0
    %v2748 = vpop.f32.mrb[0].mxu0
    %v2749 = vadd.f32 %v2653, %v2748
    %v2750 = vpop.f32.mrb[0].mxu0
    %2751 = vmatprep.mubr.bf16.mxu0 0
    %2752 = vmatmul.mubr.bf16.gmra.mrb[0].mxu0 %v2686
    %v2753 = vpop.f32.mrb[0].mxu0
    %v2754 = vadd.f32 %v2653, %v2753
    %v2755 = vpop.f32.mrb[0].mxu0
    %v2756 = vpop.f32.mrb[0].mxu0
    %v2757 = vadd.f32 %v2653, %v2756
    %v2758 = vpop.f32.mrb[0].mxu0
    %2759 = vmatprep.mubr.bf16.mxu0 0
    %2760 = vmatmul.mubr.bf16.gmra.mrb[0].mxu0 %v2689
    %v2761 = vpop.f32.mrb[0].mxu0
    %v2762 = vadd.f32 %v2653, %v2761
    %v2763 = vpop.f32.mrb[0].mxu0
    %v2764 = vpop.f32.mrb[0].mxu0
    %v2765 = vadd.f32 %v2653, %v2764
    %v2766 = vpop.f32.mrb[0].mxu0
    %2767 = vmatprep.mubr.bf16.mxu0 0
    %2768 = vmatmul.mubr.bf16.gmra.mrb[0].mxu0 %v2692
    %v2769 = vpop.f32.mrb[0].mxu0
    %v2770 = vadd.f32 %v2653, %v2769
    %v2771 = vpop.f32.mrb[0].mxu0
    %v2772 = vpop.f32.mrb[0].mxu0
    %v2773 = vadd.f32 %v2653, %v2772
    %v2774 = vpop.f32.mrb[0].mxu0
    %2775 = vmatprep.mubr.bf16.mxu0 0
    %2776 = vmatmul.mubr.bf16.gmra.mrb[0].mxu0 %v2695
    %v2777 = vpop.f32.mrb[0].mxu0
    %v2778 = vadd.f32 %v2653, %v2777
    %v2779 = vpop.f32.mrb[0].mxu0
    %v2780 = vpop.f32.mrb[0].mxu0
    %v2781 = vadd.f32 %v2653, %v2780
    %v2782 = vpop.f32.mrb[0].mxu0
    %2783 = vmatprep.mubr.bf16.mxu0 0
    %2784 = vmatmul.mubr.bf16.gmra.mrb[0].mxu0 %v2698
    %v2785 = vpop.f32.mrb[0].mxu0
    %v2786 = vadd.f32 %v2653, %v2785
    %v2787 = vpop.f32.mrb[0].mxu0
    %v2788 = vpop.f32.mrb[0].mxu0
    %v2789 = vadd.f32 %v2653, %v2788
    %v2790 = vpop.f32.mrb[0].mxu0
    %2791 = vmatprep.mubr.bf16.mxu0 0
    %2792 = vmatmul.mubr.bf16.gmra.mrb[0].mxu0 %v2701
    %v2793 = vpop.f32.mrb[0].mxu0
    %v2794 = vadd.f32 %v2653, %v2793
    %v2795 = vpop.f32.mrb[0].mxu0
    %v2796 = vpop.f32.mrb[0].mxu0
    %v2797 = vadd.f32 %v2653, %v2796
    %v2798 = vpop.f32.mrb[0].mxu0
    %2799 = vdwg.mxu0
    %v2800 = vadd.f32 %v2096, %v2738
    %v2801 = vadd.f32 %v2097, %v2741
    %v2802 = vadd.f32 %v2098, %v2746
    %v2803 = vadd.f32 %v2099, %v2749
    %v2804 = vadd.f32 %v2100, %v2754
    %v2805 = vadd.f32 %v2101, %v2757
    %v2806 = vadd.f32 %v2102, %v2762
    %v2807 = vadd.f32 %v2103, %v2765
    %v2808 = vadd.f32 %v2104, %v2770
    %v2809 = vadd.f32 %v2105, %v2773
    %v2810 = vadd.f32 %v2106, %v2778
    %v2811 = vadd.f32 %v2107, %v2781
    %v2812 = vadd.f32 %v2108, %v2786
    %v2813 = vadd.f32 %v2109, %v2789
    %v2814 = vadd.f32 %v2110, %v2794
    %v2815 = vadd.f32 %v2111, %v2797
    %2816 = vst.msk [vmem:[#allocation13] sm:$0xff] %vm143, %v2800
    %2817 = vst.msk [vmem:[#allocation13 + $0x8] sm:$0xff] %vm143, %v2801
    %2818 = vst.msk [vmem:[#allocation13 + $0x10] sm:$0xff] %vm143, %v2802
    %2819 = vst.msk [vmem:[#allocation13 + $0x18] sm:$0xff] %vm143, %v2803
    %2820 = vst.msk [vmem:[#allocation13 + $0x20] sm:$0xff] %vm143, %v2804
    %2821 = vst.msk [vmem:[#allocation13 + $0x28] sm:$0xff] %vm143, %v2805
    %2822 = vst.msk [vmem:[#allocation13 + $0x30] sm:$0xff] %vm143, %v2806
    %2823 = vst.msk [vmem:[#allocation13 + $0x38] sm:$0xff] %vm143, %v2807
    %2824 = vst.msk [vmem:[#allocation13 + $0x40] sm:$0xff] %vm143, %v2808
    %2825 = vst.msk [vmem:[#allocation13 + $0x48] sm:$0xff] %vm143, %v2809
    %2826 = vst.msk [vmem:[#allocation13 + $0x50] sm:$0xff] %vm143, %v2810
    %2827 = vst.msk [vmem:[#allocation13 + $0x58] sm:$0xff] %vm143, %v2811
    %2828 = vst.msk [vmem:[#allocation13 + $0x60] sm:$0xff] %vm143, %v2812
    %2829 = vst.msk [vmem:[#allocation13 + $0x68] sm:$0xff] %vm143, %v2813
    %2830 = vst.msk [vmem:[#allocation13 + $0x70] sm:$0xff] %vm143, %v2814
    %2831 = vst.msk [vmem:[#allocation13 + $0x78] sm:$0xff] %vm143, %v2815
    // Predicated region
    $region82: #{tpu_custom_call.1} parent=1 // pred_check
      _
    $region83: #{tpu_custom_call.1} parent=1 // pred_check_branch
      %2833 = sbr.rel (0) target = $region85
    $region84: #{tpu_custom_call.1} parent=1 // pred_region
      %s2835 = ssub.s32 2048, 2048
      %2836 = vsyncadd [#allocation4], %s2835
      %s2837 = sshll.u32 [#allocation13], 4
      %s2838 = int_to_ptr.vmem [resolvable:$true] %s2837
      %2843 = dma.vmem_to_hbm [thread:$0]  %s2838, 2048, %s14, [#allocation4], 128, 128, 8
    $region85: #{tpu_custom_call.1} parent=1 // pred_fallthru
      _
    // Predicated region
    $region86: #{tpu_custom_call.1} parent=1 // pred_check
      _
    $region87: #{tpu_custom_call.1} parent=1 // pred_check_branch
      %2845 = sbr.rel (0) target = $region89
    $region88: #{tpu_custom_call.1} parent=1 // pred_region
      %2846 = dma.done [#allocation4], 2048
    $region89: #{tpu_custom_call.1} parent=1 // pred_fallthru
      _
    %2847 = vsyncpa [#allocation3], 1
    %2848 = vsyncpa [#allocation6], 1
    %2849 = vsyncpa [#allocation9], 1
    %2850 = vsyncpa [#allocation12], 1
    %2851 = vsyncpa [#allocation4], 1

</llo_original>
